<compile_context>
chip_gen: v6e
topology: v6e:2x2x1
jax: 0.10.0
libtpu: 0.0.40
codegen_flags: <defaults>
</compile_context>

<pallas_src>
import jax
import jax.numpy as jnp
from jax import lax
from jax.experimental import pallas as pl
from jax.experimental.pallas import tpu as pltpu

# ----------------------------- small config ---------------------------------
IMG = 16          # img_shape
PATCH = 8         # patch_size -> 2x2 = 4 patches, seq_len = 5 (with cls token)
CH = 3            # channels
DIM = 32          # model dim
N_HEAD = 2
KV_LORA = 16      # kv_lora_rank
NOPE = 8          # qk_nope_head_dim
ROPE = 8          # qk_rope_head_dim
V_DIM = 8         # v_head_dim
INTER = 48        # inter_dim
N_LAYER = 2
VOCAB = 64
TEXT_LEN = 8
BATCH = 2
EPS = 1e-6
QK_HEAD = NOPE + ROPE
HKV = NOPE + V_DIM
PATCH_DIM = CH * PATCH * PATCH
NUM_PATCH = (IMG // PATCH) * (IMG // PATCH)
SEQ_V = NUM_PATCH + 1
NEG_INF = -1e30   # large finite negative (NaN-safe if fully-masked rows ever appear)

LAYER_KEYS = ("attn_norm", "ffn_norm", "kv_norm", "wqkv", "wkv_b", "wo", "w13", "w2")


# ----------------------------- in-kernel helpers ----------------------------
def _rms(v, w):
    """RMSNorm on a (S, D) f32 value; w is (1, D)."""
    ms = jnp.mean(v * v, axis=-1, keepdims=True)
    return v * lax.rsqrt(ms + EPS) * w


def _rope(v, cosf, sinf):
    """Half-split RoPE: out = v*cos + rotate_half(v)*sin (weights' rope cols are
    pre-permuted to half-split layout, so this matches the interleaved PyTorch rotation).
    Pure VPU + lane-concat work -- no MXU push."""
    h = ROPE // 2
    rot = jnp.concatenate([-v[:, h:], v[:, :h]], axis=-1)
    return v * cosf + rot * sinf


def _run_layers(x, cos_ref, sin_ref, an_ref, fn_ref, kn_ref,
                wqkv_ref, wkvb_ref, wo_ref, w13_ref, w2_ref, *, causal):
    """Run all transformer blocks on a single (S, DIM) f32 activation slab."""
    S = x.shape[0]
    cosf = cos_ref[...]            # (S, ROPE) half-split: [cos | cos]
    sinf = sin_ref[...]            # (S, ROPE) half-split: [sin | sin]

    an = an_ref[...]               # (L, DIM)
    fn = fn_ref[...]               # (L, DIM)
    kn = kn_ref[...]               # (L, KV_LORA)

    if causal:
        row = lax.broadcasted_iota(jnp.int32, (S, S), 0)
        col = lax.broadcasted_iota(jnp.int32, (S, S), 1)
        causal_ok = col <= row

    scale = QK_HEAD ** -0.5
    for l in range(N_LAYER):
        # ---------------- MLA attention ----------------
        h = _rms(x, an[l:l + 1, :])                                              # (S, DIM)
        # Fused [wq | wkv_a]: (S, DIM) @ (DIM, N_HEAD*QK_HEAD + KV_LORA + ROPE)
        qkv = jnp.dot(h, wqkv_ref[l], preferred_element_type=jnp.float32)        # (S, 56)
        q = qkv[:, :N_HEAD * QK_HEAD]                                            # (S, 32)
        kv_c = _rms(qkv[:, N_HEAD * QK_HEAD:N_HEAD * QK_HEAD + KV_LORA],
                    kn[l:l + 1, :])                                              # (S, KV_LORA)
        k_pe = _rope(qkv[:, N_HEAD * QK_HEAD + KV_LORA:], cosf, sinf)            # (S, ROPE)
        kv = jnp.dot(kv_c, wkvb_ref[l], preferred_element_type=jnp.float32)      # (S, N_HEAD*(NOPE+V_DIM))

        head_outs = []
        for hd in range(N_HEAD):                                                 # static unroll, stays fused
            q_h = q[:, hd * QK_HEAD:(hd + 1) * QK_HEAD]                          # (S, QK_HEAD)
            q_pe = _rope(q_h[:, NOPE:], cosf, sinf)
            q_cat = jnp.concatenate([q_h[:, :NOPE], q_pe], axis=-1)              # (S, QK_HEAD)
            k_cat = jnp.concatenate([kv[:, hd * HKV:hd * HKV + NOPE], k_pe],
                                    axis=-1)                                     # (S, QK_HEAD)
            v_h = kv[:, hd * HKV + NOPE:(hd + 1) * HKV]                          # (S, V_DIM)
            # Single 16-deep score matmul per head (was 2x 8-deep dots).
            s = jnp.dot(q_cat, k_cat.T, preferred_element_type=jnp.float32) * scale
            if causal:
                s = jnp.where(causal_ok, s, NEG_INF)
            m = jnp.max(s, axis=-1, keepdims=True)
            p = jnp.exp(s - m)
            p = p * pl.reciprocal(jnp.sum(p, axis=-1, keepdims=True), approx=True)
            head_outs.append(jnp.dot(p, v_h, preferred_element_type=jnp.float32))
        # Fused output projection: one (S, N_HEAD*V_DIM) @ (N_HEAD*V_DIM, DIM) matmul.
        o_all = jnp.concatenate(head_outs, axis=-1)
        x = x + jnp.dot(o_all, wo_ref[l], preferred_element_type=jnp.float32)

        # ---------------- SwiGLU MLP (fused w1|w3) ----------------
        h2 = _rms(x, fn[l:l + 1, :])
        gu = jnp.dot(h2, w13_ref[l], preferred_element_type=jnp.float32)         # (S, 2*INTER)
        g = gu[:, :INTER]
        u = gu[:, INTER:]
        x = x + jnp.dot(g * lax.logistic(g) * u, w2_ref[l],
                        preferred_element_type=jnp.float32)
    return x


# ----------------------------- fused tower kernels ---------------------------
def _vit_tower_kernel(patches_ref, pnorm_ref, pw_ref, pb_ref, cls_ref, cos_ref, sin_ref,
                      an_ref, fn_ref, kn_ref, wqkv_ref, wkvb_ref, wo_ref, w13_ref, w2_ref,
                      o_ref, x_scr):
    # patches_ref: (1, NUM_PATCH, PATCH_DIM) for this batch element.
    patches = patches_ref[0].astype(jnp.float32)                                 # (NUM_PATCH, PATCH_DIM)
    pn = _rms(patches, pnorm_ref[...])
    pe = jnp.dot(pn, pw_ref[...], preferred_element_type=jnp.float32) + pb_ref[...]
    # Assemble [cls ; patch-embeddings] via direct row stores (no iota/select filler).
    x_scr[0:1, :] = cls_ref[...]
    x_scr[1:SEQ_V, :] = pe
    x = _run_layers(x_scr[...], cos_ref, sin_ref, an_ref, fn_ref, kn_ref,
                    wqkv_ref, wkvb_ref, wo_ref, w13_ref, w2_ref, causal=False)
    o_ref[0] = x[0:1, :].astype(o_ref.dtype)                                     # Extract('cls')


def _text_tower_kernel(x_ref, cos_ref, sin_ref,
                       an_ref, fn_ref, kn_ref, wqkv_ref, wkvb_ref, wo_ref, w13_ref, w2_ref,
                       o_ref):
    x = x_ref[0].astype(jnp.float32)                                             # (TEXT_LEN, DIM)
    x = _run_layers(x, cos_ref, sin_ref, an_ref, fn_ref, kn_ref,
                    wqkv_ref, wkvb_ref, wo_ref, w13_ref, w2_ref, causal=True)
    # TODO(synk): Extract('post_mean') source not provided; implemented as mean over sequence.
    o_ref[0] = jnp.mean(x, axis=0, keepdims=True).astype(o_ref.dtype)


# ----------------------------- spec helpers ----------------------------------
def _full_spec(shape):
    nd = len(shape)
    return pl.BlockSpec(shape, lambda *_: (0,) * nd)


def _layer_specs(layers):
    return [_full_spec(layers[k].shape) for k in LAYER_KEYS]


def _layer_args(layers):
    return [layers[k] for k in LAYER_KEYS]


# ----------------------------- model glue ------------------------------------
def vit_forward(img, p):
    """img: (B, C, H, W) NCHW -> cls embedding (B, DIM). One fused pallas_call."""
    B, C, H, W = img.shape
    nh, nw = H // PATCH, W // PATCH
    # Rearrange 'b c (h ph) (w pw) -> b (h w) (c ph pw)'  (pure layout, stays as XLA glue)
    x = img.reshape(B, C, nh, PATCH, nw, PATCH)
    patches = x.transpose(0, 2, 4, 1, 3, 5).reshape(B, nh * nw, PATCH_DIM)

    layers = p["layers"]
    out = pl.pallas_call(
        _vit_tower_kernel,
        out_shape=jax.ShapeDtypeStruct((B, 1, DIM), img.dtype),
        grid=(B,),
        in_specs=[
            pl.BlockSpec((1, NUM_PATCH, PATCH_DIM), lambda b: (b, 0, 0)),
            _full_spec((1, PATCH_DIM)),
            _full_spec((PATCH_DIM, DIM)),
            _full_spec((1, DIM)),
            _full_spec((1, DIM)),
            _full_spec((SEQ_V, ROPE)),
            _full_spec((SEQ_V, ROPE)),
        ] + _layer_specs(layers),
        out_specs=pl.BlockSpec((1, 1, DIM), lambda b: (b, 0, 0)),
        scratch_shapes=[pltpu.VMEM((SEQ_V, DIM), jnp.float32)],
        compiler_params=pltpu.CompilerParams(dimension_semantics=("parallel",)),
    )(patches, p["patch_norm"], p["patch_w"], p["patch_b"], p["cls_token"],
      p["rope_cos"], p["rope_sin"], *_layer_args(layers))
    return out.reshape(B, DIM)


def text_forward(tokens, p):
    """tokens: (B, T) int32 -> pooled embedding (B, DIM). One fused pallas_call."""
    B, T = tokens.shape
    x = p["embed"][tokens]                       # embedding gather (XLA glue)
    layers = p["layers"]
    out = pl.pallas_call(
        _text_tower_kernel,
        out_shape=jax.ShapeDtypeStruct((B, 1, DIM), x.dtype),
        grid=(B,),
        in_specs=[
            pl.BlockSpec((1, T, DIM), lambda b: (b, 0, 0)),
            _full_spec((T, ROPE)),
            _full_spec((T, ROPE)),
        ] + _layer_specs(layers),
        out_specs=pl.BlockSpec((1, 1, DIM), lambda b: (b, 0, 0)),
        compiler_params=pltpu.CompilerParams(dimension_semantics=("parallel",)),
    )(x, p["rope_cos"], p["rope_sin"], *_layer_args(layers))
    return out.reshape(B, DIM)


def siglip_forward(img, text, params):
    return vit_forward(img, params["vit"]), text_forward(text, params["text"])


# ----------------------------- parameter init --------------------------------
def precompute_rope(dim, seq_len):
    """Half-split cos / sin tables matching the in-kernel rotate-half RoPE."""
    inv_freq = 1.0 / (10000.0 ** (jnp.arange(0, dim, 2, dtype=jnp.float32) / dim))
    freqs = jnp.outer(jnp.arange(seq_len, dtype=jnp.float32), inv_freq)      # (S, dim//2)
    cos = jnp.cos(freqs)
    sin = jnp.sin(freqs)
    return jnp.concatenate([cos, cos], axis=-1), jnp.concatenate([sin, sin], axis=-1)


def _permute_rope_cols(w, start):
    """Reorder w[:, start:start+ROPE] from interleaved (re,im,re,im,...) to half-split
    (re...re, im...im).  This is the weight-side transform that makes the in-kernel
    rotate-half RoPE equal to the PyTorch interleaved complex rotation."""
    perm = jnp.concatenate([jnp.arange(0, ROPE, 2), jnp.arange(1, ROPE, 2)])
    return w.at[:, start:start + ROPE].set(w[:, start + perm])


def init_block(key):
    ks = jax.random.split(key, 7)
    std = 0.02
    wq = jax.random.normal(ks[0], (DIM, N_HEAD * QK_HEAD), jnp.float32) * std
    wkv_a = jax.random.normal(ks[1], (DIM, KV_LORA + ROPE), jnp.float32) * std
    # Pre-permute rope columns to half-split layout (q rope dims per head, and k_pe dims).
    for hd in range(N_HEAD):
        wq = _permute_rope_cols(wq, hd * QK_HEAD + NOPE)
    wkv_a = _permute_rope_cols(wkv_a, KV_LORA)
    w1 = jax.random.normal(ks[4], (DIM, INTER), jnp.float32) * std
    w3 = jax.random.normal(ks[5], (DIM, INTER), jnp.float32) * std
    return {
        "attn_norm": jnp.ones((DIM,), jnp.float32),
        "ffn_norm": jnp.ones((DIM,), jnp.float32),
        "kv_norm": jnp.ones((KV_LORA,), jnp.float32),
        "wqkv": jnp.concatenate([wq, wkv_a], axis=1),        # fused q / kv_a projection
        "wkv_b": jax.random.normal(ks[2], (KV_LORA, N_HEAD * (NOPE + V_DIM)), jnp.float32) * std,
        "wo": jax.random.normal(ks[3], (N_HEAD * V_DIM, DIM), jnp.float32) * std,
        "w13": jnp.concatenate([w1, w3], axis=1),            # fused gate / up projection
        "w2": jax.random.normal(ks[6], (INTER, DIM), jnp.float32) * std,
    }


def stack_layers(key, n_layer):
    blocks = [init_block(k) for k in jax.random.split(key, n_layer)]
    return jax.tree.map(lambda *xs: jnp.stack(xs, axis=0), *blocks)


def init_params(key):
    k_vit, k_txt = jax.random.split(key)
    kv = jax.random.split(k_vit, 3)
    kt = jax.random.split(k_txt, 2)
    v_cos, v_sin = precompute_rope(ROPE, SEQ_V)
    t_cos, t_sin = precompute_rope(ROPE, TEXT_LEN)
    vit = {
        "patch_norm": jnp.ones((1, PATCH_DIM), jnp.float32),
        "patch_w": jax.random.normal(kv[0], (PATCH_DIM, DIM), jnp.float32) * 0.02,
        "patch_b": jnp.zeros((1, DIM), jnp.float32),
        "cls_token": jax.random.normal(kv[1], (1, DIM), jnp.float32),
        "rope_cos": v_cos, "rope_sin": v_sin,
        "layers": stack_layers(kv[2], N_LAYER),
    }
    text = {
        "embed": jax.random.normal(kt[0], (VOCAB, DIM), jnp.float32) * 0.02,
        "rope_cos": t_cos, "rope_sin": t_sin,
        "layers": stack_layers(kt[1], N_LAYER),
    }
    return {"vit": vit, "text": text}


# ----------------------------- main -------------------------------------------
if __name__ == "__main__":
    key = jax.random.PRNGKey(0)
    k_img, k_txt, k_param = jax.random.split(key, 3)
    img = jax.random.normal(k_img, (BATCH, CH, IMG, IMG), jnp.float32)      # NCHW
    text = jax.random.randint(k_txt, (BATCH, TEXT_LEN), 0, VOCAB, jnp.int32)
    params = init_params(k_param)

    img_emb, txt_emb = jax.jit(siglip_forward)(img, text, params)
    jax.block_until_ready((img_emb, txt_emb))
    assert img_emb.shape == (BATCH, DIM) and txt_emb.shape == (BATCH, DIM)
    assert bool(jnp.all(jnp.isfinite(img_emb))) and bool(jnp.all(jnp.isfinite(txt_emb)))
    print("KERNEL_OK")
</pallas_src>

<mosaic_0001>
module attributes {stable_mosaic.version = 11 : i64} {
  func.func @_vit_tower_kernel(%arg0: i32, %arg1: memref<1x4x192xf32, #tpu.memory_space<vmem>>, %arg2: memref<1x192xf32, #tpu.memory_space<vmem>>, %arg3: memref<192x32xf32, #tpu.memory_space<vmem>>, %arg4: memref<1x32xf32, #tpu.memory_space<vmem>>, %arg5: memref<1x32xf32, #tpu.memory_space<vmem>>, %arg6: memref<5x8xf32, #tpu.memory_space<vmem>>, %arg7: memref<5x8xf32, #tpu.memory_space<vmem>>, %arg8: memref<2x32xf32, #tpu.memory_space<vmem>>, %arg9: memref<2x32xf32, #tpu.memory_space<vmem>>, %arg10: memref<2x16xf32, #tpu.memory_space<vmem>>, %arg11: memref<2x32x56xf32, #tpu.memory_space<vmem>>, %arg12: memref<2x16x32xf32, #tpu.memory_space<vmem>>, %arg13: memref<2x16x32xf32, #tpu.memory_space<vmem>>, %arg14: memref<2x32x96xf32, #tpu.memory_space<vmem>>, %arg15: memref<2x48x32xf32, #tpu.memory_space<vmem>>, %arg16: memref<1x1x32xf32, #tpu.memory_space<vmem>>, %arg17: memref<5x32xf32, #tpu.memory_space<vmem>>) attributes {dimension_semantics = [#tpu.dimension_semantics<parallel>], iteration_bounds = array<i64: 2>, scalar_prefetch = 0 : i64, scratch_operands = 1 : i64, tpu.core_type = #tpu.core_type<tc>, window_params = [{transform_indices = @transform_0, window_bounds = array<i64: 1, 4, 192>}, {pipeline_mode = #tpu.pipeline_mode<synchronous>, transform_indices = @transform_1, window_bounds = array<i64: 1, 192>}, {pipeline_mode = #tpu.pipeline_mode<synchronous>, transform_indices = @transform_2, window_bounds = array<i64: 192, 32>}, {pipeline_mode = #tpu.pipeline_mode<synchronous>, transform_indices = @transform_3, window_bounds = array<i64: 1, 32>}, {pipeline_mode = #tpu.pipeline_mode<synchronous>, transform_indices = @transform_4, window_bounds = array<i64: 1, 32>}, {pipeline_mode = #tpu.pipeline_mode<synchronous>, transform_indices = @transform_5, window_bounds = array<i64: 5, 8>}, {pipeline_mode = #tpu.pipeline_mode<synchronous>, transform_indices = @transform_6, window_bounds = array<i64: 5, 8>}, {pipeline_mode = #tpu.pipeline_mode<synchronous>, transform_indices = @transform_7, window_bounds = array<i64: 2, 32>}, {pipeline_mode = #tpu.pipeline_mode<synchronous>, transform_indices = @transform_8, window_bounds = array<i64: 2, 32>}, {pipeline_mode = #tpu.pipeline_mode<synchronous>, transform_indices = @transform_9, window_bounds = array<i64: 2, 16>}, {pipeline_mode = #tpu.pipeline_mode<synchronous>, transform_indices = @transform_10, window_bounds = array<i64: 2, 32, 56>}, {pipeline_mode = #tpu.pipeline_mode<synchronous>, transform_indices = @transform_11, window_bounds = array<i64: 2, 16, 32>}, {pipeline_mode = #tpu.pipeline_mode<synchronous>, transform_indices = @transform_12, window_bounds = array<i64: 2, 16, 32>}, {pipeline_mode = #tpu.pipeline_mode<synchronous>, transform_indices = @transform_13, window_bounds = array<i64: 2, 32, 96>}, {pipeline_mode = #tpu.pipeline_mode<synchronous>, transform_indices = @transform_14, window_bounds = array<i64: 2, 48, 32>}, {transform_indices = @transform_15, window_bounds = array<i64: 1, 1, 32>}]} {
    %c0 = arith.constant 0 : index
    %c0_0 = arith.constant 0 : index
    %c0_1 = arith.constant 0 : index
    %0 = vector.load %arg1[%c0, %c0_0, %c0_1] : memref<1x4x192xf32, #tpu.memory_space<vmem>>, vector<1x4x192xf32>
    %1 = vector.shape_cast %0 : vector<1x4x192xf32> to vector<4x192xf32>
    %c0_2 = arith.constant 0 : index
    %c0_3 = arith.constant 0 : index
    %2 = vector.load %arg2[%c0_2, %c0_3] : memref<1x192xf32, #tpu.memory_space<vmem>>, vector<1x192xf32>
    %3 = arith.mulf %1, %1 : vector<4x192xf32>
    %cst = arith.constant dense<0.000000e+00> : vector<4xf32>
    %4 = vector.multi_reduction <add>, %3, %cst [1] : vector<4x192xf32> to vector<4xf32>
    %5 = vector.shape_cast %4 : vector<4xf32> to vector<4x1xf32>
    %cst_4 = arith.constant 1.920000e+02 : f32
    %6 = vector.broadcast %cst_4 : f32 to vector<4x1xf32>
    %7 = arith.divf %5, %6 : vector<4x1xf32>
    %cst_5 = arith.constant 9.99999997E-7 : f32
    %8 = vector.broadcast %cst_5 : f32 to vector<4x1xf32>
    %9 = arith.addf %7, %8 : vector<4x1xf32>
    %10 = math.rsqrt %9 : vector<4x1xf32>
    %11 = vector.broadcast %10 : vector<4x1xf32> to vector<4x192xf32>
    %12 = arith.mulf %1, %11 : vector<4x192xf32>
    %13 = vector.broadcast %2 : vector<1x192xf32> to vector<4x192xf32>
    %14 = arith.mulf %12, %13 : vector<4x192xf32>
    %c0_6 = arith.constant 0 : index
    %c0_7 = arith.constant 0 : index
    %15 = vector.load %arg3[%c0_6, %c0_7] : memref<192x32xf32, #tpu.memory_space<vmem>>, vector<192x32xf32>
    %cst_8 = arith.constant dense<0.000000e+00> : vector<4x32xf32>
    %16 = tpu.matmul %14, %15, %cst_8 {dimension_numbers = #tpu.dot_dimension_numbers<[1], [0], [0], [1], [0, 0, 1, 1], [], []>} : vector<4x192xf32>, vector<192x32xf32>, vector<4x32xf32> -> vector<4x32xf32>
    %c0_9 = arith.constant 0 : index
    %c0_10 = arith.constant 0 : index
    %17 = vector.load %arg4[%c0_9, %c0_10] : memref<1x32xf32, #tpu.memory_space<vmem>>, vector<1x32xf32>
    %18 = vector.broadcast %17 : vector<1x32xf32> to vector<4x32xf32>
    %19 = arith.addf %16, %18 : vector<4x32xf32>
    %c0_11 = arith.constant 0 : index
    %c0_12 = arith.constant 0 : index
    %20 = vector.load %arg5[%c0_11, %c0_12] : memref<1x32xf32, #tpu.memory_space<vmem>>, vector<1x32xf32>
    %c0_13 = arith.constant 0 : index
    %c0_14 = arith.constant 0 : index
    %21 = vector.load %arg17[%c0_13, %c0_14] : memref<5x32xf32, #tpu.memory_space<vmem>>, vector<1x32xf32>
    tpu.vector_store %arg17[%c0_13, %c0_14], %20 {strides = array<i32>} : memref<5x32xf32, #tpu.memory_space<vmem>>, vector<1x32xf32>,
    %c1 = arith.constant 1 : index
    %c0_15 = arith.constant 0 : index
    %22 = vector.load %arg17[%c1, %c0_15] : memref<5x32xf32, #tpu.memory_space<vmem>>, vector<4x32xf32>
    tpu.vector_store %arg17[%c1, %c0_15], %19 {strides = array<i32>} : memref<5x32xf32, #tpu.memory_space<vmem>>, vector<4x32xf32>,
    %c0_16 = arith.constant 0 : index
    %c0_17 = arith.constant 0 : index
    %23 = vector.load %arg17[%c0_16, %c0_17] : memref<5x32xf32, #tpu.memory_space<vmem>>, vector<5x32xf32>
    %c0_18 = arith.constant 0 : index
    %c0_19 = arith.constant 0 : index
    %24 = vector.load %arg6[%c0_18, %c0_19] : memref<5x8xf32, #tpu.memory_space<vmem>>, vector<5x8xf32>
    %c0_20 = arith.constant 0 : index
    %c0_21 = arith.constant 0 : index
    %25 = vector.load %arg7[%c0_20, %c0_21] : memref<5x8xf32, #tpu.memory_space<vmem>>, vector<5x8xf32>
    %c0_22 = arith.constant 0 : index
    %c0_23 = arith.constant 0 : index
    %26 = vector.load %arg8[%c0_22, %c0_23] : memref<2x32xf32, #tpu.memory_space<vmem>>, vector<2x32xf32>
    %c0_24 = arith.constant 0 : index
    %c0_25 = arith.constant 0 : index
    %27 = vector.load %arg9[%c0_24, %c0_25] : memref<2x32xf32, #tpu.memory_space<vmem>>, vector<2x32xf32>
    %c0_26 = arith.constant 0 : index
    %c0_27 = arith.constant 0 : index
    %28 = vector.load %arg10[%c0_26, %c0_27] : memref<2x16xf32, #tpu.memory_space<vmem>>, vector<2x16xf32>
    %29 = vector.extract_strided_slice %26 {offsets = [0, 0], sizes = [1, 32], strides = [1, 1]} : vector<2x32xf32> to vector<1x32xf32>
    %30 = arith.mulf %23, %23 : vector<5x32xf32>
    %cst_28 = arith.constant dense<0.000000e+00> : vector<5xf32>
    %31 = vector.multi_reduction <add>, %30, %cst_28 [1] : vector<5x32xf32> to vector<5xf32>
    %32 = vector.shape_cast %31 : vector<5xf32> to vector<5x1xf32>
    %cst_29 = arith.constant 3.200000e+01 : f32
    %33 = vector.broadcast %cst_29 : f32 to vector<5x1xf32>
    %34 = arith.divf %32, %33 : vector<5x1xf32>
    %cst_30 = arith.constant 9.99999997E-7 : f32
    %35 = vector.broadcast %cst_30 : f32 to vector<5x1xf32>
    %36 = arith.addf %34, %35 : vector<5x1xf32>
    %37 = math.rsqrt %36 : vector<5x1xf32>
    %38 = vector.broadcast %37 : vector<5x1xf32> to vector<5x32xf32>
    %39 = arith.mulf %23, %38 : vector<5x32xf32>
    %40 = vector.broadcast %29 : vector<1x32xf32> to vector<5x32xf32>
    %41 = arith.mulf %39, %40 : vector<5x32xf32>
    %c0_31 = arith.constant 0 : index
    %c0_32 = arith.constant 0 : index
    %c0_33 = arith.constant 0 : index
    %42 = vector.load %arg11[%c0_31, %c0_32, %c0_33] : memref<2x32x56xf32, #tpu.memory_space<vmem>>, vector<1x32x56xf32>
    %43 = vector.shape_cast %42 : vector<1x32x56xf32> to vector<32x56xf32>
    %cst_34 = arith.constant dense<0.000000e+00> : vector<5x56xf32>
    %44 = tpu.matmul %41, %43, %cst_34 {dimension_numbers = #tpu.dot_dimension_numbers<[1], [0], [0], [1], [0, 0, 1, 1], [], []>} : vector<5x32xf32>, vector<32x56xf32>, vector<5x56xf32> -> vector<5x56xf32>
    %45 = vector.extract_strided_slice %44 {offsets = [0, 0], sizes = [5, 32], strides = [1, 1]} : vector<5x56xf32> to vector<5x32xf32>
    %46 = vector.extract_strided_slice %44 {offsets = [0, 32], sizes = [5, 16], strides = [1, 1]} : vector<5x56xf32> to vector<5x16xf32>
    %47 = vector.extract_strided_slice %28 {offsets = [0, 0], sizes = [1, 16], strides = [1, 1]} : vector<2x16xf32> to vector<1x16xf32>
    %48 = arith.mulf %46, %46 : vector<5x16xf32>
    %cst_35 = arith.constant dense<0.000000e+00> : vector<5xf32>
    %49 = vector.multi_reduction <add>, %48, %cst_35 [1] : vector<5x16xf32> to vector<5xf32>
    %50 = vector.shape_cast %49 : vector<5xf32> to vector<5x1xf32>
    %cst_36 = arith.constant 1.600000e+01 : f32
    %51 = vector.broadcast %cst_36 : f32 to vector<5x1xf32>
    %52 = arith.divf %50, %51 : vector<5x1xf32>
    %cst_37 = arith.constant 9.99999997E-7 : f32
    %53 = vector.broadcast %cst_37 : f32 to vector<5x1xf32>
    %54 = arith.addf %52, %53 : vector<5x1xf32>
    %55 = math.rsqrt %54 : vector<5x1xf32>
    %56 = vector.broadcast %55 : vector<5x1xf32> to vector<5x16xf32>
    %57 = arith.mulf %46, %56 : vector<5x16xf32>
    %58 = vector.broadcast %47 : vector<1x16xf32> to vector<5x16xf32>
    %59 = arith.mulf %57, %58 : vector<5x16xf32>
    %60 = vector.extract_strided_slice %44 {offsets = [0, 48], sizes = [5, 8], strides = [1, 1]} : vector<5x56xf32> to vector<5x8xf32>
    %61 = vector.extract_strided_slice %60 {offsets = [0, 4], sizes = [5, 4], strides = [1, 1]} : vector<5x8xf32> to vector<5x4xf32>
    %cst_38 = arith.constant 0.000000e+00 : f32
    %62 = vector.broadcast %cst_38 : f32 to vector<5x4xf32>
    %63 = arith.subf %62, %61 : vector<5x4xf32>
    %64 = vector.extract_strided_slice %60 {offsets = [0, 0], sizes = [5, 4], strides = [1, 1]} : vector<5x8xf32> to vector<5x4xf32>
    %65 = tpu.concatenate %63, %64 in 1 : vector<5x4xf32>, vector<5x4xf32> -> vector<5x8xf32>
    %66 = arith.mulf %60, %24 : vector<5x8xf32>
    %67 = arith.mulf %65, %25 : vector<5x8xf32>
    %68 = arith.addf %66, %67 : vector<5x8xf32>
    %c0_39 = arith.constant 0 : index
    %c0_40 = arith.constant 0 : index
    %c0_41 = arith.constant 0 : index
    %69 = vector.load %arg12[%c0_39, %c0_40, %c0_41] : memref<2x16x32xf32, #tpu.memory_space<vmem>>, vector<1x16x32xf32>
    %70 = vector.shape_cast %69 : vector<1x16x32xf32> to vector<16x32xf32>
    %cst_42 = arith.constant dense<0.000000e+00> : vector<5x32xf32>
    %71 = tpu.matmul %59, %70, %cst_42 {dimension_numbers = #tpu.dot_dimension_numbers<[1], [0], [0], [1], [0, 0, 1, 1], [], []>} : vector<5x16xf32>, vector<16x32xf32>, vector<5x32xf32> -> vector<5x32xf32>
    %72 = vector.extract_strided_slice %45 {offsets = [0, 0], sizes = [5, 16], strides = [1, 1]} : vector<5x32xf32> to vector<5x16xf32>
    %73 = vector.extract_strided_slice %72 {offsets = [0, 8], sizes = [5, 8], strides = [1, 1]} : vector<5x16xf32> to vector<5x8xf32>
    %74 = vector.extract_strided_slice %73 {offsets = [0, 4], sizes = [5, 4], strides = [1, 1]} : vector<5x8xf32> to vector<5x4xf32>
    %cst_43 = arith.constant 0.000000e+00 : f32
    %75 = vector.broadcast %cst_43 : f32 to vector<5x4xf32>
    %76 = arith.subf %75, %74 : vector<5x4xf32>
    %77 = vector.extract_strided_slice %73 {offsets = [0, 0], sizes = [5, 4], strides = [1, 1]} : vector<5x8xf32> to vector<5x4xf32>
    %78 = tpu.concatenate %76, %77 in 1 : vector<5x4xf32>, vector<5x4xf32> -> vector<5x8xf32>
    %79 = arith.mulf %73, %24 : vector<5x8xf32>
    %80 = arith.mulf %78, %25 : vector<5x8xf32>
    %81 = arith.addf %79, %80 : vector<5x8xf32>
    %82 = vector.extract_strided_slice %72 {offsets = [0, 0], sizes = [5, 8], strides = [1, 1]} : vector<5x16xf32> to vector<5x8xf32>
    %83 = tpu.concatenate %82, %81 in 1 : vector<5x8xf32>, vector<5x8xf32> -> vector<5x16xf32>
    %84 = vector.extract_strided_slice %71 {offsets = [0, 0], sizes = [5, 8], strides = [1, 1]} : vector<5x32xf32> to vector<5x8xf32>
    %85 = tpu.concatenate %84, %68 in 1 : vector<5x8xf32>, vector<5x8xf32> -> vector<5x16xf32>
    %86 = vector.extract_strided_slice %71 {offsets = [0, 8], sizes = [5, 8], strides = [1, 1]} : vector<5x32xf32> to vector<5x8xf32>
    %87 = tpu.transpose %85, [1, 0] : vector<5x16xf32> -> vector<16x5xf32>
    %cst_44 = arith.constant dense<0.000000e+00> : vector<5x5xf32>
    %88 = tpu.matmul %83, %87, %cst_44 {dimension_numbers = #tpu.dot_dimension_numbers<[1], [0], [0], [1], [0, 0, 1, 1], [], []>} : vector<5x16xf32>, vector<16x5xf32>, vector<5x5xf32> -> vector<5x5xf32>
    %cst_45 = arith.constant 2.500000e-01 : f32
    %89 = vector.broadcast %cst_45 : f32 to vector<5x5xf32>
    %90 = arith.mulf %88, %89 : vector<5x5xf32>
    %cst_46 = arith.constant dense<0xFF800000> : vector<5xf32>
    %91 = vector.multi_reduction <maximumf>, %90, %cst_46 [1] : vector<5x5xf32> to vector<5xf32>
    %92 = vector.shape_cast %91 : vector<5xf32> to vector<5x1xf32>
    %93 = vector.broadcast %92 : vector<5x1xf32> to vector<5x5xf32>
    %94 = arith.subf %90, %93 : vector<5x5xf32>
    %95 = math.exp %94 : vector<5x5xf32>
    %cst_47 = arith.constant dense<0.000000e+00> : vector<5xf32>
    %96 = vector.multi_reduction <add>, %95, %cst_47 [1] : vector<5x5xf32> to vector<5xf32>
    %97 = vector.shape_cast %96 : vector<5xf32> to vector<5x1xf32>
    %98 = tpu.reciprocal %97 {approx = true} : vector<5x1xf32> -> vector<5x1xf32>
    %99 = vector.broadcast %98 : vector<5x1xf32> to vector<5x5xf32>
    %100 = arith.mulf %95, %99 : vector<5x5xf32>
    %cst_48 = arith.constant dense<0.000000e+00> : vector<5x8xf32>
    %101 = tpu.matmul %100, %86, %cst_48 {dimension_numbers = #tpu.dot_dimension_numbers<[1], [0], [0], [1], [0, 0, 1, 1], [], []>} : vector<5x5xf32>, vector<5x8xf32>, vector<5x8xf32> -> vector<5x8xf32>
    %102 = vector.extract_strided_slice %45 {offsets = [0, 16], sizes = [5, 16], strides = [1, 1]} : vector<5x32xf32> to vector<5x16xf32>
    %103 = vector.extract_strided_slice %102 {offsets = [0, 8], sizes = [5, 8], strides = [1, 1]} : vector<5x16xf32> to vector<5x8xf32>
    %104 = vector.extract_strided_slice %103 {offsets = [0, 4], sizes = [5, 4], strides = [1, 1]} : vector<5x8xf32> to vector<5x4xf32>
    %cst_49 = arith.constant 0.000000e+00 : f32
    %105 = vector.broadcast %cst_49 : f32 to vector<5x4xf32>
    %106 = arith.subf %105, %104 : vector<5x4xf32>
    %107 = vector.extract_strided_slice %103 {offsets = [0, 0], sizes = [5, 4], strides = [1, 1]} : vector<5x8xf32> to vector<5x4xf32>
    %108 = tpu.concatenate %106, %107 in 1 : vector<5x4xf32>, vector<5x4xf32> -> vector<5x8xf32>
    %109 = arith.mulf %103, %24 : vector<5x8xf32>
    %110 = arith.mulf %108, %25 : vector<5x8xf32>
    %111 = arith.addf %109, %110 : vector<5x8xf32>
    %112 = vector.extract_strided_slice %102 {offsets = [0, 0], sizes = [5, 8], strides = [1, 1]} : vector<5x16xf32> to vector<5x8xf32>
    %113 = tpu.concatenate %112, %111 in 1 : vector<5x8xf32>, vector<5x8xf32> -> vector<5x16xf32>
    %114 = vector.extract_strided_slice %71 {offsets = [0, 16], sizes = [5, 8], strides = [1, 1]} : vector<5x32xf32> to vector<5x8xf32>
    %115 = tpu.concatenate %114, %68 in 1 : vector<5x8xf32>, vector<5x8xf32> -> vector<5x16xf32>
    %116 = vector.extract_strided_slice %71 {offsets = [0, 24], sizes = [5, 8], strides = [1, 1]} : vector<5x32xf32> to vector<5x8xf32>
    %117 = tpu.transpose %115, [1, 0] : vector<5x16xf32> -> vector<16x5xf32>
    %cst_50 = arith.constant dense<0.000000e+00> : vector<5x5xf32>
    %118 = tpu.matmul %113, %117, %cst_50 {dimension_numbers = #tpu.dot_dimension_numbers<[1], [0], [0], [1], [0, 0, 1, 1], [], []>} : vector<5x16xf32>, vector<16x5xf32>, vector<5x5xf32> -> vector<5x5xf32>
    %cst_51 = arith.constant 2.500000e-01 : f32
    %119 = vector.broadcast %cst_51 : f32 to vector<5x5xf32>
    %120 = arith.mulf %118, %119 : vector<5x5xf32>
    %cst_52 = arith.constant dense<0xFF800000> : vector<5xf32>
    %121 = vector.multi_reduction <maximumf>, %120, %cst_52 [1] : vector<5x5xf32> to vector<5xf32>
    %122 = vector.shape_cast %121 : vector<5xf32> to vector<5x1xf32>
    %123 = vector.broadcast %122 : vector<5x1xf32> to vector<5x5xf32>
    %124 = arith.subf %120, %123 : vector<5x5xf32>
    %125 = math.exp %124 : vector<5x5xf32>
    %cst_53 = arith.constant dense<0.000000e+00> : vector<5xf32>
    %126 = vector.multi_reduction <add>, %125, %cst_53 [1] : vector<5x5xf32> to vector<5xf32>
    %127 = vector.shape_cast %126 : vector<5xf32> to vector<5x1xf32>
    %128 = tpu.reciprocal %127 {approx = true} : vector<5x1xf32> -> vector<5x1xf32>
    %129 = vector.broadcast %128 : vector<5x1xf32> to vector<5x5xf32>
    %130 = arith.mulf %125, %129 : vector<5x5xf32>
    %cst_54 = arith.constant dense<0.000000e+00> : vector<5x8xf32>
    %131 = tpu.matmul %130, %116, %cst_54 {dimension_numbers = #tpu.dot_dimension_numbers<[1], [0], [0], [1], [0, 0, 1, 1], [], []>} : vector<5x5xf32>, vector<5x8xf32>, vector<5x8xf32> -> vector<5x8xf32>
    %132 = tpu.concatenate %101, %131 in 1 : vector<5x8xf32>, vector<5x8xf32> -> vector<5x16xf32>
    %c0_55 = arith.constant 0 : index
    %c0_56 = arith.constant 0 : index
    %c0_57 = arith.constant 0 : index
    %133 = vector.load %arg13[%c0_55, %c0_56, %c0_57] : memref<2x16x32xf32, #tpu.memory_space<vmem>>, vector<1x16x32xf32>
    %134 = vector.shape_cast %133 : vector<1x16x32xf32> to vector<16x32xf32>
    %cst_58 = arith.constant dense<0.000000e+00> : vector<5x32xf32>
    %135 = tpu.matmul %132, %134, %cst_58 {dimension_numbers = #tpu.dot_dimension_numbers<[1], [0], [0], [1], [0, 0, 1, 1], [], []>} : vector<5x16xf32>, vector<16x32xf32>, vector<5x32xf32> -> vector<5x32xf32>
    %136 = arith.addf %23, %135 : vector<5x32xf32>
    %137 = vector.extract_strided_slice %27 {offsets = [0, 0], sizes = [1, 32], strides = [1, 1]} : vector<2x32xf32> to vector<1x32xf32>
    %138 = arith.mulf %136, %136 : vector<5x32xf32>
    %cst_59 = arith.constant dense<0.000000e+00> : vector<5xf32>
    %139 = vector.multi_reduction <add>, %138, %cst_59 [1] : vector<5x32xf32> to vector<5xf32>
    %140 = vector.shape_cast %139 : vector<5xf32> to vector<5x1xf32>
    %cst_60 = arith.constant 3.200000e+01 : f32
    %141 = vector.broadcast %cst_60 : f32 to vector<5x1xf32>
    %142 = arith.divf %140, %141 : vector<5x1xf32>
    %cst_61 = arith.constant 9.99999997E-7 : f32
    %143 = vector.broadcast %cst_61 : f32 to vector<5x1xf32>
    %144 = arith.addf %142, %143 : vector<5x1xf32>
    %145 = math.rsqrt %144 : vector<5x1xf32>
    %146 = vector.broadcast %145 : vector<5x1xf32> to vector<5x32xf32>
    %147 = arith.mulf %136, %146 : vector<5x32xf32>
    %148 = vector.broadcast %137 : vector<1x32xf32> to vector<5x32xf32>
    %149 = arith.mulf %147, %148 : vector<5x32xf32>
    %c0_62 = arith.constant 0 : index
    %c0_63 = arith.constant 0 : index
    %c0_64 = arith.constant 0 : index
    %150 = vector.load %arg14[%c0_62, %c0_63, %c0_64] : memref<2x32x96xf32, #tpu.memory_space<vmem>>, vector<1x32x96xf32>
    %151 = vector.shape_cast %150 : vector<1x32x96xf32> to vector<32x96xf32>
    %cst_65 = arith.constant dense<0.000000e+00> : vector<5x96xf32>
    %152 = tpu.matmul %149, %151, %cst_65 {dimension_numbers = #tpu.dot_dimension_numbers<[1], [0], [0], [1], [0, 0, 1, 1], [], []>} : vector<5x32xf32>, vector<32x96xf32>, vector<5x96xf32> -> vector<5x96xf32>
    %153 = vector.extract_strided_slice %152 {offsets = [0, 0], sizes = [5, 48], strides = [1, 1]} : vector<5x96xf32> to vector<5x48xf32>
    %154 = vector.extract_strided_slice %152 {offsets = [0, 48], sizes = [5, 48], strides = [1, 1]} : vector<5x96xf32> to vector<5x48xf32>
    %155 = arith.negf %153 : vector<5x48xf32>
    %156 = math.exp %155 : vector<5x48xf32>
    %cst_66 = arith.constant 1.000000e+00 : f32
    %157 = vector.broadcast %cst_66 : f32 to vector<5x48xf32>
    %158 = arith.addf %157, %156 : vector<5x48xf32>
    %159 = arith.divf %157, %158 : vector<5x48xf32>
    %160 = arith.mulf %153, %159 : vector<5x48xf32>
    %161 = arith.mulf %160, %154 : vector<5x48xf32>
    %c0_67 = arith.constant 0 : index
    %c0_68 = arith.constant 0 : index
    %c0_69 = arith.constant 0 : index
    %162 = vector.load %arg15[%c0_67, %c0_68, %c0_69] : memref<2x48x32xf32, #tpu.memory_space<vmem>>, vector<1x48x32xf32>
    %163 = vector.shape_cast %162 : vector<1x48x32xf32> to vector<48x32xf32>
    %cst_70 = arith.constant dense<0.000000e+00> : vector<5x32xf32>
    %164 = tpu.matmul %161, %163, %cst_70 {dimension_numbers = #tpu.dot_dimension_numbers<[1], [0], [0], [1], [0, 0, 1, 1], [], []>} : vector<5x48xf32>, vector<48x32xf32>, vector<5x32xf32> -> vector<5x32xf32>
    %165 = arith.addf %136, %164 : vector<5x32xf32>
    %166 = vector.extract_strided_slice %26 {offsets = [1, 0], sizes = [1, 32], strides = [1, 1]} : vector<2x32xf32> to vector<1x32xf32>
    %167 = arith.mulf %165, %165 : vector<5x32xf32>
    %cst_71 = arith.constant dense<0.000000e+00> : vector<5xf32>
    %168 = vector.multi_reduction <add>, %167, %cst_71 [1] : vector<5x32xf32> to vector<5xf32>
    %169 = vector.shape_cast %168 : vector<5xf32> to vector<5x1xf32>
    %cst_72 = arith.constant 3.200000e+01 : f32
    %170 = vector.broadcast %cst_72 : f32 to vector<5x1xf32>
    %171 = arith.divf %169, %170 : vector<5x1xf32>
    %cst_73 = arith.constant 9.99999997E-7 : f32
    %172 = vector.broadcast %cst_73 : f32 to vector<5x1xf32>
    %173 = arith.addf %171, %172 : vector<5x1xf32>
    %174 = math.rsqrt %173 : vector<5x1xf32>
    %175 = vector.broadcast %174 : vector<5x1xf32> to vector<5x32xf32>
    %176 = arith.mulf %165, %175 : vector<5x32xf32>
    %177 = vector.broadcast %166 : vector<1x32xf32> to vector<5x32xf32>
    %178 = arith.mulf %176, %177 : vector<5x32xf32>
    %c1_74 = arith.constant 1 : index
    %c0_75 = arith.constant 0 : index
    %c0_76 = arith.constant 0 : index
    %179 = vector.load %arg11[%c1_74, %c0_75, %c0_76] : memref<2x32x56xf32, #tpu.memory_space<vmem>>, vector<1x32x56xf32>
    %180 = vector.shape_cast %179 : vector<1x32x56xf32> to vector<32x56xf32>
    %cst_77 = arith.constant dense<0.000000e+00> : vector<5x56xf32>
    %181 = tpu.matmul %178, %180, %cst_77 {dimension_numbers = #tpu.dot_dimension_numbers<[1], [0], [0], [1], [0, 0, 1, 1], [], []>} : vector<5x32xf32>, vector<32x56xf32>, vector<5x56xf32> -> vector<5x56xf32>
    %182 = vector.extract_strided_slice %181 {offsets = [0, 0], sizes = [5, 32], strides = [1, 1]} : vector<5x56xf32> to vector<5x32xf32>
    %183 = vector.extract_strided_slice %181 {offsets = [0, 32], sizes = [5, 16], strides = [1, 1]} : vector<5x56xf32> to vector<5x16xf32>
    %184 = vector.extract_strided_slice %28 {offsets = [1, 0], sizes = [1, 16], strides = [1, 1]} : vector<2x16xf32> to vector<1x16xf32>
    %185 = arith.mulf %183, %183 : vector<5x16xf32>
    %cst_78 = arith.constant dense<0.000000e+00> : vector<5xf32>
    %186 = vector.multi_reduction <add>, %185, %cst_78 [1] : vector<5x16xf32> to vector<5xf32>
    %187 = vector.shape_cast %186 : vector<5xf32> to vector<5x1xf32>
    %cst_79 = arith.constant 1.600000e+01 : f32
    %188 = vector.broadcast %cst_79 : f32 to vector<5x1xf32>
    %189 = arith.divf %187, %188 : vector<5x1xf32>
    %cst_80 = arith.constant 9.99999997E-7 : f32
    %190 = vector.broadcast %cst_80 : f32 to vector<5x1xf32>
    %191 = arith.addf %189, %190 : vector<5x1xf32>
    %192 = math.rsqrt %191 : vector<5x1xf32>
    %193 = vector.broadcast %192 : vector<5x1xf32> to vector<5x16xf32>
    %194 = arith.mulf %183, %193 : vector<5x16xf32>
    %195 = vector.broadcast %184 : vector<1x16xf32> to vector<5x16xf32>
    %196 = arith.mulf %194, %195 : vector<5x16xf32>
    %197 = vector.extract_strided_slice %181 {offsets = [0, 48], sizes = [5, 8], strides = [1, 1]} : vector<5x56xf32> to vector<5x8xf32>
    %198 = vector.extract_strided_slice %197 {offsets = [0, 4], sizes = [5, 4], strides = [1, 1]} : vector<5x8xf32> to vector<5x4xf32>
    %cst_81 = arith.constant 0.000000e+00 : f32
    %199 = vector.broadcast %cst_81 : f32 to vector<5x4xf32>
    %200 = arith.subf %199, %198 : vector<5x4xf32>
    %201 = vector.extract_strided_slice %197 {offsets = [0, 0], sizes = [5, 4], strides = [1, 1]} : vector<5x8xf32> to vector<5x4xf32>
    %202 = tpu.concatenate %200, %201 in 1 : vector<5x4xf32>, vector<5x4xf32> -> vector<5x8xf32>
    %203 = arith.mulf %197, %24 : vector<5x8xf32>
    %204 = arith.mulf %202, %25 : vector<5x8xf32>
    %205 = arith.addf %203, %204 : vector<5x8xf32>
    %c1_82 = arith.constant 1 : index
    %c0_83 = arith.constant 0 : index
    %c0_84 = arith.constant 0 : index
    %206 = vector.load %arg12[%c1_82, %c0_83, %c0_84] : memref<2x16x32xf32, #tpu.memory_space<vmem>>, vector<1x16x32xf32>
    %207 = vector.shape_cast %206 : vector<1x16x32xf32> to vector<16x32xf32>
    %cst_85 = arith.constant dense<0.000000e+00> : vector<5x32xf32>
    %208 = tpu.matmul %196, %207, %cst_85 {dimension_numbers = #tpu.dot_dimension_numbers<[1], [0], [0], [1], [0, 0, 1, 1], [], []>} : vector<5x16xf32>, vector<16x32xf32>, vector<5x32xf32> -> vector<5x32xf32>
    %209 = vector.extract_strided_slice %182 {offsets = [0, 0], sizes = [5, 16], strides = [1, 1]} : vector<5x32xf32> to vector<5x16xf32>
    %210 = vector.extract_strided_slice %209 {offsets = [0, 8], sizes = [5, 8], strides = [1, 1]} : vector<5x16xf32> to vector<5x8xf32>
    %211 = vector.extract_strided_slice %210 {offsets = [0, 4], sizes = [5, 4], strides = [1, 1]} : vector<5x8xf32> to vector<5x4xf32>
    %cst_86 = arith.constant 0.000000e+00 : f32
    %212 = vector.broadcast %cst_86 : f32 to vector<5x4xf32>
    %213 = arith.subf %212, %211 : vector<5x4xf32>
    %214 = vector.extract_strided_slice %210 {offsets = [0, 0], sizes = [5, 4], strides = [1, 1]} : vector<5x8xf32> to vector<5x4xf32>
    %215 = tpu.concatenate %213, %214 in 1 : vector<5x4xf32>, vector<5x4xf32> -> vector<5x8xf32>
    %216 = arith.mulf %210, %24 : vector<5x8xf32>
    %217 = arith.mulf %215, %25 : vector<5x8xf32>
    %218 = arith.addf %216, %217 : vector<5x8xf32>
    %219 = vector.extract_strided_slice %209 {offsets = [0, 0], sizes = [5, 8], strides = [1, 1]} : vector<5x16xf32> to vector<5x8xf32>
    %220 = tpu.concatenate %219, %218 in 1 : vector<5x8xf32>, vector<5x8xf32> -> vector<5x16xf32>
    %221 = vector.extract_strided_slice %208 {offsets = [0, 0], sizes = [5, 8], strides = [1, 1]} : vector<5x32xf32> to vector<5x8xf32>
    %222 = tpu.concatenate %221, %205 in 1 : vector<5x8xf32>, vector<5x8xf32> -> vector<5x16xf32>
    %223 = vector.extract_strided_slice %208 {offsets = [0, 8], sizes = [5, 8], strides = [1, 1]} : vector<5x32xf32> to vector<5x8xf32>
    %224 = tpu.transpose %222, [1, 0] : vector<5x16xf32> -> vector<16x5xf32>
    %cst_87 = arith.constant dense<0.000000e+00> : vector<5x5xf32>
    %225 = tpu.matmul %220, %224, %cst_87 {dimension_numbers = #tpu.dot_dimension_numbers<[1], [0], [0], [1], [0, 0, 1, 1], [], []>} : vector<5x16xf32>, vector<16x5xf32>, vector<5x5xf32> -> vector<5x5xf32>
    %cst_88 = arith.constant 2.500000e-01 : f32
    %226 = vector.broadcast %cst_88 : f32 to vector<5x5xf32>
    %227 = arith.mulf %225, %226 : vector<5x5xf32>
    %cst_89 = arith.constant dense<0xFF800000> : vector<5xf32>
    %228 = vector.multi_reduction <maximumf>, %227, %cst_89 [1] : vector<5x5xf32> to vector<5xf32>
    %229 = vector.shape_cast %228 : vector<5xf32> to vector<5x1xf32>
    %230 = vector.broadcast %229 : vector<5x1xf32> to vector<5x5xf32>
    %231 = arith.subf %227, %230 : vector<5x5xf32>
    %232 = math.exp %231 : vector<5x5xf32>
    %cst_90 = arith.constant dense<0.000000e+00> : vector<5xf32>
    %233 = vector.multi_reduction <add>, %232, %cst_90 [1] : vector<5x5xf32> to vector<5xf32>
    %234 = vector.shape_cast %233 : vector<5xf32> to vector<5x1xf32>
    %235 = tpu.reciprocal %234 {approx = true} : vector<5x1xf32> -> vector<5x1xf32>
    %236 = vector.broadcast %235 : vector<5x1xf32> to vector<5x5xf32>
    %237 = arith.mulf %232, %236 : vector<5x5xf32>
    %cst_91 = arith.constant dense<0.000000e+00> : vector<5x8xf32>
    %238 = tpu.matmul %237, %223, %cst_91 {dimension_numbers = #tpu.dot_dimension_numbers<[1], [0], [0], [1], [0, 0, 1, 1], [], []>} : vector<5x5xf32>, vector<5x8xf32>, vector<5x8xf32> -> vector<5x8xf32>
    %239 = vector.extract_strided_slice %182 {offsets = [0, 16], sizes = [5, 16], strides = [1, 1]} : vector<5x32xf32> to vector<5x16xf32>
    %240 = vector.extract_strided_slice %239 {offsets = [0, 8], sizes = [5, 8], strides = [1, 1]} : vector<5x16xf32> to vector<5x8xf32>
    %241 = vector.extract_strided_slice %240 {offsets = [0, 4], sizes = [5, 4], strides = [1, 1]} : vector<5x8xf32> to vector<5x4xf32>
    %cst_92 = arith.constant 0.000000e+00 : f32
    %242 = vector.broadcast %cst_92 : f32 to vector<5x4xf32>
    %243 = arith.subf %242, %241 : vector<5x4xf32>
    %244 = vector.extract_strided_slice %240 {offsets = [0, 0], sizes = [5, 4], strides = [1, 1]} : vector<5x8xf32> to vector<5x4xf32>
    %245 = tpu.concatenate %243, %244 in 1 : vector<5x4xf32>, vector<5x4xf32> -> vector<5x8xf32>
    %246 = arith.mulf %240, %24 : vector<5x8xf32>
    %247 = arith.mulf %245, %25 : vector<5x8xf32>
    %248 = arith.addf %246, %247 : vector<5x8xf32>
    %249 = vector.extract_strided_slice %239 {offsets = [0, 0], sizes = [5, 8], strides = [1, 1]} : vector<5x16xf32> to vector<5x8xf32>
    %250 = tpu.concatenate %249, %248 in 1 : vector<5x8xf32>, vector<5x8xf32> -> vector<5x16xf32>
    %251 = vector.extract_strided_slice %208 {offsets = [0, 16], sizes = [5, 8], strides = [1, 1]} : vector<5x32xf32> to vector<5x8xf32>
    %252 = tpu.concatenate %251, %205 in 1 : vector<5x8xf32>, vector<5x8xf32> -> vector<5x16xf32>
    %253 = vector.extract_strided_slice %208 {offsets = [0, 24], sizes = [5, 8], strides = [1, 1]} : vector<5x32xf32> to vector<5x8xf32>
    %254 = tpu.transpose %252, [1, 0] : vector<5x16xf32> -> vector<16x5xf32>
    %cst_93 = arith.constant dense<0.000000e+00> : vector<5x5xf32>
    %255 = tpu.matmul %250, %254, %cst_93 {dimension_numbers = #tpu.dot_dimension_numbers<[1], [0], [0], [1], [0, 0, 1, 1], [], []>} : vector<5x16xf32>, vector<16x5xf32>, vector<5x5xf32> -> vector<5x5xf32>
    %cst_94 = arith.constant 2.500000e-01 : f32
    %256 = vector.broadcast %cst_94 : f32 to vector<5x5xf32>
    %257 = arith.mulf %255, %256 : vector<5x5xf32>
    %cst_95 = arith.constant dense<0xFF800000> : vector<5xf32>
    %258 = vector.multi_reduction <maximumf>, %257, %cst_95 [1] : vector<5x5xf32> to vector<5xf32>
    %259 = vector.shape_cast %258 : vector<5xf32> to vector<5x1xf32>
    %260 = vector.broadcast %259 : vector<5x1xf32> to vector<5x5xf32>
    %261 = arith.subf %257, %260 : vector<5x5xf32>
    %262 = math.exp %261 : vector<5x5xf32>
    %cst_96 = arith.constant dense<0.000000e+00> : vector<5xf32>
    %263 = vector.multi_reduction <add>, %262, %cst_96 [1] : vector<5x5xf32> to vector<5xf32>
    %264 = vector.shape_cast %263 : vector<5xf32> to vector<5x1xf32>
    %265 = tpu.reciprocal %264 {approx = true} : vector<5x1xf32> -> vector<5x1xf32>
    %266 = vector.broadcast %265 : vector<5x1xf32> to vector<5x5xf32>
    %267 = arith.mulf %262, %266 : vector<5x5xf32>
    %cst_97 = arith.constant dense<0.000000e+00> : vector<5x8xf32>
    %268 = tpu.matmul %267, %253, %cst_97 {dimension_numbers = #tpu.dot_dimension_numbers<[1], [0], [0], [1], [0, 0, 1, 1], [], []>} : vector<5x5xf32>, vector<5x8xf32>, vector<5x8xf32> -> vector<5x8xf32>
    %269 = tpu.concatenate %238, %268 in 1 : vector<5x8xf32>, vector<5x8xf32> -> vector<5x16xf32>
    %c1_98 = arith.constant 1 : index
    %c0_99 = arith.constant 0 : index
    %c0_100 = arith.constant 0 : index
    %270 = vector.load %arg13[%c1_98, %c0_99, %c0_100] : memref<2x16x32xf32, #tpu.memory_space<vmem>>, vector<1x16x32xf32>
    %271 = vector.shape_cast %270 : vector<1x16x32xf32> to vector<16x32xf32>
    %cst_101 = arith.constant dense<0.000000e+00> : vector<5x32xf32>
    %272 = tpu.matmul %269, %271, %cst_101 {dimension_numbers = #tpu.dot_dimension_numbers<[1], [0], [0], [1], [0, 0, 1, 1], [], []>} : vector<5x16xf32>, vector<16x32xf32>, vector<5x32xf32> -> vector<5x32xf32>
    %273 = arith.addf %165, %272 : vector<5x32xf32>
    %274 = vector.extract_strided_slice %27 {offsets = [1, 0], sizes = [1, 32], strides = [1, 1]} : vector<2x32xf32> to vector<1x32xf32>
    %275 = arith.mulf %273, %273 : vector<5x32xf32>
    %cst_102 = arith.constant dense<0.000000e+00> : vector<5xf32>
    %276 = vector.multi_reduction <add>, %275, %cst_102 [1] : vector<5x32xf32> to vector<5xf32>
    %277 = vector.shape_cast %276 : vector<5xf32> to vector<5x1xf32>
    %cst_103 = arith.constant 3.200000e+01 : f32
    %278 = vector.broadcast %cst_103 : f32 to vector<5x1xf32>
    %279 = arith.divf %277, %278 : vector<5x1xf32>
    %cst_104 = arith.constant 9.99999997E-7 : f32
    %280 = vector.broadcast %cst_104 : f32 to vector<5x1xf32>
    %281 = arith.addf %279, %280 : vector<5x1xf32>
    %282 = math.rsqrt %281 : vector<5x1xf32>
    %283 = vector.broadcast %282 : vector<5x1xf32> to vector<5x32xf32>
    %284 = arith.mulf %273, %283 : vector<5x32xf32>
    %285 = vector.broadcast %274 : vector<1x32xf32> to vector<5x32xf32>
    %286 = arith.mulf %284, %285 : vector<5x32xf32>
    %c1_105 = arith.constant 1 : index
    %c0_106 = arith.constant 0 : index
    %c0_107 = arith.constant 0 : index
    %287 = vector.load %arg14[%c1_105, %c0_106, %c0_107] : memref<2x32x96xf32, #tpu.memory_space<vmem>>, vector<1x32x96xf32>
    %288 = vector.shape_cast %287 : vector<1x32x96xf32> to vector<32x96xf32>
    %cst_108 = arith.constant dense<0.000000e+00> : vector<5x96xf32>
    %289 = tpu.matmul %286, %288, %cst_108 {dimension_numbers = #tpu.dot_dimension_numbers<[1], [0], [0], [1], [0, 0, 1, 1], [], []>} : vector<5x32xf32>, vector<32x96xf32>, vector<5x96xf32> -> vector<5x96xf32>
    %290 = vector.extract_strided_slice %289 {offsets = [0, 0], sizes = [5, 48], strides = [1, 1]} : vector<5x96xf32> to vector<5x48xf32>
    %291 = vector.extract_strided_slice %289 {offsets = [0, 48], sizes = [5, 48], strides = [1, 1]} : vector<5x96xf32> to vector<5x48xf32>
    %292 = arith.negf %290 : vector<5x48xf32>
    %293 = math.exp %292 : vector<5x48xf32>
    %cst_109 = arith.constant 1.000000e+00 : f32
    %294 = vector.broadcast %cst_109 : f32 to vector<5x48xf32>
    %295 = arith.addf %294, %293 : vector<5x48xf32>
    %296 = arith.divf %294, %295 : vector<5x48xf32>
    %297 = arith.mulf %290, %296 : vector<5x48xf32>
    %298 = arith.mulf %297, %291 : vector<5x48xf32>
    %c1_110 = arith.constant 1 : index
    %c0_111 = arith.constant 0 : index
    %c0_112 = arith.constant 0 : index
    %299 = vector.load %arg15[%c1_110, %c0_111, %c0_112] : memref<2x48x32xf32, #tpu.memory_space<vmem>>, vector<1x48x32xf32>
    %300 = vector.shape_cast %299 : vector<1x48x32xf32> to vector<48x32xf32>
    %cst_113 = arith.constant dense<0.000000e+00> : vector<5x32xf32>
    %301 = tpu.matmul %298, %300, %cst_113 {dimension_numbers = #tpu.dot_dimension_numbers<[1], [0], [0], [1], [0, 0, 1, 1], [], []>} : vector<5x48xf32>, vector<48x32xf32>, vector<5x32xf32> -> vector<5x32xf32>
    %302 = arith.addf %273, %301 : vector<5x32xf32>
    %303 = vector.extract_strided_slice %302 {offsets = [0, 0], sizes = [1, 32], strides = [1, 1]} : vector<5x32xf32> to vector<1x32xf32>
    %c0_114 = arith.constant 0 : index
    %c0_115 = arith.constant 0 : index
    %c0_116 = arith.constant 0 : index
    %304 = vector.load %arg16[%c0_114, %c0_115, %c0_116] : memref<1x1x32xf32, #tpu.memory_space<vmem>>, vector<1x1x32xf32>
    %305 = vector.shape_cast %304 : vector<1x1x32xf32> to vector<1x32xf32>
    %306 = vector.shape_cast %303 : vector<1x32xf32> to vector<1x1x32xf32>
    tpu.vector_store %arg16[%c0_114, %c0_115, %c0_116], %306 {strides = array<i32>} : memref<1x1x32xf32, #tpu.memory_space<vmem>>, vector<1x1x32xf32>,
    return
  }
  func.func @transform_0(%arg0: i32) -> (i32, i32, i32) {
    %c0_i32 = arith.constant 0 : i32
    %c0_i32_0 = arith.constant 0 : i32
    %c0_i32_1 = arith.constant 0 : i32
    return %arg0, %c0_i32, %c0_i32_0 : i32, i32, i32
  }
  func.func @transform_1(%arg0: i32) -> (i32, i32) {
    %c0_i32 = arith.constant 0 : i32
    %c0_i32_0 = arith.constant 0 : i32
    %c0_i32_1 = arith.constant 0 : i32
    return %c0_i32, %c0_i32_0 : i32, i32
  }
  func.func @transform_2(%arg0: i32) -> (i32, i32) {
    %c0_i32 = arith.constant 0 : i32
    %c0_i32_0 = arith.constant 0 : i32
    %c0_i32_1 = arith.constant 0 : i32
    return %c0_i32, %c0_i32_0 : i32, i32
  }
  func.func @transform_3(%arg0: i32) -> (i32, i32) {
    %c0_i32 = arith.constant 0 : i32
    %c0_i32_0 = arith.constant 0 : i32
    %c0_i32_1 = arith.constant 0 : i32
    return %c0_i32, %c0_i32_0 : i32, i32
  }
  func.func @transform_4(%arg0: i32) -> (i32, i32) {
    %c0_i32 = arith.constant 0 : i32
    %c0_i32_0 = arith.constant 0 : i32
    %c0_i32_1 = arith.constant 0 : i32
    return %c0_i32, %c0_i32_0 : i32, i32
  }
  func.func @transform_5(%arg0: i32) -> (i32, i32) {
    %c0_i32 = arith.constant 0 : i32
    %c0_i32_0 = arith.constant 0 : i32
    %c0_i32_1 = arith.constant 0 : i32
    return %c0_i32, %c0_i32_0 : i32, i32
  }
  func.func @transform_6(%arg0: i32) -> (i32, i32) {
    %c0_i32 = arith.constant 0 : i32
    %c0_i32_0 = arith.constant 0 : i32
    %c0_i32_1 = arith.constant 0 : i32
    return %c0_i32, %c0_i32_0 : i32, i32
  }
  func.func @transform_7(%arg0: i32) -> (i32, i32) {
    %c0_i32 = arith.constant 0 : i32
    %c0_i32_0 = arith.constant 0 : i32
    %c0_i32_1 = arith.constant 0 : i32
    return %c0_i32, %c0_i32_0 : i32, i32
  }
  func.func @transform_8(%arg0: i32) -> (i32, i32) {
    %c0_i32 = arith.constant 0 : i32
    %c0_i32_0 = arith.constant 0 : i32
    %c0_i32_1 = arith.constant 0 : i32
    return %c0_i32, %c0_i32_0 : i32, i32
  }
  func.func @transform_9(%arg0: i32) -> (i32, i32) {
    %c0_i32 = arith.constant 0 : i32
    %c0_i32_0 = arith.constant 0 : i32
    %c0_i32_1 = arith.constant 0 : i32
    return %c0_i32, %c0_i32_0 : i32, i32
  }
  func.func @transform_10(%arg0: i32) -> (i32, i32, i32) {
    %c0_i32 = arith.constant 0 : i32
    %c0_i32_0 = arith.constant 0 : i32
    %c0_i32_1 = arith.constant 0 : i32
    %c0_i32_2 = arith.constant 0 : i32
    return %c0_i32, %c0_i32_0, %c0_i32_1 : i32, i32, i32
  }
  func.func @transform_11(%arg0: i32) -> (i32, i32, i32) {
    %c0_i32 = arith.constant 0 : i32
    %c0_i32_0 = arith.constant 0 : i32
    %c0_i32_1 = arith.constant 0 : i32
    %c0_i32_2 = arith.constant 0 : i32
    return %c0_i32, %c0_i32_0, %c0_i32_1 : i32, i32, i32
  }
  func.func @transform_12(%arg0: i32) -> (i32, i32, i32) {
    %c0_i32 = arith.constant 0 : i32
    %c0_i32_0 = arith.constant 0 : i32
    %c0_i32_1 = arith.constant 0 : i32
    %c0_i32_2 = arith.constant 0 : i32
    return %c0_i32, %c0_i32_0, %c0_i32_1 : i32, i32, i32
  }
  func.func @transform_13(%arg0: i32) -> (i32, i32, i32) {
    %c0_i32 = arith.constant 0 : i32
    %c0_i32_0 = arith.constant 0 : i32
    %c0_i32_1 = arith.constant 0 : i32
    %c0_i32_2 = arith.constant 0 : i32
    return %c0_i32, %c0_i32_0, %c0_i32_1 : i32, i32, i32
  }
  func.func @transform_14(%arg0: i32) -> (i32, i32, i32) {
    %c0_i32 = arith.constant 0 : i32
    %c0_i32_0 = arith.constant 0 : i32
    %c0_i32_1 = arith.constant 0 : i32
    %c0_i32_2 = arith.constant 0 : i32
    return %c0_i32, %c0_i32_0, %c0_i32_1 : i32, i32, i32
  }
  func.func @transform_15(%arg0: i32) -> (i32, i32, i32) {
    %c0_i32 = arith.constant 0 : i32
    %c0_i32_0 = arith.constant 0 : i32
    %c0_i32_1 = arith.constant 0 : i32
    return %arg0, %c0_i32, %c0_i32_0 : i32, i32, i32
  }
}

module attributes {stable_mosaic.version = 11 : i64} {
  func.func @_text_tower_kernel(%arg0: i32, %arg1: memref<1x8x32xf32, #tpu.memory_space<vmem>>, %arg2: memref<8x8xf32, #tpu.memory_space<vmem>>, %arg3: memref<8x8xf32, #tpu.memory_space<vmem>>, %arg4: memref<2x32xf32, #tpu.memory_space<vmem>>, %arg5: memref<2x32xf32, #tpu.memory_space<vmem>>, %arg6: memref<2x16xf32, #tpu.memory_space<vmem>>, %arg7: memref<2x32x56xf32, #tpu.memory_space<vmem>>, %arg8: memref<2x16x32xf32, #tpu.memory_space<vmem>>, %arg9: memref<2x16x32xf32, #tpu.memory_space<vmem>>, %arg10: memref<2x32x96xf32, #tpu.memory_space<vmem>>, %arg11: memref<2x48x32xf32, #tpu.memory_space<vmem>>, %arg12: memref<1x1x32xf32, #tpu.memory_space<vmem>>) attributes {dimension_semantics = [#tpu.dimension_semantics<parallel>], iteration_bounds = array<i64: 2>, scalar_prefetch = 0 : i64, scratch_operands = 0 : i64, tpu.core_type = #tpu.core_type<tc>, window_params = [{transform_indices = @transform_0, window_bounds = array<i64: 1, 8, 32>}, {pipeline_mode = #tpu.pipeline_mode<synchronous>, transform_indices = @transform_1, window_bounds = array<i64: 8, 8>}, {pipeline_mode = #tpu.pipeline_mode<synchronous>, transform_indices = @transform_2, window_bounds = array<i64: 8, 8>}, {pipeline_mode = #tpu.pipeline_mode<synchronous>, transform_indices = @transform_3, window_bounds = array<i64: 2, 32>}, {pipeline_mode = #tpu.pipeline_mode<synchronous>, transform_indices = @transform_4, window_bounds = array<i64: 2, 32>}, {pipeline_mode = #tpu.pipeline_mode<synchronous>, transform_indices = @transform_5, window_bounds = array<i64: 2, 16>}, {pipeline_mode = #tpu.pipeline_mode<synchronous>, transform_indices = @transform_6, window_bounds = array<i64: 2, 32, 56>}, {pipeline_mode = #tpu.pipeline_mode<synchronous>, transform_indices = @transform_7, window_bounds = array<i64: 2, 16, 32>}, {pipeline_mode = #tpu.pipeline_mode<synchronous>, transform_indices = @transform_8, window_bounds = array<i64: 2, 16, 32>}, {pipeline_mode = #tpu.pipeline_mode<synchronous>, transform_indices = @transform_9, window_bounds = array<i64: 2, 32, 96>}, {pipeline_mode = #tpu.pipeline_mode<synchronous>, transform_indices = @transform_10, window_bounds = array<i64: 2, 48, 32>}, {transform_indices = @transform_11, window_bounds = array<i64: 1, 1, 32>}]} {
    %c0 = arith.constant 0 : index
    %c0_0 = arith.constant 0 : index
    %c0_1 = arith.constant 0 : index
    %0 = vector.load %arg1[%c0, %c0_0, %c0_1] : memref<1x8x32xf32, #tpu.memory_space<vmem>>, vector<1x8x32xf32>
    %1 = vector.shape_cast %0 : vector<1x8x32xf32> to vector<8x32xf32>
    %c0_2 = arith.constant 0 : index
    %c0_3 = arith.constant 0 : index
    %2 = vector.load %arg2[%c0_2, %c0_3] : memref<8x8xf32, #tpu.memory_space<vmem>>, vector<8x8xf32>
    %c0_4 = arith.constant 0 : index
    %c0_5 = arith.constant 0 : index
    %3 = vector.load %arg3[%c0_4, %c0_5] : memref<8x8xf32, #tpu.memory_space<vmem>>, vector<8x8xf32>
    %c0_6 = arith.constant 0 : index
    %c0_7 = arith.constant 0 : index
    %4 = vector.load %arg4[%c0_6, %c0_7] : memref<2x32xf32, #tpu.memory_space<vmem>>, vector<2x32xf32>
    %c0_8 = arith.constant 0 : index
    %c0_9 = arith.constant 0 : index
    %5 = vector.load %arg5[%c0_8, %c0_9] : memref<2x32xf32, #tpu.memory_space<vmem>>, vector<2x32xf32>
    %c0_10 = arith.constant 0 : index
    %c0_11 = arith.constant 0 : index
    %6 = vector.load %arg6[%c0_10, %c0_11] : memref<2x16xf32, #tpu.memory_space<vmem>>, vector<2x16xf32>
    %7 = tpu.iota {dimensions = array<i32: 0>} : vector<8x8xi32>
    %8 = tpu.iota {dimensions = array<i32: 1>} : vector<8x8xi32>
    %9 = arith.cmpi sle, %8, %7 : vector<8x8xi32>
    %10 = vector.extract_strided_slice %4 {offsets = [0, 0], sizes = [1, 32], strides = [1, 1]} : vector<2x32xf32> to vector<1x32xf32>
    %11 = arith.mulf %1, %1 : vector<8x32xf32>
    %cst = arith.constant dense<0.000000e+00> : vector<8xf32>
    %12 = vector.multi_reduction <add>, %11, %cst [1] : vector<8x32xf32> to vector<8xf32>
    %13 = vector.shape_cast %12 : vector<8xf32> to vector<8x1xf32>
    %cst_12 = arith.constant 3.200000e+01 : f32
    %14 = vector.broadcast %cst_12 : f32 to vector<8x1xf32>
    %15 = arith.divf %13, %14 : vector<8x1xf32>
    %cst_13 = arith.constant 9.99999997E-7 : f32
    %16 = vector.broadcast %cst_13 : f32 to vector<8x1xf32>
    %17 = arith.addf %15, %16 : vector<8x1xf32>
    %18 = math.rsqrt %17 : vector<8x1xf32>
    %19 = vector.broadcast %18 : vector<8x1xf32> to vector<8x32xf32>
    %20 = arith.mulf %1, %19 : vector<8x32xf32>
    %21 = vector.broadcast %10 : vector<1x32xf32> to vector<8x32xf32>
    %22 = arith.mulf %20, %21 : vector<8x32xf32>
    %c0_14 = arith.constant 0 : index
    %c0_15 = arith.constant 0 : index
    %c0_16 = arith.constant 0 : index
    %23 = vector.load %arg7[%c0_14, %c0_15, %c0_16] : memref<2x32x56xf32, #tpu.memory_space<vmem>>, vector<1x32x56xf32>
    %24 = vector.shape_cast %23 : vector<1x32x56xf32> to vector<32x56xf32>
    %cst_17 = arith.constant dense<0.000000e+00> : vector<8x56xf32>
    %25 = tpu.matmul %22, %24, %cst_17 {dimension_numbers = #tpu.dot_dimension_numbers<[1], [0], [0], [1], [0, 0, 1, 1], [], []>} : vector<8x32xf32>, vector<32x56xf32>, vector<8x56xf32> -> vector<8x56xf32>
    %26 = vector.extract_strided_slice %25 {offsets = [0, 0], sizes = [8, 32], strides = [1, 1]} : vector<8x56xf32> to vector<8x32xf32>
    %27 = vector.extract_strided_slice %25 {offsets = [0, 32], sizes = [8, 16], strides = [1, 1]} : vector<8x56xf32> to vector<8x16xf32>
    %28 = vector.extract_strided_slice %6 {offsets = [0, 0], sizes = [1, 16], strides = [1, 1]} : vector<2x16xf32> to vector<1x16xf32>
    %29 = arith.mulf %27, %27 : vector<8x16xf32>
    %cst_18 = arith.constant dense<0.000000e+00> : vector<8xf32>
    %30 = vector.multi_reduction <add>, %29, %cst_18 [1] : vector<8x16xf32> to vector<8xf32>
    %31 = vector.shape_cast %30 : vector<8xf32> to vector<8x1xf32>
    %cst_19 = arith.constant 1.600000e+01 : f32
    %32 = vector.broadcast %cst_19 : f32 to vector<8x1xf32>
    %33 = arith.divf %31, %32 : vector<8x1xf32>
    %cst_20 = arith.constant 9.99999997E-7 : f32
    %34 = vector.broadcast %cst_20 : f32 to vector<8x1xf32>
    %35 = arith.addf %33, %34 : vector<8x1xf32>
    %36 = math.rsqrt %35 : vector<8x1xf32>
    %37 = vector.broadcast %36 : vector<8x1xf32> to vector<8x16xf32>
    %38 = arith.mulf %27, %37 : vector<8x16xf32>
    %39 = vector.broadcast %28 : vector<1x16xf32> to vector<8x16xf32>
    %40 = arith.mulf %38, %39 : vector<8x16xf32>
    %41 = vector.extract_strided_slice %25 {offsets = [0, 48], sizes = [8, 8], strides = [1, 1]} : vector<8x56xf32> to vector<8x8xf32>
    %42 = vector.extract_strided_slice %41 {offsets = [0, 4], sizes = [8, 4], strides = [1, 1]} : vector<8x8xf32> to vector<8x4xf32>
    %cst_21 = arith.constant 0.000000e+00 : f32
    %43 = vector.broadcast %cst_21 : f32 to vector<8x4xf32>
    %44 = arith.subf %43, %42 : vector<8x4xf32>
    %45 = vector.extract_strided_slice %41 {offsets = [0, 0], sizes = [8, 4], strides = [1, 1]} : vector<8x8xf32> to vector<8x4xf32>
    %46 = tpu.concatenate %44, %45 in 1 : vector<8x4xf32>, vector<8x4xf32> -> vector<8x8xf32>
    %47 = arith.mulf %41, %2 : vector<8x8xf32>
    %48 = arith.mulf %46, %3 : vector<8x8xf32>
    %49 = arith.addf %47, %48 : vector<8x8xf32>
    %c0_22 = arith.constant 0 : index
    %c0_23 = arith.constant 0 : index
    %c0_24 = arith.constant 0 : index
    %50 = vector.load %arg8[%c0_22, %c0_23, %c0_24] : memref<2x16x32xf32, #tpu.memory_space<vmem>>, vector<1x16x32xf32>
    %51 = vector.shape_cast %50 : vector<1x16x32xf32> to vector<16x32xf32>
    %cst_25 = arith.constant dense<0.000000e+00> : vector<8x32xf32>
    %52 = tpu.matmul %40, %51, %cst_25 {dimension_numbers = #tpu.dot_dimension_numbers<[1], [0], [0], [1], [0, 0, 1, 1], [], []>} : vector<8x16xf32>, vector<16x32xf32>, vector<8x32xf32> -> vector<8x32xf32>
    %53 = vector.extract_strided_slice %26 {offsets = [0, 0], sizes = [8, 16], strides = [1, 1]} : vector<8x32xf32> to vector<8x16xf32>
    %54 = vector.extract_strided_slice %53 {offsets = [0, 8], sizes = [8, 8], strides = [1, 1]} : vector<8x16xf32> to vector<8x8xf32>
    %55 = vector.extract_strided_slice %54 {offsets = [0, 4], sizes = [8, 4], strides = [1, 1]} : vector<8x8xf32> to vector<8x4xf32>
    %cst_26 = arith.constant 0.000000e+00 : f32
    %56 = vector.broadcast %cst_26 : f32 to vector<8x4xf32>
    %57 = arith.subf %56, %55 : vector<8x4xf32>
    %58 = vector.extract_strided_slice %54 {offsets = [0, 0], sizes = [8, 4], strides = [1, 1]} : vector<8x8xf32> to vector<8x4xf32>
    %59 = tpu.concatenate %57, %58 in 1 : vector<8x4xf32>, vector<8x4xf32> -> vector<8x8xf32>
    %60 = arith.mulf %54, %2 : vector<8x8xf32>
    %61 = arith.mulf %59, %3 : vector<8x8xf32>
    %62 = arith.addf %60, %61 : vector<8x8xf32>
    %63 = vector.extract_strided_slice %53 {offsets = [0, 0], sizes = [8, 8], strides = [1, 1]} : vector<8x16xf32> to vector<8x8xf32>
    %64 = tpu.concatenate %63, %62 in 1 : vector<8x8xf32>, vector<8x8xf32> -> vector<8x16xf32>
    %65 = vector.extract_strided_slice %52 {offsets = [0, 0], sizes = [8, 8], strides = [1, 1]} : vector<8x32xf32> to vector<8x8xf32>
    %66 = tpu.concatenate %65, %49 in 1 : vector<8x8xf32>, vector<8x8xf32> -> vector<8x16xf32>
    %67 = vector.extract_strided_slice %52 {offsets = [0, 8], sizes = [8, 8], strides = [1, 1]} : vector<8x32xf32> to vector<8x8xf32>
    %68 = tpu.transpose %66, [1, 0] : vector<8x16xf32> -> vector<16x8xf32>
    %cst_27 = arith.constant dense<0.000000e+00> : vector<8x8xf32>
    %69 = tpu.matmul %64, %68, %cst_27 {dimension_numbers = #tpu.dot_dimension_numbers<[1], [0], [0], [1], [0, 0, 1, 1], [], []>} : vector<8x16xf32>, vector<16x8xf32>, vector<8x8xf32> -> vector<8x8xf32>
    %cst_28 = arith.constant 2.500000e-01 : f32
    %70 = vector.broadcast %cst_28 : f32 to vector<8x8xf32>
    %71 = arith.mulf %69, %70 : vector<8x8xf32>
    %cst_29 = arith.constant -1.000000e+30 : f32
    %72 = vector.broadcast %cst_29 : f32 to vector<8x8xf32>
    %73 = arith.select %9, %71, %72 : vector<8x8xi1>, vector<8x8xf32>
    %cst_30 = arith.constant dense<0xFF800000> : vector<8xf32>
    %74 = vector.multi_reduction <maximumf>, %73, %cst_30 [1] : vector<8x8xf32> to vector<8xf32>
    %75 = vector.shape_cast %74 : vector<8xf32> to vector<8x1xf32>
    %76 = vector.broadcast %75 : vector<8x1xf32> to vector<8x8xf32>
    %77 = arith.subf %73, %76 : vector<8x8xf32>
    %78 = math.exp %77 : vector<8x8xf32>
    %cst_31 = arith.constant dense<0.000000e+00> : vector<8xf32>
    %79 = vector.multi_reduction <add>, %78, %cst_31 [1] : vector<8x8xf32> to vector<8xf32>
    %80 = vector.shape_cast %79 : vector<8xf32> to vector<8x1xf32>
    %81 = tpu.reciprocal %80 {approx = true} : vector<8x1xf32> -> vector<8x1xf32>
    %82 = vector.broadcast %81 : vector<8x1xf32> to vector<8x8xf32>
    %83 = arith.mulf %78, %82 : vector<8x8xf32>
    %cst_32 = arith.constant dense<0.000000e+00> : vector<8x8xf32>
    %84 = tpu.matmul %83, %67, %cst_32 {dimension_numbers = #tpu.dot_dimension_numbers<[1], [0], [0], [1], [0, 0, 1, 1], [], []>} : vector<8x8xf32>, vector<8x8xf32>, vector<8x8xf32> -> vector<8x8xf32>
    %85 = vector.extract_strided_slice %26 {offsets = [0, 16], sizes = [8, 16], strides = [1, 1]} : vector<8x32xf32> to vector<8x16xf32>
    %86 = vector.extract_strided_slice %85 {offsets = [0, 8], sizes = [8, 8], strides = [1, 1]} : vector<8x16xf32> to vector<8x8xf32>
    %87 = vector.extract_strided_slice %86 {offsets = [0, 4], sizes = [8, 4], strides = [1, 1]} : vector<8x8xf32> to vector<8x4xf32>
    %cst_33 = arith.constant 0.000000e+00 : f32
    %88 = vector.broadcast %cst_33 : f32 to vector<8x4xf32>
    %89 = arith.subf %88, %87 : vector<8x4xf32>
    %90 = vector.extract_strided_slice %86 {offsets = [0, 0], sizes = [8, 4], strides = [1, 1]} : vector<8x8xf32> to vector<8x4xf32>
    %91 = tpu.concatenate %89, %90 in 1 : vector<8x4xf32>, vector<8x4xf32> -> vector<8x8xf32>
    %92 = arith.mulf %86, %2 : vector<8x8xf32>
    %93 = arith.mulf %91, %3 : vector<8x8xf32>
    %94 = arith.addf %92, %93 : vector<8x8xf32>
    %95 = vector.extract_strided_slice %85 {offsets = [0, 0], sizes = [8, 8], strides = [1, 1]} : vector<8x16xf32> to vector<8x8xf32>
    %96 = tpu.concatenate %95, %94 in 1 : vector<8x8xf32>, vector<8x8xf32> -> vector<8x16xf32>
    %97 = vector.extract_strided_slice %52 {offsets = [0, 16], sizes = [8, 8], strides = [1, 1]} : vector<8x32xf32> to vector<8x8xf32>
    %98 = tpu.concatenate %97, %49 in 1 : vector<8x8xf32>, vector<8x8xf32> -> vector<8x16xf32>
    %99 = vector.extract_strided_slice %52 {offsets = [0, 24], sizes = [8, 8], strides = [1, 1]} : vector<8x32xf32> to vector<8x8xf32>
    %100 = tpu.transpose %98, [1, 0] : vector<8x16xf32> -> vector<16x8xf32>
    %cst_34 = arith.constant dense<0.000000e+00> : vector<8x8xf32>
    %101 = tpu.matmul %96, %100, %cst_34 {dimension_numbers = #tpu.dot_dimension_numbers<[1], [0], [0], [1], [0, 0, 1, 1], [], []>} : vector<8x16xf32>, vector<16x8xf32>, vector<8x8xf32> -> vector<8x8xf32>
    %cst_35 = arith.constant 2.500000e-01 : f32
    %102 = vector.broadcast %cst_35 : f32 to vector<8x8xf32>
    %103 = arith.mulf %101, %102 : vector<8x8xf32>
    %cst_36 = arith.constant -1.000000e+30 : f32
    %104 = vector.broadcast %cst_36 : f32 to vector<8x8xf32>
    %105 = arith.select %9, %103, %104 : vector<8x8xi1>, vector<8x8xf32>
    %cst_37 = arith.constant dense<0xFF800000> : vector<8xf32>
    %106 = vector.multi_reduction <maximumf>, %105, %cst_37 [1] : vector<8x8xf32> to vector<8xf32>
    %107 = vector.shape_cast %106 : vector<8xf32> to vector<8x1xf32>
    %108 = vector.broadcast %107 : vector<8x1xf32> to vector<8x8xf32>
    %109 = arith.subf %105, %108 : vector<8x8xf32>
    %110 = math.exp %109 : vector<8x8xf32>
    %cst_38 = arith.constant dense<0.000000e+00> : vector<8xf32>
    %111 = vector.multi_reduction <add>, %110, %cst_38 [1] : vector<8x8xf32> to vector<8xf32>
    %112 = vector.shape_cast %111 : vector<8xf32> to vector<8x1xf32>
    %113 = tpu.reciprocal %112 {approx = true} : vector<8x1xf32> -> vector<8x1xf32>
    %114 = vector.broadcast %113 : vector<8x1xf32> to vector<8x8xf32>
    %115 = arith.mulf %110, %114 : vector<8x8xf32>
    %cst_39 = arith.constant dense<0.000000e+00> : vector<8x8xf32>
    %116 = tpu.matmul %115, %99, %cst_39 {dimension_numbers = #tpu.dot_dimension_numbers<[1], [0], [0], [1], [0, 0, 1, 1], [], []>} : vector<8x8xf32>, vector<8x8xf32>, vector<8x8xf32> -> vector<8x8xf32>
    %117 = tpu.concatenate %84, %116 in 1 : vector<8x8xf32>, vector<8x8xf32> -> vector<8x16xf32>
    %c0_40 = arith.constant 0 : index
    %c0_41 = arith.constant 0 : index
    %c0_42 = arith.constant 0 : index
    %118 = vector.load %arg9[%c0_40, %c0_41, %c0_42] : memref<2x16x32xf32, #tpu.memory_space<vmem>>, vector<1x16x32xf32>
    %119 = vector.shape_cast %118 : vector<1x16x32xf32> to vector<16x32xf32>
    %cst_43 = arith.constant dense<0.000000e+00> : vector<8x32xf32>
    %120 = tpu.matmul %117, %119, %cst_43 {dimension_numbers = #tpu.dot_dimension_numbers<[1], [0], [0], [1], [0, 0, 1, 1], [], []>} : vector<8x16xf32>, vector<16x32xf32>, vector<8x32xf32> -> vector<8x32xf32>
    %121 = arith.addf %1, %120 : vector<8x32xf32>
    %122 = vector.extract_strided_slice %5 {offsets = [0, 0], sizes = [1, 32], strides = [1, 1]} : vector<2x32xf32> to vector<1x32xf32>
    %123 = arith.mulf %121, %121 : vector<8x32xf32>
    %cst_44 = arith.constant dense<0.000000e+00> : vector<8xf32>
    %124 = vector.multi_reduction <add>, %123, %cst_44 [1] : vector<8x32xf32> to vector<8xf32>
    %125 = vector.shape_cast %124 : vector<8xf32> to vector<8x1xf32>
    %cst_45 = arith.constant 3.200000e+01 : f32
    %126 = vector.broadcast %cst_45 : f32 to vector<8x1xf32>
    %127 = arith.divf %125, %126 : vector<8x1xf32>
    %cst_46 = arith.constant 9.99999997E-7 : f32
    %128 = vector.broadcast %cst_46 : f32 to vector<8x1xf32>
    %129 = arith.addf %127, %128 : vector<8x1xf32>
    %130 = math.rsqrt %129 : vector<8x1xf32>
    %131 = vector.broadcast %130 : vector<8x1xf32> to vector<8x32xf32>
    %132 = arith.mulf %121, %131 : vector<8x32xf32>
    %133 = vector.broadcast %122 : vector<1x32xf32> to vector<8x32xf32>
    %134 = arith.mulf %132, %133 : vector<8x32xf32>
    %c0_47 = arith.constant 0 : index
    %c0_48 = arith.constant 0 : index
    %c0_49 = arith.constant 0 : index
    %135 = vector.load %arg10[%c0_47, %c0_48, %c0_49] : memref<2x32x96xf32, #tpu.memory_space<vmem>>, vector<1x32x96xf32>
    %136 = vector.shape_cast %135 : vector<1x32x96xf32> to vector<32x96xf32>
    %cst_50 = arith.constant dense<0.000000e+00> : vector<8x96xf32>
    %137 = tpu.matmul %134, %136, %cst_50 {dimension_numbers = #tpu.dot_dimension_numbers<[1], [0], [0], [1], [0, 0, 1, 1], [], []>} : vector<8x32xf32>, vector<32x96xf32>, vector<8x96xf32> -> vector<8x96xf32>
    %138 = vector.extract_strided_slice %137 {offsets = [0, 0], sizes = [8, 48], strides = [1, 1]} : vector<8x96xf32> to vector<8x48xf32>
    %139 = vector.extract_strided_slice %137 {offsets = [0, 48], sizes = [8, 48], strides = [1, 1]} : vector<8x96xf32> to vector<8x48xf32>
    %140 = arith.negf %138 : vector<8x48xf32>
    %141 = math.exp %140 : vector<8x48xf32>
    %cst_51 = arith.constant 1.000000e+00 : f32
    %142 = vector.broadcast %cst_51 : f32 to vector<8x48xf32>
    %143 = arith.addf %142, %141 : vector<8x48xf32>
    %144 = arith.divf %142, %143 : vector<8x48xf32>
    %145 = arith.mulf %138, %144 : vector<8x48xf32>
    %146 = arith.mulf %145, %139 : vector<8x48xf32>
    %c0_52 = arith.constant 0 : index
    %c0_53 = arith.constant 0 : index
    %c0_54 = arith.constant 0 : index
    %147 = vector.load %arg11[%c0_52, %c0_53, %c0_54] : memref<2x48x32xf32, #tpu.memory_space<vmem>>, vector<1x48x32xf32>
    %148 = vector.shape_cast %147 : vector<1x48x32xf32> to vector<48x32xf32>
    %cst_55 = arith.constant dense<0.000000e+00> : vector<8x32xf32>
    %149 = tpu.matmul %146, %148, %cst_55 {dimension_numbers = #tpu.dot_dimension_numbers<[1], [0], [0], [1], [0, 0, 1, 1], [], []>} : vector<8x48xf32>, vector<48x32xf32>, vector<8x32xf32> -> vector<8x32xf32>
    %150 = arith.addf %121, %149 : vector<8x32xf32>
    %151 = vector.extract_strided_slice %4 {offsets = [1, 0], sizes = [1, 32], strides = [1, 1]} : vector<2x32xf32> to vector<1x32xf32>
    %152 = arith.mulf %150, %150 : vector<8x32xf32>
    %cst_56 = arith.constant dense<0.000000e+00> : vector<8xf32>
    %153 = vector.multi_reduction <add>, %152, %cst_56 [1] : vector<8x32xf32> to vector<8xf32>
    %154 = vector.shape_cast %153 : vector<8xf32> to vector<8x1xf32>
    %cst_57 = arith.constant 3.200000e+01 : f32
    %155 = vector.broadcast %cst_57 : f32 to vector<8x1xf32>
    %156 = arith.divf %154, %155 : vector<8x1xf32>
    %cst_58 = arith.constant 9.99999997E-7 : f32
    %157 = vector.broadcast %cst_58 : f32 to vector<8x1xf32>
    %158 = arith.addf %156, %157 : vector<8x1xf32>
    %159 = math.rsqrt %158 : vector<8x1xf32>
    %160 = vector.broadcast %159 : vector<8x1xf32> to vector<8x32xf32>
    %161 = arith.mulf %150, %160 : vector<8x32xf32>
    %162 = vector.broadcast %151 : vector<1x32xf32> to vector<8x32xf32>
    %163 = arith.mulf %161, %162 : vector<8x32xf32>
    %c1 = arith.constant 1 : index
    %c0_59 = arith.constant 0 : index
    %c0_60 = arith.constant 0 : index
    %164 = vector.load %arg7[%c1, %c0_59, %c0_60] : memref<2x32x56xf32, #tpu.memory_space<vmem>>, vector<1x32x56xf32>
    %165 = vector.shape_cast %164 : vector<1x32x56xf32> to vector<32x56xf32>
    %cst_61 = arith.constant dense<0.000000e+00> : vector<8x56xf32>
    %166 = tpu.matmul %163, %165, %cst_61 {dimension_numbers = #tpu.dot_dimension_numbers<[1], [0], [0], [1], [0, 0, 1, 1], [], []>} : vector<8x32xf32>, vector<32x56xf32>, vector<8x56xf32> -> vector<8x56xf32>
    %167 = vector.extract_strided_slice %166 {offsets = [0, 0], sizes = [8, 32], strides = [1, 1]} : vector<8x56xf32> to vector<8x32xf32>
    %168 = vector.extract_strided_slice %166 {offsets = [0, 32], sizes = [8, 16], strides = [1, 1]} : vector<8x56xf32> to vector<8x16xf32>
    %169 = vector.extract_strided_slice %6 {offsets = [1, 0], sizes = [1, 16], strides = [1, 1]} : vector<2x16xf32> to vector<1x16xf32>
    %170 = arith.mulf %168, %168 : vector<8x16xf32>
    %cst_62 = arith.constant dense<0.000000e+00> : vector<8xf32>
    %171 = vector.multi_reduction <add>, %170, %cst_62 [1] : vector<8x16xf32> to vector<8xf32>
    %172 = vector.shape_cast %171 : vector<8xf32> to vector<8x1xf32>
    %cst_63 = arith.constant 1.600000e+01 : f32
    %173 = vector.broadcast %cst_63 : f32 to vector<8x1xf32>
    %174 = arith.divf %172, %173 : vector<8x1xf32>
    %cst_64 = arith.constant 9.99999997E-7 : f32
    %175 = vector.broadcast %cst_64 : f32 to vector<8x1xf32>
    %176 = arith.addf %174, %175 : vector<8x1xf32>
    %177 = math.rsqrt %176 : vector<8x1xf32>
    %178 = vector.broadcast %177 : vector<8x1xf32> to vector<8x16xf32>
    %179 = arith.mulf %168, %178 : vector<8x16xf32>
    %180 = vector.broadcast %169 : vector<1x16xf32> to vector<8x16xf32>
    %181 = arith.mulf %179, %180 : vector<8x16xf32>
    %182 = vector.extract_strided_slice %166 {offsets = [0, 48], sizes = [8, 8], strides = [1, 1]} : vector<8x56xf32> to vector<8x8xf32>
    %183 = vector.extract_strided_slice %182 {offsets = [0, 4], sizes = [8, 4], strides = [1, 1]} : vector<8x8xf32> to vector<8x4xf32>
    %cst_65 = arith.constant 0.000000e+00 : f32
    %184 = vector.broadcast %cst_65 : f32 to vector<8x4xf32>
    %185 = arith.subf %184, %183 : vector<8x4xf32>
    %186 = vector.extract_strided_slice %182 {offsets = [0, 0], sizes = [8, 4], strides = [1, 1]} : vector<8x8xf32> to vector<8x4xf32>
    %187 = tpu.concatenate %185, %186 in 1 : vector<8x4xf32>, vector<8x4xf32> -> vector<8x8xf32>
    %188 = arith.mulf %182, %2 : vector<8x8xf32>
    %189 = arith.mulf %187, %3 : vector<8x8xf32>
    %190 = arith.addf %188, %189 : vector<8x8xf32>
    %c1_66 = arith.constant 1 : index
    %c0_67 = arith.constant 0 : index
    %c0_68 = arith.constant 0 : index
    %191 = vector.load %arg8[%c1_66, %c0_67, %c0_68] : memref<2x16x32xf32, #tpu.memory_space<vmem>>, vector<1x16x32xf32>
    %192 = vector.shape_cast %191 : vector<1x16x32xf32> to vector<16x32xf32>
    %cst_69 = arith.constant dense<0.000000e+00> : vector<8x32xf32>
    %193 = tpu.matmul %181, %192, %cst_69 {dimension_numbers = #tpu.dot_dimension_numbers<[1], [0], [0], [1], [0, 0, 1, 1], [], []>} : vector<8x16xf32>, vector<16x32xf32>, vector<8x32xf32> -> vector<8x32xf32>
    %194 = vector.extract_strided_slice %167 {offsets = [0, 0], sizes = [8, 16], strides = [1, 1]} : vector<8x32xf32> to vector<8x16xf32>
    %195 = vector.extract_strided_slice %194 {offsets = [0, 8], sizes = [8, 8], strides = [1, 1]} : vector<8x16xf32> to vector<8x8xf32>
    %196 = vector.extract_strided_slice %195 {offsets = [0, 4], sizes = [8, 4], strides = [1, 1]} : vector<8x8xf32> to vector<8x4xf32>
    %cst_70 = arith.constant 0.000000e+00 : f32
    %197 = vector.broadcast %cst_70 : f32 to vector<8x4xf32>
    %198 = arith.subf %197, %196 : vector<8x4xf32>
    %199 = vector.extract_strided_slice %195 {offsets = [0, 0], sizes = [8, 4], strides = [1, 1]} : vector<8x8xf32> to vector<8x4xf32>
    %200 = tpu.concatenate %198, %199 in 1 : vector<8x4xf32>, vector<8x4xf32> -> vector<8x8xf32>
    %201 = arith.mulf %195, %2 : vector<8x8xf32>
    %202 = arith.mulf %200, %3 : vector<8x8xf32>
    %203 = arith.addf %201, %202 : vector<8x8xf32>
    %204 = vector.extract_strided_slice %194 {offsets = [0, 0], sizes = [8, 8], strides = [1, 1]} : vector<8x16xf32> to vector<8x8xf32>
    %205 = tpu.concatenate %204, %203 in 1 : vector<8x8xf32>, vector<8x8xf32> -> vector<8x16xf32>
    %206 = vector.extract_strided_slice %193 {offsets = [0, 0], sizes = [8, 8], strides = [1, 1]} : vector<8x32xf32> to vector<8x8xf32>
    %207 = tpu.concatenate %206, %190 in 1 : vector<8x8xf32>, vector<8x8xf32> -> vector<8x16xf32>
    %208 = vector.extract_strided_slice %193 {offsets = [0, 8], sizes = [8, 8], strides = [1, 1]} : vector<8x32xf32> to vector<8x8xf32>
    %209 = tpu.transpose %207, [1, 0] : vector<8x16xf32> -> vector<16x8xf32>
    %cst_71 = arith.constant dense<0.000000e+00> : vector<8x8xf32>
    %210 = tpu.matmul %205, %209, %cst_71 {dimension_numbers = #tpu.dot_dimension_numbers<[1], [0], [0], [1], [0, 0, 1, 1], [], []>} : vector<8x16xf32>, vector<16x8xf32>, vector<8x8xf32> -> vector<8x8xf32>
    %cst_72 = arith.constant 2.500000e-01 : f32
    %211 = vector.broadcast %cst_72 : f32 to vector<8x8xf32>
    %212 = arith.mulf %210, %211 : vector<8x8xf32>
    %cst_73 = arith.constant -1.000000e+30 : f32
    %213 = vector.broadcast %cst_73 : f32 to vector<8x8xf32>
    %214 = arith.select %9, %212, %213 : vector<8x8xi1>, vector<8x8xf32>
    %cst_74 = arith.constant dense<0xFF800000> : vector<8xf32>
    %215 = vector.multi_reduction <maximumf>, %214, %cst_74 [1] : vector<8x8xf32> to vector<8xf32>
    %216 = vector.shape_cast %215 : vector<8xf32> to vector<8x1xf32>
    %217 = vector.broadcast %216 : vector<8x1xf32> to vector<8x8xf32>
    %218 = arith.subf %214, %217 : vector<8x8xf32>
    %219 = math.exp %218 : vector<8x8xf32>
    %cst_75 = arith.constant dense<0.000000e+00> : vector<8xf32>
    %220 = vector.multi_reduction <add>, %219, %cst_75 [1] : vector<8x8xf32> to vector<8xf32>
    %221 = vector.shape_cast %220 : vector<8xf32> to vector<8x1xf32>
    %222 = tpu.reciprocal %221 {approx = true} : vector<8x1xf32> -> vector<8x1xf32>
    %223 = vector.broadcast %222 : vector<8x1xf32> to vector<8x8xf32>
    %224 = arith.mulf %219, %223 : vector<8x8xf32>
    %cst_76 = arith.constant dense<0.000000e+00> : vector<8x8xf32>
    %225 = tpu.matmul %224, %208, %cst_76 {dimension_numbers = #tpu.dot_dimension_numbers<[1], [0], [0], [1], [0, 0, 1, 1], [], []>} : vector<8x8xf32>, vector<8x8xf32>, vector<8x8xf32> -> vector<8x8xf32>
    %226 = vector.extract_strided_slice %167 {offsets = [0, 16], sizes = [8, 16], strides = [1, 1]} : vector<8x32xf32> to vector<8x16xf32>
    %227 = vector.extract_strided_slice %226 {offsets = [0, 8], sizes = [8, 8], strides = [1, 1]} : vector<8x16xf32> to vector<8x8xf32>
    %228 = vector.extract_strided_slice %227 {offsets = [0, 4], sizes = [8, 4], strides = [1, 1]} : vector<8x8xf32> to vector<8x4xf32>
    %cst_77 = arith.constant 0.000000e+00 : f32
    %229 = vector.broadcast %cst_77 : f32 to vector<8x4xf32>
    %230 = arith.subf %229, %228 : vector<8x4xf32>
    %231 = vector.extract_strided_slice %227 {offsets = [0, 0], sizes = [8, 4], strides = [1, 1]} : vector<8x8xf32> to vector<8x4xf32>
    %232 = tpu.concatenate %230, %231 in 1 : vector<8x4xf32>, vector<8x4xf32> -> vector<8x8xf32>
    %233 = arith.mulf %227, %2 : vector<8x8xf32>
    %234 = arith.mulf %232, %3 : vector<8x8xf32>
    %235 = arith.addf %233, %234 : vector<8x8xf32>
    %236 = vector.extract_strided_slice %226 {offsets = [0, 0], sizes = [8, 8], strides = [1, 1]} : vector<8x16xf32> to vector<8x8xf32>
    %237 = tpu.concatenate %236, %235 in 1 : vector<8x8xf32>, vector<8x8xf32> -> vector<8x16xf32>
    %238 = vector.extract_strided_slice %193 {offsets = [0, 16], sizes = [8, 8], strides = [1, 1]} : vector<8x32xf32> to vector<8x8xf32>
    %239 = tpu.concatenate %238, %190 in 1 : vector<8x8xf32>, vector<8x8xf32> -> vector<8x16xf32>
    %240 = vector.extract_strided_slice %193 {offsets = [0, 24], sizes = [8, 8], strides = [1, 1]} : vector<8x32xf32> to vector<8x8xf32>
    %241 = tpu.transpose %239, [1, 0] : vector<8x16xf32> -> vector<16x8xf32>
    %cst_78 = arith.constant dense<0.000000e+00> : vector<8x8xf32>
    %242 = tpu.matmul %237, %241, %cst_78 {dimension_numbers = #tpu.dot_dimension_numbers<[1], [0], [0], [1], [0, 0, 1, 1], [], []>} : vector<8x16xf32>, vector<16x8xf32>, vector<8x8xf32> -> vector<8x8xf32>
    %cst_79 = arith.constant 2.500000e-01 : f32
    %243 = vector.broadcast %cst_79 : f32 to vector<8x8xf32>
    %244 = arith.mulf %242, %243 : vector<8x8xf32>
    %cst_80 = arith.constant -1.000000e+30 : f32
    %245 = vector.broadcast %cst_80 : f32 to vector<8x8xf32>
    %246 = arith.select %9, %244, %245 : vector<8x8xi1>, vector<8x8xf32>
    %cst_81 = arith.constant dense<0xFF800000> : vector<8xf32>
    %247 = vector.multi_reduction <maximumf>, %246, %cst_81 [1] : vector<8x8xf32> to vector<8xf32>
    %248 = vector.shape_cast %247 : vector<8xf32> to vector<8x1xf32>
    %249 = vector.broadcast %248 : vector<8x1xf32> to vector<8x8xf32>
    %250 = arith.subf %246, %249 : vector<8x8xf32>
    %251 = math.exp %250 : vector<8x8xf32>
    %cst_82 = arith.constant dense<0.000000e+00> : vector<8xf32>
    %252 = vector.multi_reduction <add>, %251, %cst_82 [1] : vector<8x8xf32> to vector<8xf32>
    %253 = vector.shape_cast %252 : vector<8xf32> to vector<8x1xf32>
    %254 = tpu.reciprocal %253 {approx = true} : vector<8x1xf32> -> vector<8x1xf32>
    %255 = vector.broadcast %254 : vector<8x1xf32> to vector<8x8xf32>
    %256 = arith.mulf %251, %255 : vector<8x8xf32>
    %cst_83 = arith.constant dense<0.000000e+00> : vector<8x8xf32>
    %257 = tpu.matmul %256, %240, %cst_83 {dimension_numbers = #tpu.dot_dimension_numbers<[1], [0], [0], [1], [0, 0, 1, 1], [], []>} : vector<8x8xf32>, vector<8x8xf32>, vector<8x8xf32> -> vector<8x8xf32>
    %258 = tpu.concatenate %225, %257 in 1 : vector<8x8xf32>, vector<8x8xf32> -> vector<8x16xf32>
    %c1_84 = arith.constant 1 : index
    %c0_85 = arith.constant 0 : index
    %c0_86 = arith.constant 0 : index
    %259 = vector.load %arg9[%c1_84, %c0_85, %c0_86] : memref<2x16x32xf32, #tpu.memory_space<vmem>>, vector<1x16x32xf32>
    %260 = vector.shape_cast %259 : vector<1x16x32xf32> to vector<16x32xf32>
    %cst_87 = arith.constant dense<0.000000e+00> : vector<8x32xf32>
    %261 = tpu.matmul %258, %260, %cst_87 {dimension_numbers = #tpu.dot_dimension_numbers<[1], [0], [0], [1], [0, 0, 1, 1], [], []>} : vector<8x16xf32>, vector<16x32xf32>, vector<8x32xf32> -> vector<8x32xf32>
    %262 = arith.addf %150, %261 : vector<8x32xf32>
    %263 = vector.extract_strided_slice %5 {offsets = [1, 0], sizes = [1, 32], strides = [1, 1]} : vector<2x32xf32> to vector<1x32xf32>
    %264 = arith.mulf %262, %262 : vector<8x32xf32>
    %cst_88 = arith.constant dense<0.000000e+00> : vector<8xf32>
    %265 = vector.multi_reduction <add>, %264, %cst_88 [1] : vector<8x32xf32> to vector<8xf32>
    %266 = vector.shape_cast %265 : vector<8xf32> to vector<8x1xf32>
    %cst_89 = arith.constant 3.200000e+01 : f32
    %267 = vector.broadcast %cst_89 : f32 to vector<8x1xf32>
    %268 = arith.divf %266, %267 : vector<8x1xf32>
    %cst_90 = arith.constant 9.99999997E-7 : f32
    %269 = vector.broadcast %cst_90 : f32 to vector<8x1xf32>
    %270 = arith.addf %268, %269 : vector<8x1xf32>
    %271 = math.rsqrt %270 : vector<8x1xf32>
    %272 = vector.broadcast %271 : vector<8x1xf32> to vector<8x32xf32>
    %273 = arith.mulf %262, %272 : vector<8x32xf32>
    %274 = vector.broadcast %263 : vector<1x32xf32> to vector<8x32xf32>
    %275 = arith.mulf %273, %274 : vector<8x32xf32>
    %c1_91 = arith.constant 1 : index
    %c0_92 = arith.constant 0 : index
    %c0_93 = arith.constant 0 : index
    %276 = vector.load %arg10[%c1_91, %c0_92, %c0_93] : memref<2x32x96xf32, #tpu.memory_space<vmem>>, vector<1x32x96xf32>
    %277 = vector.shape_cast %276 : vector<1x32x96xf32> to vector<32x96xf32>
    %cst_94 = arith.constant dense<0.000000e+00> : vector<8x96xf32>
    %278 = tpu.matmul %275, %277, %cst_94 {dimension_numbers = #tpu.dot_dimension_numbers<[1], [0], [0], [1], [0, 0, 1, 1], [], []>} : vector<8x32xf32>, vector<32x96xf32>, vector<8x96xf32> -> vector<8x96xf32>
    %279 = vector.extract_strided_slice %278 {offsets = [0, 0], sizes = [8, 48], strides = [1, 1]} : vector<8x96xf32> to vector<8x48xf32>
    %280 = vector.extract_strided_slice %278 {offsets = [0, 48], sizes = [8, 48], strides = [1, 1]} : vector<8x96xf32> to vector<8x48xf32>
    %281 = arith.negf %279 : vector<8x48xf32>
    %282 = math.exp %281 : vector<8x48xf32>
    %cst_95 = arith.constant 1.000000e+00 : f32
    %283 = vector.broadcast %cst_95 : f32 to vector<8x48xf32>
    %284 = arith.addf %283, %282 : vector<8x48xf32>
    %285 = arith.divf %283, %284 : vector<8x48xf32>
    %286 = arith.mulf %279, %285 : vector<8x48xf32>
    %287 = arith.mulf %286, %280 : vector<8x48xf32>
    %c1_96 = arith.constant 1 : index
    %c0_97 = arith.constant 0 : index
    %c0_98 = arith.constant 0 : index
    %288 = vector.load %arg11[%c1_96, %c0_97, %c0_98] : memref<2x48x32xf32, #tpu.memory_space<vmem>>, vector<1x48x32xf32>
    %289 = vector.shape_cast %288 : vector<1x48x32xf32> to vector<48x32xf32>
    %cst_99 = arith.constant dense<0.000000e+00> : vector<8x32xf32>
    %290 = tpu.matmul %287, %289, %cst_99 {dimension_numbers = #tpu.dot_dimension_numbers<[1], [0], [0], [1], [0, 0, 1, 1], [], []>} : vector<8x48xf32>, vector<48x32xf32>, vector<8x32xf32> -> vector<8x32xf32>
    %291 = arith.addf %262, %290 : vector<8x32xf32>
    %cst_100 = arith.constant dense<0.000000e+00> : vector<32xf32>
    %292 = vector.multi_reduction <add>, %291, %cst_100 [0] : vector<8x32xf32> to vector<32xf32>
    %293 = vector.shape_cast %292 : vector<32xf32> to vector<1x32xf32>
    %cst_101 = arith.constant 8.000000e+00 : f32
    %294 = vector.broadcast %cst_101 : f32 to vector<1x32xf32>
    %295 = arith.divf %293, %294 : vector<1x32xf32>
    %c0_102 = arith.constant 0 : index
    %c0_103 = arith.constant 0 : index
    %c0_104 = arith.constant 0 : index
    %296 = vector.load %arg12[%c0_102, %c0_103, %c0_104] : memref<1x1x32xf32, #tpu.memory_space<vmem>>, vector<1x1x32xf32>
    %297 = vector.shape_cast %296 : vector<1x1x32xf32> to vector<1x32xf32>
    %298 = vector.shape_cast %295 : vector<1x32xf32> to vector<1x1x32xf32>
    tpu.vector_store %arg12[%c0_102, %c0_103, %c0_104], %298 {strides = array<i32>} : memref<1x1x32xf32, #tpu.memory_space<vmem>>, vector<1x1x32xf32>,
    return
  }
  func.func @transform_0(%arg0: i32) -> (i32, i32, i32) {
    %c0_i32 = arith.constant 0 : i32
    %c0_i32_0 = arith.constant 0 : i32
    %c0_i32_1 = arith.constant 0 : i32
    return %arg0, %c0_i32, %c0_i32_0 : i32, i32, i32
  }
  func.func @transform_1(%arg0: i32) -> (i32, i32) {
    %c0_i32 = arith.constant 0 : i32
    %c0_i32_0 = arith.constant 0 : i32
    %c0_i32_1 = arith.constant 0 : i32
    return %c0_i32, %c0_i32_0 : i32, i32
  }
  func.func @transform_2(%arg0: i32) -> (i32, i32) {
    %c0_i32 = arith.constant 0 : i32
    %c0_i32_0 = arith.constant 0 : i32
    %c0_i32_1 = arith.constant 0 : i32
    return %c0_i32, %c0_i32_0 : i32, i32
  }
  func.func @transform_3(%arg0: i32) -> (i32, i32) {
    %c0_i32 = arith.constant 0 : i32
    %c0_i32_0 = arith.constant 0 : i32
    %c0_i32_1 = arith.constant 0 : i32
    return %c0_i32, %c0_i32_0 : i32, i32
  }
  func.func @transform_4(%arg0: i32) -> (i32, i32) {
    %c0_i32 = arith.constant 0 : i32
    %c0_i32_0 = arith.constant 0 : i32
    %c0_i32_1 = arith.constant 0 : i32
    return %c0_i32, %c0_i32_0 : i32, i32
  }
  func.func @transform_5(%arg0: i32) -> (i32, i32) {
    %c0_i32 = arith.constant 0 : i32
    %c0_i32_0 = arith.constant 0 : i32
    %c0_i32_1 = arith.constant 0 : i32
    return %c0_i32, %c0_i32_0 : i32, i32
  }
  func.func @transform_6(%arg0: i32) -> (i32, i32, i32) {
    %c0_i32 = arith.constant 0 : i32
    %c0_i32_0 = arith.constant 0 : i32
    %c0_i32_1 = arith.constant 0 : i32
    %c0_i32_2 = arith.constant 0 : i32
    return %c0_i32, %c0_i32_0, %c0_i32_1 : i32, i32, i32
  }
  func.func @transform_7(%arg0: i32) -> (i32, i32, i32) {
    %c0_i32 = arith.constant 0 : i32
    %c0_i32_0 = arith.constant 0 : i32
    %c0_i32_1 = arith.constant 0 : i32
    %c0_i32_2 = arith.constant 0 : i32
    return %c0_i32, %c0_i32_0, %c0_i32_1 : i32, i32, i32
  }
  func.func @transform_8(%arg0: i32) -> (i32, i32, i32) {
    %c0_i32 = arith.constant 0 : i32
    %c0_i32_0 = arith.constant 0 : i32
    %c0_i32_1 = arith.constant 0 : i32
    %c0_i32_2 = arith.constant 0 : i32
    return %c0_i32, %c0_i32_0, %c0_i32_1 : i32, i32, i32
  }
  func.func @transform_9(%arg0: i32) -> (i32, i32, i32) {
    %c0_i32 = arith.constant 0 : i32
    %c0_i32_0 = arith.constant 0 : i32
    %c0_i32_1 = arith.constant 0 : i32
    %c0_i32_2 = arith.constant 0 : i32
    return %c0_i32, %c0_i32_0, %c0_i32_1 : i32, i32, i32
  }
  func.func @transform_10(%arg0: i32) -> (i32, i32, i32) {
    %c0_i32 = arith.constant 0 : i32
    %c0_i32_0 = arith.constant 0 : i32
    %c0_i32_1 = arith.constant 0 : i32
    %c0_i32_2 = arith.constant 0 : i32
    return %c0_i32, %c0_i32_0, %c0_i32_1 : i32, i32, i32
  }
  func.func @transform_11(%arg0: i32) -> (i32, i32, i32) {
    %c0_i32 = arith.constant 0 : i32
    %c0_i32_0 = arith.constant 0 : i32
    %c0_i32_1 = arith.constant 0 : i32
    return %arg0, %c0_i32, %c0_i32_0 : i32, i32, i32
  }
}

</mosaic_0001>

<llo_original>
// kernel: siglip_forward.3
$region0: #{siglip_forward.3}
  #allocation0 [shape = 'u32[]', space=smem, size = 0x4, offset = 0x4, fixed_abs, tag = 'smem constant byte address 0x4 - core index']
  #allocation1 [shape = 'u32[144,128]{1,0:T(1,128)}', space=vmem, size = 0x12000, scoped, tag = 'internal scratch']
  %s0 = inlined_call_operand.vmem [shape: f32[2,8,32], index: 0, kind: input, shape index: {}]
  %s1 = inlined_call_operand.vmem [shape: f32[8,8], index: 1, kind: input, shape index: {}]
  %s2 = inlined_call_operand.vmem [shape: f32[8,8], index: 2, kind: input, shape index: {}]
  %s3 = inlined_call_operand.vmem [shape: f32[2,32], index: 3, kind: input, shape index: {}]
  %s4 = inlined_call_operand.vmem [shape: f32[2,32], index: 4, kind: input, shape index: {}]
  %s5 = inlined_call_operand.vmem [shape: f32[2,16], index: 5, kind: input, shape index: {}]
  %s6 = inlined_call_operand.vmem [shape: f32[2,32,56], index: 6, kind: input, shape index: {}]
  %s7 = inlined_call_operand.vmem [shape: f32[2,16,32], index: 7, kind: input, shape index: {}]
  %s8 = inlined_call_operand.vmem [shape: f32[2,16,32], index: 8, kind: input, shape index: {}]
  %s9 = inlined_call_operand.vmem [shape: f32[2,32,96], index: 9, kind: input, shape index: {}]
  %s10 = inlined_call_operand.vmem [shape: f32[2,48,32], index: 10, kind: input, shape index: {}]
  %s11 = inlined_call_operand.hbm [shape: f32[2,1,32], index: 11, kind: output, shape index: {}]
  %s12 = sld [smem:[#allocation0]]
  $region77: #{siglip_forward.3} parent=0
    _
  %s14 = ssub.s32 1, %s12
  %s15 = scalar_select 0, %s14, %s12
  $region1: #{siglip_forward.3} parent=0
    #allocation2 [shape = 'u8[1024]{0}', space=vmem, size = 0x400, scoped, tag = 'output window, operand 0']
    #allocation3 [shape = 's32[2]{0}', space=sflag, size = 0x8, scoped, tag = 'scoped memory for siglip_forward.3']
    %16 = vsyncpa [#allocation3], 0
    %s17 = scalar_lea.sflag [#allocation3], 1
    %18 = vsyncpa %s17, 0
    loop: start=0, step=1, limit=4
    $region2: #{siglip_forward.3} parent=1 // loop_pre_header
      _
    $region3: #{siglip_forward.3} parent=1 // loop_header
      %s20 = sphi 0, %s24
      %p21 = scmp.ge.s32.totalorder %s20, 4
      %s30 = sphi 0, %s32
      %s33 = sphi 0, %s30
      %s34 = sphi 0, %s33
      %s50 = sphi 0, %s34
      %s54 = sphi 0, %s54
      %s56 = sphi 0, %s54
      %s57 = sphi 0, %s56
      %s71 = sphi 0, %s57
      %s75 = sphi 0, %s75
      %s77 = sphi 0, %s75
      %s78 = sphi 0, %s77
      %s92 = sphi 0, %s78
      %s96 = sphi 0, %s96
      %s98 = sphi 0, %s96
      %s99 = sphi 0, %s98
      %s113 = sphi 0, %s99
      %s117 = sphi 0, %s117
      %s119 = sphi 0, %s117
      %s120 = sphi 0, %s119
      %s134 = sphi 0, %s120
      %s138 = sphi 0, %s138
      %s140 = sphi 0, %s138
      %s141 = sphi 0, %s140
      %s155 = sphi 0, %s141
      %s159 = sphi 0, %s159
      %s161 = sphi 0, %s159
      %s162 = sphi 0, %s161
      %s176 = sphi 0, %s162
      %s180 = sphi 0, %s180
      %s182 = sphi 0, %s180
      %s183 = sphi 0, %s182
      %s197 = sphi 0, %s183
      %s201 = sphi 0, %s201
      %s203 = sphi 0, %s201
      %s204 = sphi 0, %s203
      %s218 = sphi 0, %s204
      %s222 = sphi 0, %s222
      %s224 = sphi 0, %s222
      %s225 = sphi 0, %s224
      %s239 = sphi 0, %s225
      %s243 = sphi 0, %s243
      %s245 = sphi 0, %s243
      %s246 = sphi 0, %s245
      %s260 = sphi 0, %s246
      %s266 = sphi 0, %s268
      %s269 = sphi 0, %s266
      %s270 = sphi 0, %s269
      %s286 = sphi 0, %s270
    $region4: #{siglip_forward.3} parent=1 // loop_header_branch
      %23 = sbr.rel (%p21) target = $region8
    $region5: #{siglip_forward.3} parent=1 // loop_body
      %s25 = ssub.s32 %s20, 1
      %s26 = ssub.s32 %s20, 2
      %s27 = sadd.s32 %s20, 1
      %s28 = ssub.s32 %s20, %s27
      %p29 = scmp.eq.s32.totalorder %s28, 0
      %s31 = sadd.s32 %s30, 1
      %s32 = scalar_select %p29, %s30, %s31
      %p35 = pneg %p29
      %p36 = scmp.eq.s32.totalorder %s20, 1
      %p37 = por %p35, %p36
      %p38 = scmp.ne.s32.totalorder %s30, %s33
      %p39 = scmp.eq.s32.totalorder %s20, 0
      %p40 = por %p38, %p39
      %p41 = scmp.ne.s32.totalorder %s30, %s33
      %p42 = scmp.eq.s32.totalorder %s25, 1
      %p43 = por %p41, %p42
      %p44 = scmp.ne.s32.totalorder %s33, %s34
      %p45 = scmp.eq.s32.totalorder %s25, 0
      %p46 = por %p44, %p45
      %p47 = scmp.ne.s32.totalorder %s33, %s34
      %p48 = scmp.eq.s32.totalorder %s26, 1
      %p49 = por %p47, %p48
      %p51 = scmp.ne.s32.totalorder %s34, %s50
      %p52 = scmp.eq.s32.totalorder %s26, 0
      %p53 = por %p51, %p52
      %s55 = sadd.s32 %s54, 1
      %p58 = scmp.eq.s32.totalorder %s20, 1
      %p59 = scmp.ne.s32.totalorder %s54, %s56
      %p60 = scmp.eq.s32.totalorder %s20, 0
      %p61 = por %p59, %p60
      %p62 = scmp.ne.s32.totalorder %s54, %s56
      %p63 = scmp.eq.s32.totalorder %s25, 1
      %p64 = por %p62, %p63
      %p65 = scmp.ne.s32.totalorder %s56, %s57
      %p66 = scmp.eq.s32.totalorder %s25, 0
      %p67 = por %p65, %p66
      %p68 = scmp.ne.s32.totalorder %s56, %s57
      %p69 = scmp.eq.s32.totalorder %s26, 1
      %p70 = por %p68, %p69
      %p72 = scmp.ne.s32.totalorder %s57, %s71
      %p73 = scmp.eq.s32.totalorder %s26, 0
      %p74 = por %p72, %p73
      %s76 = sadd.s32 %s75, 1
      %p79 = scmp.eq.s32.totalorder %s20, 1
      %p80 = scmp.ne.s32.totalorder %s75, %s77
      %p81 = scmp.eq.s32.totalorder %s20, 0
      %p82 = por %p80, %p81
      %p83 = scmp.ne.s32.totalorder %s75, %s77
      %p84 = scmp.eq.s32.totalorder %s25, 1
      %p85 = por %p83, %p84
      %p86 = scmp.ne.s32.totalorder %s77, %s78
      %p87 = scmp.eq.s32.totalorder %s25, 0
      %p88 = por %p86, %p87
      %p89 = scmp.ne.s32.totalorder %s77, %s78
      %p90 = scmp.eq.s32.totalorder %s26, 1
      %p91 = por %p89, %p90
      %p93 = scmp.ne.s32.totalorder %s78, %s92
      %p94 = scmp.eq.s32.totalorder %s26, 0
      %p95 = por %p93, %p94
      %s97 = sadd.s32 %s96, 1
      %p100 = scmp.eq.s32.totalorder %s20, 1
      %p101 = scmp.ne.s32.totalorder %s96, %s98
      %p102 = scmp.eq.s32.totalorder %s20, 0
      %p103 = por %p101, %p102
      %p104 = scmp.ne.s32.totalorder %s96, %s98
      %p105 = scmp.eq.s32.totalorder %s25, 1
      %p106 = por %p104, %p105
      %p107 = scmp.ne.s32.totalorder %s98, %s99
      %p108 = scmp.eq.s32.totalorder %s25, 0
      %p109 = por %p107, %p108
      %p110 = scmp.ne.s32.totalorder %s98, %s99
      %p111 = scmp.eq.s32.totalorder %s26, 1
      %p112 = por %p110, %p111
      %p114 = scmp.ne.s32.totalorder %s99, %s113
      %p115 = scmp.eq.s32.totalorder %s26, 0
      %p116 = por %p114, %p115
      %s118 = sadd.s32 %s117, 1
      %p121 = scmp.eq.s32.totalorder %s20, 1
      %p122 = scmp.ne.s32.totalorder %s117, %s119
      %p123 = scmp.eq.s32.totalorder %s20, 0
      %p124 = por %p122, %p123
      %p125 = scmp.ne.s32.totalorder %s117, %s119
      %p126 = scmp.eq.s32.totalorder %s25, 1
      %p127 = por %p125, %p126
      %p128 = scmp.ne.s32.totalorder %s119, %s120
      %p129 = scmp.eq.s32.totalorder %s25, 0
      %p130 = por %p128, %p129
      %p131 = scmp.ne.s32.totalorder %s119, %s120
      %p132 = scmp.eq.s32.totalorder %s26, 1
      %p133 = por %p131, %p132
      %p135 = scmp.ne.s32.totalorder %s120, %s134
      %p136 = scmp.eq.s32.totalorder %s26, 0
      %p137 = por %p135, %p136
      %s139 = sadd.s32 %s138, 1
      %p142 = scmp.eq.s32.totalorder %s20, 1
      %p143 = scmp.ne.s32.totalorder %s138, %s140
      %p144 = scmp.eq.s32.totalorder %s20, 0
      %p145 = por %p143, %p144
      %p146 = scmp.ne.s32.totalorder %s138, %s140
      %p147 = scmp.eq.s32.totalorder %s25, 1
      %p148 = por %p146, %p147
      %p149 = scmp.ne.s32.totalorder %s140, %s141
      %p150 = scmp.eq.s32.totalorder %s25, 0
      %p151 = por %p149, %p150
      %p152 = scmp.ne.s32.totalorder %s140, %s141
      %p153 = scmp.eq.s32.totalorder %s26, 1
      %p154 = por %p152, %p153
      %p156 = scmp.ne.s32.totalorder %s141, %s155
      %p157 = scmp.eq.s32.totalorder %s26, 0
      %p158 = por %p156, %p157
      %s160 = sadd.s32 %s159, 1
      %p163 = scmp.eq.s32.totalorder %s20, 1
      %p164 = scmp.ne.s32.totalorder %s159, %s161
      %p165 = scmp.eq.s32.totalorder %s20, 0
      %p166 = por %p164, %p165
      %p167 = scmp.ne.s32.totalorder %s159, %s161
      %p168 = scmp.eq.s32.totalorder %s25, 1
      %p169 = por %p167, %p168
      %p170 = scmp.ne.s32.totalorder %s161, %s162
      %p171 = scmp.eq.s32.totalorder %s25, 0
      %p172 = por %p170, %p171
      %p173 = scmp.ne.s32.totalorder %s161, %s162
      %p174 = scmp.eq.s32.totalorder %s26, 1
      %p175 = por %p173, %p174
      %p177 = scmp.ne.s32.totalorder %s162, %s176
      %p178 = scmp.eq.s32.totalorder %s26, 0
      %p179 = por %p177, %p178
      %s181 = sadd.s32 %s180, 1
      %p184 = scmp.eq.s32.totalorder %s20, 1
      %p185 = scmp.ne.s32.totalorder %s180, %s182
      %p186 = scmp.eq.s32.totalorder %s20, 0
      %p187 = por %p185, %p186
      %p188 = scmp.ne.s32.totalorder %s180, %s182
      %p189 = scmp.eq.s32.totalorder %s25, 1
      %p190 = por %p188, %p189
      %p191 = scmp.ne.s32.totalorder %s182, %s183
      %p192 = scmp.eq.s32.totalorder %s25, 0
      %p193 = por %p191, %p192
      %p194 = scmp.ne.s32.totalorder %s182, %s183
      %p195 = scmp.eq.s32.totalorder %s26, 1
      %p196 = por %p194, %p195
      %p198 = scmp.ne.s32.totalorder %s183, %s197
      %p199 = scmp.eq.s32.totalorder %s26, 0
      %p200 = por %p198, %p199
      %s202 = sadd.s32 %s201, 1
      %p205 = scmp.eq.s32.totalorder %s20, 1
      %p206 = scmp.ne.s32.totalorder %s201, %s203
      %p207 = scmp.eq.s32.totalorder %s20, 0
      %p208 = por %p206, %p207
      %p209 = scmp.ne.s32.totalorder %s201, %s203
      %p210 = scmp.eq.s32.totalorder %s25, 1
      %p211 = por %p209, %p210
      %p212 = scmp.ne.s32.totalorder %s203, %s204
      %p213 = scmp.eq.s32.totalorder %s25, 0
      %p214 = por %p212, %p213
      %p215 = scmp.ne.s32.totalorder %s203, %s204
      %p216 = scmp.eq.s32.totalorder %s26, 1
      %p217 = por %p215, %p216
      %p219 = scmp.ne.s32.totalorder %s204, %s218
      %p220 = scmp.eq.s32.totalorder %s26, 0
      %p221 = por %p219, %p220
      %s223 = sadd.s32 %s222, 1
      %p226 = scmp.eq.s32.totalorder %s20, 1
      %p227 = scmp.ne.s32.totalorder %s222, %s224
      %p228 = scmp.eq.s32.totalorder %s20, 0
      %p229 = por %p227, %p228
      %p230 = scmp.ne.s32.totalorder %s222, %s224
      %p231 = scmp.eq.s32.totalorder %s25, 1
      %p232 = por %p230, %p231
      %p233 = scmp.ne.s32.totalorder %s224, %s225
      %p234 = scmp.eq.s32.totalorder %s25, 0
      %p235 = por %p233, %p234
      %p236 = scmp.ne.s32.totalorder %s224, %s225
      %p237 = scmp.eq.s32.totalorder %s26, 1
      %p238 = por %p236, %p237
      %p240 = scmp.ne.s32.totalorder %s225, %s239
      %p241 = scmp.eq.s32.totalorder %s26, 0
      %p242 = por %p240, %p241
      %s244 = sadd.s32 %s243, 1
      %p247 = scmp.eq.s32.totalorder %s20, 1
      %p248 = scmp.ne.s32.totalorder %s243, %s245
      %p249 = scmp.eq.s32.totalorder %s20, 0
      %p250 = por %p248, %p249
      %p251 = scmp.ne.s32.totalorder %s243, %s245
      %p252 = scmp.eq.s32.totalorder %s25, 1
      %p253 = por %p251, %p252
      %p254 = scmp.ne.s32.totalorder %s245, %s246
      %p255 = scmp.eq.s32.totalorder %s25, 0
      %p256 = por %p254, %p255
      %p257 = scmp.ne.s32.totalorder %s245, %s246
      %p258 = scmp.eq.s32.totalorder %s26, 1
      %p259 = por %p257, %p258
      %p261 = scmp.ne.s32.totalorder %s246, %s260
      %p262 = scmp.eq.s32.totalorder %s26, 0
      %p263 = por %p261, %p262
      %s264 = ssub.s32 %s20, %s27
      %p265 = scmp.eq.s32.totalorder %s264, 0
      %s267 = sadd.s32 %s266, 1
      %s268 = scalar_select %p265, %s266, %s267
      %p271 = pneg %p265
      %p272 = scmp.eq.s32.totalorder %s20, 1
      %p273 = por %p271, %p272
      %p274 = scmp.ne.s32.totalorder %s266, %s269
      %p275 = scmp.eq.s32.totalorder %s20, 0
      %p276 = por %p274, %p275
      %p277 = scmp.ne.s32.totalorder %s266, %s269
      %p278 = scmp.eq.s32.totalorder %s25, 1
      %p279 = por %p277, %p278
      %p280 = scmp.ne.s32.totalorder %s269, %s270
      %p281 = scmp.eq.s32.totalorder %s25, 0
      %p282 = por %p280, %p281
      %p283 = scmp.ne.s32.totalorder %s269, %s270
      %p284 = scmp.eq.s32.totalorder %s26, 1
      %p285 = por %p283, %p284
      %p287 = scmp.ne.s32.totalorder %s270, %s286
      %p288 = scmp.eq.s32.totalorder %s26, 0
      %p289 = por %p287, %p288
      %p290 = scmp.le.s32.totalorder 1, %s20
      %p291 = scmp.lt.s32.totalorder %s20, 3
      %p292 = pnand %p290, %p291
      %p293 = pneg %p292
      // Predicated region
      $region9: #{siglip_forward.3} parent=5 // pred_check
        _
      $region10: #{siglip_forward.3} parent=5 // pred_check_branch
        %295 = sbr.rel (%p292) target = $region12
      $region11: #{siglip_forward.3} parent=5 // pred_region
        %s296 = ssub.s32 %s20, 1
        // Predicated region
        $region13: #{siglip_forward.3} parent=11 // pred_check
          %p297 = pneg %p67
        $region14: #{siglip_forward.3} parent=11 // pred_check_branch
          %299 = sbr.rel (%p297) target = $region16
        $region15: #{siglip_forward.3} parent=11 // pred_region
          _
        $region16: #{siglip_forward.3} parent=11 // pred_fallthru
          _
        // Predicated region
        $region17: #{siglip_forward.3} parent=11 // pred_check
          %p300 = pneg %p88
        $region18: #{siglip_forward.3} parent=11 // pred_check_branch
          %302 = sbr.rel (%p300) target = $region20
        $region19: #{siglip_forward.3} parent=11 // pred_region
          _
        $region20: #{siglip_forward.3} parent=11 // pred_fallthru
          _
        // Predicated region
        $region21: #{siglip_forward.3} parent=11 // pred_check
          %p303 = pneg %p109
        $region22: #{siglip_forward.3} parent=11 // pred_check_branch
          %305 = sbr.rel (%p303) target = $region24
        $region23: #{siglip_forward.3} parent=11 // pred_region
          _
        $region24: #{siglip_forward.3} parent=11 // pred_fallthru
          _
        // Predicated region
        $region25: #{siglip_forward.3} parent=11 // pred_check
          %p306 = pneg %p130
        $region26: #{siglip_forward.3} parent=11 // pred_check_branch
          %308 = sbr.rel (%p306) target = $region28
        $region27: #{siglip_forward.3} parent=11 // pred_region
          _
        $region28: #{siglip_forward.3} parent=11 // pred_fallthru
          _
        // Predicated region
        $region29: #{siglip_forward.3} parent=11 // pred_check
          %p309 = pneg %p151
        $region30: #{siglip_forward.3} parent=11 // pred_check_branch
          %311 = sbr.rel (%p309) target = $region32
        $region31: #{siglip_forward.3} parent=11 // pred_region
          _
        $region32: #{siglip_forward.3} parent=11 // pred_fallthru
          _
        // Predicated region
        $region33: #{siglip_forward.3} parent=11 // pred_check
          %p312 = pneg %p172
        $region34: #{siglip_forward.3} parent=11 // pred_check_branch
          %314 = sbr.rel (%p312) target = $region36
        $region35: #{siglip_forward.3} parent=11 // pred_region
          _
        $region36: #{siglip_forward.3} parent=11 // pred_fallthru
          _
        // Predicated region
        $region37: #{siglip_forward.3} parent=11 // pred_check
          %p315 = pneg %p193
        $region38: #{siglip_forward.3} parent=11 // pred_check_branch
          %317 = sbr.rel (%p315) target = $region40
        $region39: #{siglip_forward.3} parent=11 // pred_region
          _
        $region40: #{siglip_forward.3} parent=11 // pred_fallthru
          _
        // Predicated region
        $region41: #{siglip_forward.3} parent=11 // pred_check
          %p318 = pneg %p214
        $region42: #{siglip_forward.3} parent=11 // pred_check_branch
          %320 = sbr.rel (%p318) target = $region44
        $region43: #{siglip_forward.3} parent=11 // pred_region
          _
        $region44: #{siglip_forward.3} parent=11 // pred_fallthru
          _
        // Predicated region
        $region45: #{siglip_forward.3} parent=11 // pred_check
          %p321 = pneg %p235
        $region46: #{siglip_forward.3} parent=11 // pred_check_branch
          %323 = sbr.rel (%p321) target = $region48
        $region47: #{siglip_forward.3} parent=11 // pred_region
          _
        $region48: #{siglip_forward.3} parent=11 // pred_fallthru
          _
        // Predicated region
        $region49: #{siglip_forward.3} parent=11 // pred_check
          %p324 = pneg %p256
        $region50: #{siglip_forward.3} parent=11 // pred_check_branch
          %326 = sbr.rel (%p324) target = $region52
        $region51: #{siglip_forward.3} parent=11 // pred_region
          _
        $region52: #{siglip_forward.3} parent=11 // pred_fallthru
          _
      $region12: #{siglip_forward.3} parent=5 // pred_fallthru
        _
      %p327 = scmp.lt.s32.totalorder %s20, 2
      // Predicated region
      $region53: #{siglip_forward.3} parent=5 // pred_check
        %p328 = pneg %p327
      $region54: #{siglip_forward.3} parent=5 // pred_check_branch
        %330 = sbr.rel (%p328) target = $region56
      $region55: #{siglip_forward.3} parent=5 // pred_region
        // Predicated region
        $region57: #{siglip_forward.3} parent=55 // pred_check
          %p331 = pneg %p40
        $region58: #{siglip_forward.3} parent=55 // pred_check_branch
          %333 = sbr.rel (%p331) target = $region60
        $region59: #{siglip_forward.3} parent=55 // pred_region
          %p334 = scmp.lt.s32.totalorder %s20, 1
          %s335 = scalar_select %p334, %s20, 1
          %s336 = smul.addr %s335, 8
          %s337 = scalar_lea.vmem %s0, %s336
        $region60: #{siglip_forward.3} parent=55 // pred_fallthru
          _
      $region56: #{siglip_forward.3} parent=5 // pred_fallthru
        _
      %p338 = scmp.le.s32.totalorder 1, %s20
      %p339 = scmp.lt.s32.totalorder %s20, 3
      %p340 = pnand %p338, %p339
      %p341 = pneg %p340
      // Predicated region
      $region61: #{siglip_forward.3} parent=5 // pred_check
        _
      $region62: #{siglip_forward.3} parent=5 // pred_check_branch
        %343 = sbr.rel (%p340) target = $region64
      $region63: #{siglip_forward.3} parent=5 // pred_region
        %s344 = ssub.s32 %s20, 1
        %p345 = scmp.lt.s32.totalorder %s25, 1
        %s346 = scalar_select %p345, %s25, 1
        %s347 = smul.addr %s346, 8
        %s348 = scalar_lea.vmem %s0, %s347
        %p349 = pneg %p46
        %p350 = pneg %p43
        %p351 = pneg %p67
        %p352 = pneg %p64
        %p353 = pneg %p88
        %p354 = pneg %p85
        %p355 = pneg %p109
        %p356 = pneg %p106
        %p357 = pneg %p130
        %p358 = pneg %p127
        %p359 = pneg %p151
        %p360 = pneg %p148
        %p361 = pneg %p172
        %p362 = pneg %p169
        %p363 = pneg %p193
        %p364 = pneg %p190
        %p365 = pneg %p214
        %p366 = pneg %p211
        %p367 = pneg %p235
        %p368 = pneg %p232
        %p369 = pneg %p256
        %p370 = pneg %p253
        %p371 = pneg %p282
        %p372 = pneg %p279
        %s373 = sand.u32 %s269, 1
        %s374 = scalar_lea.sflag [#allocation3], %s373
        %s375 = sand.u32 %s269, 1
        %s376 = scalar_lea.vmem [#allocation2], %s375
        %p377 = scmp.lt.s32.totalorder %s25, 1
        %s378 = scalar_select %p377, %s25, 1
        %s379 = smul.addr %s378, 8
        %s380 = scalar_lea.vmem %s0, %s379
        %v381 = vld [vmem:[%s380] sm:$0xff]
        %v382 = vld [vmem:[%s1] sm:$0xff]
        %v383 = vld [vmem:[%s2] sm:$0xff]
        %v384 = vld [vmem:[%s3] sm:$0x3]
        %v385 = vld [vmem:[%s4] sm:$0x3]
        %v386 = vld [vmem:[%s5] sm:$0x3]
        %v387 = vlaneseq
        %v388 = vshrl.u32 %v387, 7
        %v389 = vlaneseq
        %v390 = vand.u32 %v389, 127
        %vm391 = vcmp.le.s32.totalorder %v390, %v388
        %v392 = vmul.f32 %v381, %v381
        %vm393 = vcmask 261120
        %v394 = vsel %vm393, %v392, 0.0
        %395 = vadd.xlane.f32.xlu0 %v394
        %v396 = vpop.xlane.xlu0 %395
        %v397 = vrcp.pop 32.0
        %v398 = vmul.f32 %v396, %v397
        %v399 = vadd.f32 %v398, 1e-06
        %v400 = vrsqrt.pop %v399
        %v401 = vmul.f32 %v381, %v400
        %v402 = vlaneseq
        %v403 = vshrl.u32 %v402, 7
        %v404 = vsub.s32 0, %v403
        %v405 = vrot.slane %v384, %v404
        %v406 = vmul.f32 %v401, %v405
        %v407 = vld [vmem:[%s6] sm:$0xff]
        %v408 = vld [vmem:[%s6 + $0x8] sm:$0xff]
        %v409 = vld [vmem:[%s6 + $0x10] sm:$0xff]
        %v410 = vld [vmem:[%s6 + $0x18] sm:$0xff]
        %v412 = vsel %vm393, %v406, 0
        %414 = vmatprep.subr.mxu0 0.0
        %415 = vmatpush1.msra.mxu0 0.0
        %416 = vmatprep.subr.mxu0 0.0
        %417 = vmatpush1.msra.mxu0 0.0
        %418 = vmatprep.subr.mxu0 0.0
        %419 = vmatpush1.msra.mxu0 0.0
        %420 = vmatprep.subr.mxu0 0.0
        %421 = vmatpush1.msra.mxu0 0.0
        %422 = vmatprep.subr.mxu0 0.0
        %423 = vmatpush1.msra.mxu0 0.0
        %424 = vmatprep.subr.mxu0 0.0
        %425 = vmatpush1.msra.mxu0 0.0
        %426 = vmatprep.subr.mxu0 0.0
        %427 = vmatpush1.msra.mxu0 0.0
        %428 = vmatprep.subr.mxu0 0.0
        %429 = vmatpush1.msra.mxu0 0.0
        %430 = vmatprep.subr.mxu0 0.0
        %431 = vmatpush1.msra.mxu0 0.0
        %432 = vmatprep.subr.mxu0 0.0
        %433 = vmatpush1.msra.mxu0 0.0
        %434 = vmatprep.subr.mxu0 0.0
        %435 = vmatpush1.msra.mxu0 0.0
        %436 = vmatprep.subr.mxu0 0.0
        %437 = vmatpush1.msra.mxu0 0.0
        %438 = vmatprep.subr.mxu0 0.0
        %439 = vmatpush1.msra.mxu0 %v410
        %440 = vmatprep.subr.mxu0 0.0
        %441 = vmatpush1.msra.mxu0 %v409
        %442 = vmatprep.subr.mxu0 0.0
        %443 = vmatpush1.msra.mxu0 %v408
        %444 = vmatprep.subr.mxu0 0.0
        %445 = vmatpush1.msra.mxu0 %v407
        %446 = vmatprep.subr.mxu0 0.0
        %447 = vmatpush2.msra.mxu0 0.0
        %448 = vmatprep.subr.mxu0 0.0
        %449 = vmatpush2.msra.mxu0 0.0
        %450 = vmatprep.subr.mxu0 0.0
        %451 = vmatpush2.msra.mxu0 0.0
        %452 = vmatprep.subr.mxu0 0.0
        %453 = vmatpush2.msra.mxu0 0.0
        %454 = vmatprep.subr.mxu0 0.0
        %455 = vmatpush2.msra.mxu0 0.0
        %456 = vmatprep.subr.mxu0 0.0
        %457 = vmatpush2.msra.mxu0 0.0
        %458 = vmatprep.subr.mxu0 0.0
        %459 = vmatpush2.msra.mxu0 0.0
        %460 = vmatprep.subr.mxu0 0.0
        %461 = vmatpush2.msra.mxu0 0.0
        %462 = vmatprep.subr.mxu0 0.0
        %463 = vmatpush2.msra.mxu0 0.0
        %464 = vmatprep.subr.mxu0 0.0
        %465 = vmatpush2.msra.mxu0 0.0
        %466 = vmatprep.subr.mxu0 0.0
        %467 = vmatpush2.msra.mxu0 0.0
        %468 = vmatprep.subr.mxu0 0.0
        %469 = vmatpush2.msra.mxu0 0.0
        %470 = vmatprep.subr.mxu0 0.0
        %471 = vmatpush2.msra.mxu0 0.0
        %472 = vmatprep.subr.mxu0 0.0
        %473 = vmatpush2.msra.mxu0 0.0
        %474 = vmatprep.subr.mxu0 0.0
        %475 = vmatpush2.msra.mxu0 0.0
        %476 = vmatprep.subr.mxu0 0.0
        %477 = vmatpush2.msra.mxu0 0.0
        %478 = vmatprep.mubr.f32.mxu0 0.0
        %479 = vmatmul.mubr.f32.gmra.mxu0 %v412
        %v480 = vpop.f32.mrf.mxu0
        %v481 = vadd.f32 0.0, %v480
        %v482 = vpop.f32.mrf.mxu0
        %483 = vdwg.mxu0
        %v484 = vmul.f32 %v481, %v481
        %486 = vrot.lane.b32.xlu0 %v484, 96
        %v487 = vpop.permute.xlu0 %486
        %vm489 = vcmask 130048
        %v490 = vsel %vm489, %v487, 0.0
        %491 = vadd.xlane.f32.xlu0 %v490
        %v492 = vpop.xlane.xlu0 %491
        %v493 = vrcp.pop 16.0
        %v494 = vmul.f32 %v492, %v493
        %v495 = vadd.f32 %v494, 1e-06
        %v496 = vrsqrt.pop %v495
        %v497 = vmul.f32 %v481, %v496
        %v498 = vlaneseq
        %v499 = vshrl.u32 %v498, 7
        %v500 = vsub.s32 0, %v499
        %v501 = vrot.slane %v386, %v500
        %503 = vrot.lane.b32.xlu0 %v501, 32
        %v504 = vpop.permute.xlu0 %503
        %v506 = vmul.f32 %v497, %v504
        %v507 = vsub.f32 0.0, %v481
        %509 = vrot.lane.b32.xlu0 %v507, 76
        %v510 = vpop.permute.xlu0 %509
        %513 = vrot.lane.b32.xlu0 %v481, 84
        %v514 = vpop.permute.xlu0 %513
        %vm516 = vcmask 31744
        %v517 = vsel %vm516, %v510, %v514
        %519 = vrot.lane.b32.xlu0 %v382, 48
        %v520 = vpop.permute.xlu0 %519
        %v522 = vmul.f32 %v481, %v520
        %v523 = vmul.f32 %v517, %v383
        %525 = vrot.lane.b32.xlu0 %v523, 48
        %v526 = vpop.permute.xlu0 %525
        %v528 = vadd.f32 %v522, %v526
        %v529 = vld [vmem:[%s7] sm:$0xff]
        %v530 = vld [vmem:[%s7 + $0x8] sm:$0xff]
        %532 = vrot.lane.b32.xlu0 %v506, 96
        %v533 = vpop.permute.xlu0 %532
        %v534 = vsel %vm489, %v533, 0
        %536 = vmatprep.subr.mxu0 0.0
        %537 = vmatpush1.msra.mxu0 0.0
        %538 = vmatprep.subr.mxu0 0.0
        %539 = vmatpush1.msra.mxu0 0.0
        %540 = vmatprep.subr.mxu0 0.0
        %541 = vmatpush1.msra.mxu0 0.0
        %542 = vmatprep.subr.mxu0 0.0
        %543 = vmatpush1.msra.mxu0 0.0
        %544 = vmatprep.subr.mxu0 0.0
        %545 = vmatpush1.msra.mxu0 0.0
        %546 = vmatprep.subr.mxu0 0.0
        %547 = vmatpush1.msra.mxu0 0.0
        %548 = vmatprep.subr.mxu0 0.0
        %549 = vmatpush1.msra.mxu0 0.0
        %550 = vmatprep.subr.mxu0 0.0
        %551 = vmatpush1.msra.mxu0 0.0
        %552 = vmatprep.subr.mxu0 0.0
        %553 = vmatpush1.msra.mxu0 0.0
        %554 = vmatprep.subr.mxu0 0.0
        %555 = vmatpush1.msra.mxu0 0.0
        %556 = vmatprep.subr.mxu0 0.0
        %557 = vmatpush1.msra.mxu0 0.0
        %558 = vmatprep.subr.mxu0 0.0
        %559 = vmatpush1.msra.mxu0 0.0
        %560 = vmatprep.subr.mxu0 0.0
        %561 = vmatpush1.msra.mxu0 0.0
        %562 = vmatprep.subr.mxu0 0.0
        %563 = vmatpush1.msra.mxu0 0.0
        %564 = vmatprep.subr.mxu0 0.0
        %565 = vmatpush1.msra.mxu0 %v530
        %566 = vmatprep.subr.mxu0 0.0
        %567 = vmatpush1.msra.mxu0 %v529
        %568 = vmatprep.subr.mxu0 0.0
        %569 = vmatpush2.msra.mxu0 0.0
        %570 = vmatprep.subr.mxu0 0.0
        %571 = vmatpush2.msra.mxu0 0.0
        %572 = vmatprep.subr.mxu0 0.0
        %573 = vmatpush2.msra.mxu0 0.0
        %574 = vmatprep.subr.mxu0 0.0
        %575 = vmatpush2.msra.mxu0 0.0
        %576 = vmatprep.subr.mxu0 0.0
        %577 = vmatpush2.msra.mxu0 0.0
        %578 = vmatprep.subr.mxu0 0.0
        %579 = vmatpush2.msra.mxu0 0.0
        %580 = vmatprep.subr.mxu0 0.0
        %581 = vmatpush2.msra.mxu0 0.0
        %582 = vmatprep.subr.mxu0 0.0
        %583 = vmatpush2.msra.mxu0 0.0
        %584 = vmatprep.subr.mxu0 0.0
        %585 = vmatpush2.msra.mxu0 0.0
        %586 = vmatprep.subr.mxu0 0.0
        %587 = vmatpush2.msra.mxu0 0.0
        %588 = vmatprep.subr.mxu0 0.0
        %589 = vmatpush2.msra.mxu0 0.0
        %590 = vmatprep.subr.mxu0 0.0
        %591 = vmatpush2.msra.mxu0 0.0
        %592 = vmatprep.subr.mxu0 0.0
        %593 = vmatpush2.msra.mxu0 0.0
        %594 = vmatprep.subr.mxu0 0.0
        %595 = vmatpush2.msra.mxu0 0.0
        %596 = vmatprep.subr.mxu0 0.0
        %597 = vmatpush2.msra.mxu0 0.0
        %598 = vmatprep.subr.mxu0 0.0
        %599 = vmatpush2.msra.mxu0 0.0
        %600 = vmatprep.mubr.f32.mxu0 0.0
        %601 = vmatmul.mubr.f32.gmra.mxu0 %v534
        %v602 = vpop.f32.mrf.mxu0
        %v603 = vadd.f32 0.0, %v602
        %v604 = vpop.f32.mrf.mxu0
        %605 = vdwg.mxu0
        %606 = vrot.lane.b32.xlu0 %v507, 116
        %v607 = vpop.permute.xlu0 %606
        %609 = vrot.lane.b32.xlu0 %v481, 124
        %v610 = vpop.permute.xlu0 %609
        %v612 = vsel %vm516, %v607, %v610
        %613 = vrot.lane.b32.xlu0 %v382, 8
        %v614 = vpop.permute.xlu0 %613
        %v616 = vmul.f32 %v481, %v614
        %v617 = vmul.f32 %v612, %v383
        %619 = vrot.lane.b32.xlu0 %v617, 8
        %v620 = vpop.permute.xlu0 %619
        %v622 = vadd.f32 %v616, %v620
        %vm623 = vcmask 64512
        %v624 = vsel %vm623, %v481, %v622
        %626 = vrot.lane.b32.xlu0 %v528, 88
        %v627 = vpop.permute.xlu0 %626
        %v629 = vsel %vm623, %v603, %v627
        %v631 = vsel %vm489, %v624, 0
        %v634 = vsel %vm489, %v629, 0
        %636 = vmatprep.subr.mxu0 0.0
        %637 = vmatpush1.xpose.msra.mxu0 0.0
        %638 = vmatprep.subr.mxu0 0.0
        %639 = vmatpush1.xpose.msra.mxu0 0.0
        %640 = vmatprep.subr.mxu0 0.0
        %641 = vmatpush1.xpose.msra.mxu0 0.0
        %642 = vmatprep.subr.mxu0 0.0
        %643 = vmatpush1.xpose.msra.mxu0 0.0
        %644 = vmatprep.subr.mxu0 0.0
        %645 = vmatpush1.xpose.msra.mxu0 0.0
        %646 = vmatprep.subr.mxu0 0.0
        %647 = vmatpush1.xpose.msra.mxu0 0.0
        %648 = vmatprep.subr.mxu0 0.0
        %649 = vmatpush1.xpose.msra.mxu0 0.0
        %650 = vmatprep.subr.mxu0 0.0
        %651 = vmatpush1.xpose.msra.mxu0 0.0
        %652 = vmatprep.subr.mxu0 0.0
        %653 = vmatpush1.xpose.msra.mxu0 0.0
        %654 = vmatprep.subr.mxu0 0.0
        %655 = vmatpush1.xpose.msra.mxu0 0.0
        %656 = vmatprep.subr.mxu0 0.0
        %657 = vmatpush1.xpose.msra.mxu0 0.0
        %658 = vmatprep.subr.mxu0 0.0
        %659 = vmatpush1.xpose.msra.mxu0 0.0
        %660 = vmatprep.subr.mxu0 0.0
        %661 = vmatpush1.xpose.msra.mxu0 0.0
        %662 = vmatprep.subr.mxu0 0.0
        %663 = vmatpush1.xpose.msra.mxu0 0.0
        %664 = vmatprep.subr.mxu0 0.0
        %665 = vmatpush1.xpose.msra.mxu0 0.0
        %666 = vmatprep.subr.mxu0 0.0
        %667 = vmatpush1.xpose.msra.mxu0 %v634
        %668 = vmatprep.subr.mxu0 0.0
        %669 = vmatpush2.xpose.msra.mxu0 0.0
        %670 = vmatprep.subr.mxu0 0.0
        %671 = vmatpush2.xpose.msra.mxu0 0.0
        %672 = vmatprep.subr.mxu0 0.0
        %673 = vmatpush2.xpose.msra.mxu0 0.0
        %674 = vmatprep.subr.mxu0 0.0
        %675 = vmatpush2.xpose.msra.mxu0 0.0
        %676 = vmatprep.subr.mxu0 0.0
        %677 = vmatpush2.xpose.msra.mxu0 0.0
        %678 = vmatprep.subr.mxu0 0.0
        %679 = vmatpush2.xpose.msra.mxu0 0.0
        %680 = vmatprep.subr.mxu0 0.0
        %681 = vmatpush2.xpose.msra.mxu0 0.0
        %682 = vmatprep.subr.mxu0 0.0
        %683 = vmatpush2.xpose.msra.mxu0 0.0
        %684 = vmatprep.subr.mxu0 0.0
        %685 = vmatpush2.xpose.msra.mxu0 0.0
        %686 = vmatprep.subr.mxu0 0.0
        %687 = vmatpush2.xpose.msra.mxu0 0.0
        %688 = vmatprep.subr.mxu0 0.0
        %689 = vmatpush2.xpose.msra.mxu0 0.0
        %690 = vmatprep.subr.mxu0 0.0
        %691 = vmatpush2.xpose.msra.mxu0 0.0
        %692 = vmatprep.subr.mxu0 0.0
        %693 = vmatpush2.xpose.msra.mxu0 0.0
        %694 = vmatprep.subr.mxu0 0.0
        %695 = vmatpush2.xpose.msra.mxu0 0.0
        %696 = vmatprep.subr.mxu0 0.0
        %697 = vmatpush2.xpose.msra.mxu0 0.0
        %698 = vmatprep.subr.mxu0 0.0
        %699 = vmatpush2.xpose.msra.mxu0 0.0
        %700 = vmatprep.mubr.f32.mxu0 0.0
        %701 = vmatmul.mubr.f32.gmra.mxu0 %v631
        %v702 = vpop.f32.mrf.mxu0
        %v703 = vadd.f32 0.0, %v702
        %v704 = vpop.f32.mrf.mxu0
        %705 = vdwg.mxu0
        %v706 = vmul.f32 %v703, 0.25
        %v707 = vsel %vm391, %v706, -1e+30
        %v708 = vsel %vm623, %v707, -inf
        %709 = vmax.xlane.f32.xlu0 %v708
        %v710 = vpop.xlane.xlu0 %709
        %v711 = vsub.f32 %v707, %v710
        %v712 = vmul.f32 %v711, 1.442695
        %v713 = vpow.pop %v712
        %v714 = vsel %vm623, %v713, 0.0
        %715 = vadd.xlane.f32.xlu0 %v714
        %v716 = vpop.xlane.xlu0 %715
        %v717 = vrcp.pop %v716
        %v718 = vmul.f32 %v713, %v717
        %720 = vrot.lane.b32.xlu0 %v603, 120
        %v721 = vpop.permute.xlu0 %720
        %v724 = vsel %vm623, %v718, 0
        %726 = vmatprep.subr.mxu0 0.0
        %727 = vmatpush1.msra.mxu0 0.0
        %728 = vmatprep.subr.mxu0 0.0
        %729 = vmatpush1.msra.mxu0 0.0
        %730 = vmatprep.subr.mxu0 0.0
        %731 = vmatpush1.msra.mxu0 0.0
        %732 = vmatprep.subr.mxu0 0.0
        %733 = vmatpush1.msra.mxu0 0.0
        %734 = vmatprep.subr.mxu0 0.0
        %735 = vmatpush1.msra.mxu0 0.0
        %736 = vmatprep.subr.mxu0 0.0
        %737 = vmatpush1.msra.mxu0 0.0
        %738 = vmatprep.subr.mxu0 0.0
        %739 = vmatpush1.msra.mxu0 0.0
        %740 = vmatprep.subr.mxu0 0.0
        %741 = vmatpush1.msra.mxu0 0.0
        %742 = vmatprep.subr.mxu0 0.0
        %743 = vmatpush1.msra.mxu0 0.0
        %744 = vmatprep.subr.mxu0 0.0
        %745 = vmatpush1.msra.mxu0 0.0
        %746 = vmatprep.subr.mxu0 0.0
        %747 = vmatpush1.msra.mxu0 0.0
        %748 = vmatprep.subr.mxu0 0.0
        %749 = vmatpush1.msra.mxu0 0.0
        %750 = vmatprep.subr.mxu0 0.0
        %751 = vmatpush1.msra.mxu0 0.0
        %752 = vmatprep.subr.mxu0 0.0
        %753 = vmatpush1.msra.mxu0 0.0
        %754 = vmatprep.subr.mxu0 0.0
        %755 = vmatpush1.msra.mxu0 0.0
        %756 = vmatprep.subr.mxu0 0.0
        %757 = vmatpush1.msra.mxu0 %v721
        %758 = vmatprep.subr.mxu0 0.0
        %759 = vmatpush2.msra.mxu0 0.0
        %760 = vmatprep.subr.mxu0 0.0
        %761 = vmatpush2.msra.mxu0 0.0
        %762 = vmatprep.subr.mxu0 0.0
        %763 = vmatpush2.msra.mxu0 0.0
        %764 = vmatprep.subr.mxu0 0.0
        %765 = vmatpush2.msra.mxu0 0.0
        %766 = vmatprep.subr.mxu0 0.0
        %767 = vmatpush2.msra.mxu0 0.0
        %768 = vmatprep.subr.mxu0 0.0
        %769 = vmatpush2.msra.mxu0 0.0
        %770 = vmatprep.subr.mxu0 0.0
        %771 = vmatpush2.msra.mxu0 0.0
        %772 = vmatprep.subr.mxu0 0.0
        %773 = vmatpush2.msra.mxu0 0.0
        %774 = vmatprep.subr.mxu0 0.0
        %775 = vmatpush2.msra.mxu0 0.0
        %776 = vmatprep.subr.mxu0 0.0
        %777 = vmatpush2.msra.mxu0 0.0
        %778 = vmatprep.subr.mxu0 0.0
        %779 = vmatpush2.msra.mxu0 0.0
        %780 = vmatprep.subr.mxu0 0.0
        %781 = vmatpush2.msra.mxu0 0.0
        %782 = vmatprep.subr.mxu0 0.0
        %783 = vmatpush2.msra.mxu0 0.0
        %784 = vmatprep.subr.mxu0 0.0
        %785 = vmatpush2.msra.mxu0 0.0
        %786 = vmatprep.subr.mxu0 0.0
        %787 = vmatpush2.msra.mxu0 0.0
        %788 = vmatprep.subr.mxu0 0.0
        %789 = vmatpush2.msra.mxu0 0.0
        %790 = vmatprep.mubr.f32.mxu0 0.0
        %791 = vmatmul.mubr.f32.gmra.mxu0 %v724
        %v792 = vpop.f32.mrf.mxu0
        %v793 = vadd.f32 0.0, %v792
        %v794 = vpop.f32.mrf.mxu0
        %795 = vdwg.mxu0
        %796 = vrot.lane.b32.xlu0 %v507, 100
        %v797 = vpop.permute.xlu0 %796
        %799 = vrot.lane.b32.xlu0 %v481, 108
        %v800 = vpop.permute.xlu0 %799
        %v802 = vsel %vm516, %v797, %v800
        %803 = vrot.lane.b32.xlu0 %v382, 24
        %v804 = vpop.permute.xlu0 %803
        %v806 = vmul.f32 %v481, %v804
        %v807 = vmul.f32 %v802, %v383
        %809 = vrot.lane.b32.xlu0 %v807, 24
        %v810 = vpop.permute.xlu0 %809
        %v812 = vadd.f32 %v806, %v810
        %813 = vrot.lane.b32.xlu0 %v481, 112
        %v814 = vpop.permute.xlu0 %813
        %817 = vrot.lane.b32.xlu0 %v812, 112
        %v818 = vpop.permute.xlu0 %817
        %v820 = vsel %vm623, %v814, %v818
        %821 = vrot.lane.b32.xlu0 %v603, 112
        %v822 = vpop.permute.xlu0 %821
        %v824 = vsel %vm623, %v822, %v627
        %v826 = vsel %vm489, %v820, 0
        %v829 = vsel %vm489, %v824, 0
        %831 = vmatprep.subr.mxu0 0.0
        %832 = vmatpush1.xpose.msra.mxu0 0.0
        %833 = vmatprep.subr.mxu0 0.0
        %834 = vmatpush1.xpose.msra.mxu0 0.0
        %835 = vmatprep.subr.mxu0 0.0
        %836 = vmatpush1.xpose.msra.mxu0 0.0
        %837 = vmatprep.subr.mxu0 0.0
        %838 = vmatpush1.xpose.msra.mxu0 0.0
        %839 = vmatprep.subr.mxu0 0.0
        %840 = vmatpush1.xpose.msra.mxu0 0.0
        %841 = vmatprep.subr.mxu0 0.0
        %842 = vmatpush1.xpose.msra.mxu0 0.0
        %843 = vmatprep.subr.mxu0 0.0
        %844 = vmatpush1.xpose.msra.mxu0 0.0
        %845 = vmatprep.subr.mxu0 0.0
        %846 = vmatpush1.xpose.msra.mxu0 0.0
        %847 = vmatprep.subr.mxu0 0.0
        %848 = vmatpush1.xpose.msra.mxu0 0.0
        %849 = vmatprep.subr.mxu0 0.0
        %850 = vmatpush1.xpose.msra.mxu0 0.0
        %851 = vmatprep.subr.mxu0 0.0
        %852 = vmatpush1.xpose.msra.mxu0 0.0
        %853 = vmatprep.subr.mxu0 0.0
        %854 = vmatpush1.xpose.msra.mxu0 0.0
        %855 = vmatprep.subr.mxu0 0.0
        %856 = vmatpush1.xpose.msra.mxu0 0.0
        %857 = vmatprep.subr.mxu0 0.0
        %858 = vmatpush1.xpose.msra.mxu0 0.0
        %859 = vmatprep.subr.mxu0 0.0
        %860 = vmatpush1.xpose.msra.mxu0 0.0
        %861 = vmatprep.subr.mxu0 0.0
        %862 = vmatpush1.xpose.msra.mxu0 %v829
        %863 = vmatprep.subr.mxu0 0.0
        %864 = vmatpush2.xpose.msra.mxu0 0.0
        %865 = vmatprep.subr.mxu0 0.0
        %866 = vmatpush2.xpose.msra.mxu0 0.0
        %867 = vmatprep.subr.mxu0 0.0
        %868 = vmatpush2.xpose.msra.mxu0 0.0
        %869 = vmatprep.subr.mxu0 0.0
        %870 = vmatpush2.xpose.msra.mxu0 0.0
        %871 = vmatprep.subr.mxu0 0.0
        %872 = vmatpush2.xpose.msra.mxu0 0.0
        %873 = vmatprep.subr.mxu0 0.0
        %874 = vmatpush2.xpose.msra.mxu0 0.0
        %875 = vmatprep.subr.mxu0 0.0
        %876 = vmatpush2.xpose.msra.mxu0 0.0
        %877 = vmatprep.subr.mxu0 0.0
        %878 = vmatpush2.xpose.msra.mxu0 0.0
        %879 = vmatprep.subr.mxu0 0.0
        %880 = vmatpush2.xpose.msra.mxu0 0.0
        %881 = vmatprep.subr.mxu0 0.0
        %882 = vmatpush2.xpose.msra.mxu0 0.0
        %883 = vmatprep.subr.mxu0 0.0
        %884 = vmatpush2.xpose.msra.mxu0 0.0
        %885 = vmatprep.subr.mxu0 0.0
        %886 = vmatpush2.xpose.msra.mxu0 0.0
        %887 = vmatprep.subr.mxu0 0.0
        %888 = vmatpush2.xpose.msra.mxu0 0.0
        %889 = vmatprep.subr.mxu0 0.0
        %890 = vmatpush2.xpose.msra.mxu0 0.0
        %891 = vmatprep.subr.mxu0 0.0
        %892 = vmatpush2.xpose.msra.mxu0 0.0
        %893 = vmatprep.subr.mxu0 0.0
        %894 = vmatpush2.xpose.msra.mxu0 0.0
        %895 = vmatprep.mubr.f32.mxu0 0.0
        %896 = vmatmul.mubr.f32.gmra.mxu0 %v826
        %v897 = vpop.f32.mrf.mxu0
        %v898 = vadd.f32 0.0, %v897
        %v899 = vpop.f32.mrf.mxu0
        %900 = vdwg.mxu0
        %v901 = vmul.f32 %v898, 0.25
        %v902 = vsel %vm391, %v901, -1e+30
        %v903 = vsel %vm623, %v902, -inf
        %904 = vmax.xlane.f32.xlu0 %v903
        %v905 = vpop.xlane.xlu0 %904
        %v906 = vsub.f32 %v902, %v905
        %v907 = vmul.f32 %v906, 1.442695
        %v908 = vpow.pop %v907
        %v909 = vsel %vm623, %v908, 0.0
        %910 = vadd.xlane.f32.xlu0 %v909
        %v911 = vpop.xlane.xlu0 %910
        %v912 = vrcp.pop %v911
        %v913 = vmul.f32 %v908, %v912
        %914 = vrot.lane.b32.xlu0 %v603, 104
        %v915 = vpop.permute.xlu0 %914
        %v918 = vsel %vm623, %v913, 0
        %920 = vmatprep.subr.mxu0 0.0
        %921 = vmatpush1.msra.mxu0 0.0
        %922 = vmatprep.subr.mxu0 0.0
        %923 = vmatpush1.msra.mxu0 0.0
        %924 = vmatprep.subr.mxu0 0.0
        %925 = vmatpush1.msra.mxu0 0.0
        %926 = vmatprep.subr.mxu0 0.0
        %927 = vmatpush1.msra.mxu0 0.0
        %928 = vmatprep.subr.mxu0 0.0
        %929 = vmatpush1.msra.mxu0 0.0
        %930 = vmatprep.subr.mxu0 0.0
        %931 = vmatpush1.msra.mxu0 0.0
        %932 = vmatprep.subr.mxu0 0.0
        %933 = vmatpush1.msra.mxu0 0.0
        %934 = vmatprep.subr.mxu0 0.0
        %935 = vmatpush1.msra.mxu0 0.0
        %936 = vmatprep.subr.mxu0 0.0
        %937 = vmatpush1.msra.mxu0 0.0
        %938 = vmatprep.subr.mxu0 0.0
        %939 = vmatpush1.msra.mxu0 0.0
        %940 = vmatprep.subr.mxu0 0.0
        %941 = vmatpush1.msra.mxu0 0.0
        %942 = vmatprep.subr.mxu0 0.0
        %943 = vmatpush1.msra.mxu0 0.0
        %944 = vmatprep.subr.mxu0 0.0
        %945 = vmatpush1.msra.mxu0 0.0
        %946 = vmatprep.subr.mxu0 0.0
        %947 = vmatpush1.msra.mxu0 0.0
        %948 = vmatprep.subr.mxu0 0.0
        %949 = vmatpush1.msra.mxu0 0.0
        %950 = vmatprep.subr.mxu0 0.0
        %951 = vmatpush1.msra.mxu0 %v915
        %952 = vmatprep.subr.mxu0 0.0
        %953 = vmatpush2.msra.mxu0 0.0
        %954 = vmatprep.subr.mxu0 0.0
        %955 = vmatpush2.msra.mxu0 0.0
        %956 = vmatprep.subr.mxu0 0.0
        %957 = vmatpush2.msra.mxu0 0.0
        %958 = vmatprep.subr.mxu0 0.0
        %959 = vmatpush2.msra.mxu0 0.0
        %960 = vmatprep.subr.mxu0 0.0
        %961 = vmatpush2.msra.mxu0 0.0
        %962 = vmatprep.subr.mxu0 0.0
        %963 = vmatpush2.msra.mxu0 0.0
        %964 = vmatprep.subr.mxu0 0.0
        %965 = vmatpush2.msra.mxu0 0.0
        %966 = vmatprep.subr.mxu0 0.0
        %967 = vmatpush2.msra.mxu0 0.0
        %968 = vmatprep.subr.mxu0 0.0
        %969 = vmatpush2.msra.mxu0 0.0
        %970 = vmatprep.subr.mxu0 0.0
        %971 = vmatpush2.msra.mxu0 0.0
        %972 = vmatprep.subr.mxu0 0.0
        %973 = vmatpush2.msra.mxu0 0.0
        %974 = vmatprep.subr.mxu0 0.0
        %975 = vmatpush2.msra.mxu0 0.0
        %976 = vmatprep.subr.mxu0 0.0
        %977 = vmatpush2.msra.mxu0 0.0
        %978 = vmatprep.subr.mxu0 0.0
        %979 = vmatpush2.msra.mxu0 0.0
        %980 = vmatprep.subr.mxu0 0.0
        %981 = vmatpush2.msra.mxu0 0.0
        %982 = vmatprep.subr.mxu0 0.0
        %983 = vmatpush2.msra.mxu0 0.0
        %984 = vmatprep.mubr.f32.mxu0 0.0
        %985 = vmatmul.mubr.f32.gmra.mxu0 %v918
        %v986 = vpop.f32.mrf.mxu0
        %v987 = vadd.f32 0.0, %v986
        %v988 = vpop.f32.mrf.mxu0
        %989 = vdwg.mxu0
        %991 = vrot.lane.b32.xlu0 %v987, 8
        %v992 = vpop.permute.xlu0 %991
        %v994 = vsel %vm623, %v793, %v992
        %v995 = vld [vmem:[%s8] sm:$0xff]
        %v996 = vld [vmem:[%s8 + $0x8] sm:$0xff]
        %v998 = vsel %vm489, %v994, 0
        %1000 = vmatprep.subr.mxu0 0.0
        %1001 = vmatpush1.msra.mxu0 0.0
        %1002 = vmatprep.subr.mxu0 0.0
        %1003 = vmatpush1.msra.mxu0 0.0
        %1004 = vmatprep.subr.mxu0 0.0
        %1005 = vmatpush1.msra.mxu0 0.0
        %1006 = vmatprep.subr.mxu0 0.0
        %1007 = vmatpush1.msra.mxu0 0.0
        %1008 = vmatprep.subr.mxu0 0.0
        %1009 = vmatpush1.msra.mxu0 0.0
        %1010 = vmatprep.subr.mxu0 0.0
        %1011 = vmatpush1.msra.mxu0 0.0
        %1012 = vmatprep.subr.mxu0 0.0
        %1013 = vmatpush1.msra.mxu0 0.0
        %1014 = vmatprep.subr.mxu0 0.0
        %1015 = vmatpush1.msra.mxu0 0.0
        %1016 = vmatprep.subr.mxu0 0.0
        %1017 = vmatpush1.msra.mxu0 0.0
        %1018 = vmatprep.subr.mxu0 0.0
        %1019 = vmatpush1.msra.mxu0 0.0
        %1020 = vmatprep.subr.mxu0 0.0
        %1021 = vmatpush1.msra.mxu0 0.0
        %1022 = vmatprep.subr.mxu0 0.0
        %1023 = vmatpush1.msra.mxu0 0.0
        %1024 = vmatprep.subr.mxu0 0.0
        %1025 = vmatpush1.msra.mxu0 0.0
        %1026 = vmatprep.subr.mxu0 0.0
        %1027 = vmatpush1.msra.mxu0 0.0
        %1028 = vmatprep.subr.mxu0 0.0
        %1029 = vmatpush1.msra.mxu0 %v996
        %1030 = vmatprep.subr.mxu0 0.0
        %1031 = vmatpush1.msra.mxu0 %v995
        %1032 = vmatprep.subr.mxu0 0.0
        %1033 = vmatpush2.msra.mxu0 0.0
        %1034 = vmatprep.subr.mxu0 0.0
        %1035 = vmatpush2.msra.mxu0 0.0
        %1036 = vmatprep.subr.mxu0 0.0
        %1037 = vmatpush2.msra.mxu0 0.0
        %1038 = vmatprep.subr.mxu0 0.0
        %1039 = vmatpush2.msra.mxu0 0.0
        %1040 = vmatprep.subr.mxu0 0.0
        %1041 = vmatpush2.msra.mxu0 0.0
        %1042 = vmatprep.subr.mxu0 0.0
        %1043 = vmatpush2.msra.mxu0 0.0
        %1044 = vmatprep.subr.mxu0 0.0
        %1045 = vmatpush2.msra.mxu0 0.0
        %1046 = vmatprep.subr.mxu0 0.0
        %1047 = vmatpush2.msra.mxu0 0.0
        %1048 = vmatprep.subr.mxu0 0.0
        %1049 = vmatpush2.msra.mxu0 0.0
        %1050 = vmatprep.subr.mxu0 0.0
        %1051 = vmatpush2.msra.mxu0 0.0
        %1052 = vmatprep.subr.mxu0 0.0
        %1053 = vmatpush2.msra.mxu0 0.0
        %1054 = vmatprep.subr.mxu0 0.0
        %1055 = vmatpush2.msra.mxu0 0.0
        %1056 = vmatprep.subr.mxu0 0.0
        %1057 = vmatpush2.msra.mxu0 0.0
        %1058 = vmatprep.subr.mxu0 0.0
        %1059 = vmatpush2.msra.mxu0 0.0
        %1060 = vmatprep.subr.mxu0 0.0
        %1061 = vmatpush2.msra.mxu0 0.0
        %1062 = vmatprep.subr.mxu0 0.0
        %1063 = vmatpush2.msra.mxu0 0.0
        %1064 = vmatprep.mubr.f32.mxu0 0.0
        %1065 = vmatmul.mubr.f32.gmra.mxu0 %v998
        %v1066 = vpop.f32.mrf.mxu0
        %v1067 = vadd.f32 0.0, %v1066
        %v1068 = vpop.f32.mrf.mxu0
        %1069 = vdwg.mxu0
        %v1070 = vadd.f32 %v381, %v1067
        %v1071 = vmul.f32 %v1070, %v1070
        %v1072 = vsel %vm393, %v1071, 0.0
        %1073 = vadd.xlane.f32.xlu0 %v1072
        %v1074 = vpop.xlane.xlu0 %1073
        %v1075 = vmul.f32 %v1074, %v397
        %v1076 = vadd.f32 %v1075, 1e-06
        %v1077 = vrsqrt.pop %v1076
        %v1078 = vmul.f32 %v1070, %v1077
        %v1079 = vlaneseq
        %v1080 = vshrl.u32 %v1079, 7
        %v1081 = vsub.s32 0, %v1080
        %v1082 = vrot.slane %v385, %v1081
        %v1083 = vmul.f32 %v1078, %v1082
        %v1084 = vld [vmem:[%s9] sm:$0xff]
        %v1085 = vld [vmem:[%s9 + $0x8] sm:$0xff]
        %v1086 = vld [vmem:[%s9 + $0x10] sm:$0xff]
        %v1087 = vld [vmem:[%s9 + $0x18] sm:$0xff]
        %v1089 = vsel %vm393, %v1083, 0
        %1091 = vmatprep.subr.mxu0 0.0
        %1092 = vmatpush1.msra.mxu0 0.0
        %1093 = vmatprep.subr.mxu0 0.0
        %1094 = vmatpush1.msra.mxu0 0.0
        %1095 = vmatprep.subr.mxu0 0.0
        %1096 = vmatpush1.msra.mxu0 0.0
        %1097 = vmatprep.subr.mxu0 0.0
        %1098 = vmatpush1.msra.mxu0 0.0
        %1099 = vmatprep.subr.mxu0 0.0
        %1100 = vmatpush1.msra.mxu0 0.0
        %1101 = vmatprep.subr.mxu0 0.0
        %1102 = vmatpush1.msra.mxu0 0.0
        %1103 = vmatprep.subr.mxu0 0.0
        %1104 = vmatpush1.msra.mxu0 0.0
        %1105 = vmatprep.subr.mxu0 0.0
        %1106 = vmatpush1.msra.mxu0 0.0
        %1107 = vmatprep.subr.mxu0 0.0
        %1108 = vmatpush1.msra.mxu0 0.0
        %1109 = vmatprep.subr.mxu0 0.0
        %1110 = vmatpush1.msra.mxu0 0.0
        %1111 = vmatprep.subr.mxu0 0.0
        %1112 = vmatpush1.msra.mxu0 0.0
        %1113 = vmatprep.subr.mxu0 0.0
        %1114 = vmatpush1.msra.mxu0 0.0
        %1115 = vmatprep.subr.mxu0 0.0
        %1116 = vmatpush1.msra.mxu0 %v1087
        %1117 = vmatprep.subr.mxu0 0.0
        %1118 = vmatpush1.msra.mxu0 %v1086
        %1119 = vmatprep.subr.mxu0 0.0
        %1120 = vmatpush1.msra.mxu0 %v1085
        %1121 = vmatprep.subr.mxu0 0.0
        %1122 = vmatpush1.msra.mxu0 %v1084
        %1123 = vmatprep.subr.mxu0 0.0
        %1124 = vmatpush2.msra.mxu0 0.0
        %1125 = vmatprep.subr.mxu0 0.0
        %1126 = vmatpush2.msra.mxu0 0.0
        %1127 = vmatprep.subr.mxu0 0.0
        %1128 = vmatpush2.msra.mxu0 0.0
        %1129 = vmatprep.subr.mxu0 0.0
        %1130 = vmatpush2.msra.mxu0 0.0
        %1131 = vmatprep.subr.mxu0 0.0
        %1132 = vmatpush2.msra.mxu0 0.0
        %1133 = vmatprep.subr.mxu0 0.0
        %1134 = vmatpush2.msra.mxu0 0.0
        %1135 = vmatprep.subr.mxu0 0.0
        %1136 = vmatpush2.msra.mxu0 0.0
        %1137 = vmatprep.subr.mxu0 0.0
        %1138 = vmatpush2.msra.mxu0 0.0
        %1139 = vmatprep.subr.mxu0 0.0
        %1140 = vmatpush2.msra.mxu0 0.0
        %1141 = vmatprep.subr.mxu0 0.0
        %1142 = vmatpush2.msra.mxu0 0.0
        %1143 = vmatprep.subr.mxu0 0.0
        %1144 = vmatpush2.msra.mxu0 0.0
        %1145 = vmatprep.subr.mxu0 0.0
        %1146 = vmatpush2.msra.mxu0 0.0
        %1147 = vmatprep.subr.mxu0 0.0
        %1148 = vmatpush2.msra.mxu0 0.0
        %1149 = vmatprep.subr.mxu0 0.0
        %1150 = vmatpush2.msra.mxu0 0.0
        %1151 = vmatprep.subr.mxu0 0.0
        %1152 = vmatpush2.msra.mxu0 0.0
        %1153 = vmatprep.subr.mxu0 0.0
        %1154 = vmatpush2.msra.mxu0 0.0
        %1155 = vmatprep.mubr.f32.mxu0 0.0
        %1156 = vmatmul.mubr.f32.gmra.mxu0 %v1089
        %v1157 = vpop.f32.mrf.mxu0
        %v1158 = vadd.f32 0.0, %v1157
        %v1159 = vpop.f32.mrf.mxu0
        %1160 = vdwg.mxu0
        %v1161 = vxor.u32 %v1158, 2147483648
        %v1162 = vmul.f32 %v1161, 1.442695
        %v1163 = vpow.pop %v1162
        %v1164 = vadd.f32 %v1163, 1.0
        %v1165 = vrcp.pop %v1164
        %v1166 = vmul.f32 1.0, %v1165
        %v1167 = vmul.f32 %v1158, %v1166
        %1169 = vrot.lane.b32.xlu0 %v1158, 80
        %v1170 = vpop.permute.xlu0 %1169
        %v1172 = vmul.f32 %v1167, %v1170
        %v1173 = vld [vmem:[%s10] sm:$0xff]
        %v1174 = vld [vmem:[%s10 + $0x8] sm:$0xff]
        %v1175 = vld [vmem:[%s10 + $0x10] sm:$0xff]
        %v1176 = vld [vmem:[%s10 + $0x18] sm:$0xff]
        %v1177 = vld [vmem:[%s10 + $0x20] sm:$0xff]
        %v1178 = vld [vmem:[%s10 + $0x28] sm:$0xff]
        %vm1179 = vcmask 392192
        %v1181 = vsel %vm1179, %v1172, 0
        %1183 = vmatprep.subr.mxu0 0.0
        %1184 = vmatpush1.msra.mxu0 0.0
        %1185 = vmatprep.subr.mxu0 0.0
        %1186 = vmatpush1.msra.mxu0 0.0
        %1187 = vmatprep.subr.mxu0 0.0
        %1188 = vmatpush1.msra.mxu0 0.0
        %1189 = vmatprep.subr.mxu0 0.0
        %1190 = vmatpush1.msra.mxu0 0.0
        %1191 = vmatprep.subr.mxu0 0.0
        %1192 = vmatpush1.msra.mxu0 0.0
        %1193 = vmatprep.subr.mxu0 0.0
        %1194 = vmatpush1.msra.mxu0 0.0
        %1195 = vmatprep.subr.mxu0 0.0
        %1196 = vmatpush1.msra.mxu0 0.0
        %1197 = vmatprep.subr.mxu0 0.0
        %1198 = vmatpush1.msra.mxu0 0.0
        %1199 = vmatprep.subr.mxu0 0.0
        %1200 = vmatpush1.msra.mxu0 0.0
        %1201 = vmatprep.subr.mxu0 0.0
        %1202 = vmatpush1.msra.mxu0 0.0
        %1203 = vmatprep.subr.mxu0 0.0
        %1204 = vmatpush1.msra.mxu0 %v1178
        %1205 = vmatprep.subr.mxu0 0.0
        %1206 = vmatpush1.msra.mxu0 %v1177
        %1207 = vmatprep.subr.mxu0 0.0
        %1208 = vmatpush1.msra.mxu0 %v1176
        %1209 = vmatprep.subr.mxu0 0.0
        %1210 = vmatpush1.msra.mxu0 %v1175
        %1211 = vmatprep.subr.mxu0 0.0
        %1212 = vmatpush1.msra.mxu0 %v1174
        %1213 = vmatprep.subr.mxu0 0.0
        %1214 = vmatpush1.msra.mxu0 %v1173
        %1215 = vmatprep.subr.mxu0 0.0
        %1216 = vmatpush2.msra.mxu0 0.0
        %1217 = vmatprep.subr.mxu0 0.0
        %1218 = vmatpush2.msra.mxu0 0.0
        %1219 = vmatprep.subr.mxu0 0.0
        %1220 = vmatpush2.msra.mxu0 0.0
        %1221 = vmatprep.subr.mxu0 0.0
        %1222 = vmatpush2.msra.mxu0 0.0
        %1223 = vmatprep.subr.mxu0 0.0
        %1224 = vmatpush2.msra.mxu0 0.0
        %1225 = vmatprep.subr.mxu0 0.0
        %1226 = vmatpush2.msra.mxu0 0.0
        %1227 = vmatprep.subr.mxu0 0.0
        %1228 = vmatpush2.msra.mxu0 0.0
        %1229 = vmatprep.subr.mxu0 0.0
        %1230 = vmatpush2.msra.mxu0 0.0
        %1231 = vmatprep.subr.mxu0 0.0
        %1232 = vmatpush2.msra.mxu0 0.0
        %1233 = vmatprep.subr.mxu0 0.0
        %1234 = vmatpush2.msra.mxu0 0.0
        %1235 = vmatprep.subr.mxu0 0.0
        %1236 = vmatpush2.msra.mxu0 0.0
        %1237 = vmatprep.subr.mxu0 0.0
        %1238 = vmatpush2.msra.mxu0 0.0
        %1239 = vmatprep.subr.mxu0 0.0
        %1240 = vmatpush2.msra.mxu0 0.0
        %1241 = vmatprep.subr.mxu0 0.0
        %1242 = vmatpush2.msra.mxu0 0.0
        %1243 = vmatprep.subr.mxu0 0.0
        %1244 = vmatpush2.msra.mxu0 0.0
        %1245 = vmatprep.subr.mxu0 0.0
        %1246 = vmatpush2.msra.mxu0 0.0
        %1247 = vmatprep.mubr.f32.mxu0 0.0
        %1248 = vmatmul.mubr.f32.gmra.mxu0 %v1181
        %v1249 = vpop.f32.mrf.mxu0
        %v1250 = vadd.f32 0.0, %v1249
        %v1251 = vpop.f32.mrf.mxu0
        %1252 = vdwg.mxu0
        %v1253 = vadd.f32 %v1070, %v1250
        %v1254 = vmul.f32 %v1253, %v1253
        %v1255 = vsel %vm393, %v1254, 0.0
        %1256 = vadd.xlane.f32.xlu0 %v1255
        %v1257 = vpop.xlane.xlu0 %1256
        %v1258 = vmul.f32 %v1257, %v397
        %v1259 = vadd.f32 %v1258, 1e-06
        %v1260 = vrsqrt.pop %v1259
        %v1261 = vmul.f32 %v1253, %v1260
        %v1262 = vlaneseq
        %v1263 = vshrl.u32 %v1262, 7
        %v1264 = vsub.s32 1, %v1263
        %v1265 = vrot.slane %v384, %v1264
        %v1266 = vmul.f32 %v1261, %v1265
        %s1267 = scalar_lea.vmem %s6, 32
        %v1268 = vld [vmem:[%s1267] sm:$0xff]
        %v1269 = vld [vmem:[%s1267 + $0x8] sm:$0xff]
        %v1270 = vld [vmem:[%s1267 + $0x10] sm:$0xff]
        %v1271 = vld [vmem:[%s1267 + $0x18] sm:$0xff]
        %v1273 = vsel %vm393, %v1266, 0
        %1275 = vmatprep.subr.mxu0 0.0
        %1276 = vmatpush1.msra.mxu0 0.0
        %1277 = vmatprep.subr.mxu0 0.0
        %1278 = vmatpush1.msra.mxu0 0.0
        %1279 = vmatprep.subr.mxu0 0.0
        %1280 = vmatpush1.msra.mxu0 0.0
        %1281 = vmatprep.subr.mxu0 0.0
        %1282 = vmatpush1.msra.mxu0 0.0
        %1283 = vmatprep.subr.mxu0 0.0
        %1284 = vmatpush1.msra.mxu0 0.0
        %1285 = vmatprep.subr.mxu0 0.0
        %1286 = vmatpush1.msra.mxu0 0.0
        %1287 = vmatprep.subr.mxu0 0.0
        %1288 = vmatpush1.msra.mxu0 0.0
        %1289 = vmatprep.subr.mxu0 0.0
        %1290 = vmatpush1.msra.mxu0 0.0
        %1291 = vmatprep.subr.mxu0 0.0
        %1292 = vmatpush1.msra.mxu0 0.0
        %1293 = vmatprep.subr.mxu0 0.0
        %1294 = vmatpush1.msra.mxu0 0.0
        %1295 = vmatprep.subr.mxu0 0.0
        %1296 = vmatpush1.msra.mxu0 0.0
        %1297 = vmatprep.subr.mxu0 0.0
        %1298 = vmatpush1.msra.mxu0 0.0
        %1299 = vmatprep.subr.mxu0 0.0
        %1300 = vmatpush1.msra.mxu0 %v1271
        %1301 = vmatprep.subr.mxu0 0.0
        %1302 = vmatpush1.msra.mxu0 %v1270
        %1303 = vmatprep.subr.mxu0 0.0
        %1304 = vmatpush1.msra.mxu0 %v1269
        %1305 = vmatprep.subr.mxu0 0.0
        %1306 = vmatpush1.msra.mxu0 %v1268
        %1307 = vmatprep.subr.mxu0 0.0
        %1308 = vmatpush2.msra.mxu0 0.0
        %1309 = vmatprep.subr.mxu0 0.0
        %1310 = vmatpush2.msra.mxu0 0.0
        %1311 = vmatprep.subr.mxu0 0.0
        %1312 = vmatpush2.msra.mxu0 0.0
        %1313 = vmatprep.subr.mxu0 0.0
        %1314 = vmatpush2.msra.mxu0 0.0
        %1315 = vmatprep.subr.mxu0 0.0
        %1316 = vmatpush2.msra.mxu0 0.0
        %1317 = vmatprep.subr.mxu0 0.0
        %1318 = vmatpush2.msra.mxu0 0.0
        %1319 = vmatprep.subr.mxu0 0.0
        %1320 = vmatpush2.msra.mxu0 0.0
        %1321 = vmatprep.subr.mxu0 0.0
        %1322 = vmatpush2.msra.mxu0 0.0
        %1323 = vmatprep.subr.mxu0 0.0
        %1324 = vmatpush2.msra.mxu0 0.0
        %1325 = vmatprep.subr.mxu0 0.0
        %1326 = vmatpush2.msra.mxu0 0.0
        %1327 = vmatprep.subr.mxu0 0.0
        %1328 = vmatpush2.msra.mxu0 0.0
        %1329 = vmatprep.subr.mxu0 0.0
        %1330 = vmatpush2.msra.mxu0 0.0
        %1331 = vmatprep.subr.mxu0 0.0
        %1332 = vmatpush2.msra.mxu0 0.0
        %1333 = vmatprep.subr.mxu0 0.0
        %1334 = vmatpush2.msra.mxu0 0.0
        %1335 = vmatprep.subr.mxu0 0.0
        %1336 = vmatpush2.msra.mxu0 0.0
        %1337 = vmatprep.subr.mxu0 0.0
        %1338 = vmatpush2.msra.mxu0 0.0
        %1339 = vmatprep.mubr.f32.mxu0 0.0
        %1340 = vmatmul.mubr.f32.gmra.mxu0 %v1273
        %v1341 = vpop.f32.mrf.mxu0
        %v1342 = vadd.f32 0.0, %v1341
        %v1343 = vpop.f32.mrf.mxu0
        %1344 = vdwg.mxu0
        %v1345 = vmul.f32 %v1342, %v1342
        %1347 = vrot.lane.b32.xlu0 %v1345, 96
        %v1348 = vpop.permute.xlu0 %1347
        %v1350 = vsel %vm489, %v1348, 0.0
        %1351 = vadd.xlane.f32.xlu0 %v1350
        %v1352 = vpop.xlane.xlu0 %1351
        %v1353 = vmul.f32 %v1352, %v493
        %v1354 = vadd.f32 %v1353, 1e-06
        %v1355 = vrsqrt.pop %v1354
        %v1356 = vmul.f32 %v1342, %v1355
        %v1357 = vlaneseq
        %v1358 = vshrl.u32 %v1357, 7
        %v1359 = vsub.s32 1, %v1358
        %v1360 = vrot.slane %v386, %v1359
        %1362 = vrot.lane.b32.xlu0 %v1360, 32
        %v1363 = vpop.permute.xlu0 %1362
        %v1365 = vmul.f32 %v1356, %v1363
        %v1366 = vsub.f32 0.0, %v1342
        %1368 = vrot.lane.b32.xlu0 %v1366, 76
        %v1369 = vpop.permute.xlu0 %1368
        %1372 = vrot.lane.b32.xlu0 %v1342, 84
        %v1373 = vpop.permute.xlu0 %1372
        %v1375 = vsel %vm516, %v1369, %v1373
        %v1376 = vmul.f32 %v1342, %v520
        %v1377 = vmul.f32 %v1375, %v383
        %1379 = vrot.lane.b32.xlu0 %v1377, 48
        %v1380 = vpop.permute.xlu0 %1379
        %v1382 = vadd.f32 %v1376, %v1380
        %s1383 = scalar_lea.vmem %s7, 16
        %v1384 = vld [vmem:[%s1383] sm:$0xff]
        %v1385 = vld [vmem:[%s1383 + $0x8] sm:$0xff]
        %1387 = vrot.lane.b32.xlu0 %v1365, 96
        %v1388 = vpop.permute.xlu0 %1387
        %v1389 = vsel %vm489, %v1388, 0
        %1391 = vmatprep.subr.mxu0 0.0
        %1392 = vmatpush1.msra.mxu0 0.0
        %1393 = vmatprep.subr.mxu0 0.0
        %1394 = vmatpush1.msra.mxu0 0.0
        %1395 = vmatprep.subr.mxu0 0.0
        %1396 = vmatpush1.msra.mxu0 0.0
        %1397 = vmatprep.subr.mxu0 0.0
        %1398 = vmatpush1.msra.mxu0 0.0
        %1399 = vmatprep.subr.mxu0 0.0
        %1400 = vmatpush1.msra.mxu0 0.0
        %1401 = vmatprep.subr.mxu0 0.0
        %1402 = vmatpush1.msra.mxu0 0.0
        %1403 = vmatprep.subr.mxu0 0.0
        %1404 = vmatpush1.msra.mxu0 0.0
        %1405 = vmatprep.subr.mxu0 0.0
        %1406 = vmatpush1.msra.mxu0 0.0
        %1407 = vmatprep.subr.mxu0 0.0
        %1408 = vmatpush1.msra.mxu0 0.0
        %1409 = vmatprep.subr.mxu0 0.0
        %1410 = vmatpush1.msra.mxu0 0.0
        %1411 = vmatprep.subr.mxu0 0.0
        %1412 = vmatpush1.msra.mxu0 0.0
        %1413 = vmatprep.subr.mxu0 0.0
        %1414 = vmatpush1.msra.mxu0 0.0
        %1415 = vmatprep.subr.mxu0 0.0
        %1416 = vmatpush1.msra.mxu0 0.0
        %1417 = vmatprep.subr.mxu0 0.0
        %1418 = vmatpush1.msra.mxu0 0.0
        %1419 = vmatprep.subr.mxu0 0.0
        %1420 = vmatpush1.msra.mxu0 %v1385
        %1421 = vmatprep.subr.mxu0 0.0
        %1422 = vmatpush1.msra.mxu0 %v1384
        %1423 = vmatprep.subr.mxu0 0.0
        %1424 = vmatpush2.msra.mxu0 0.0
        %1425 = vmatprep.subr.mxu0 0.0
        %1426 = vmatpush2.msra.mxu0 0.0
        %1427 = vmatprep.subr.mxu0 0.0
        %1428 = vmatpush2.msra.mxu0 0.0
        %1429 = vmatprep.subr.mxu0 0.0
        %1430 = vmatpush2.msra.mxu0 0.0
        %1431 = vmatprep.subr.mxu0 0.0
        %1432 = vmatpush2.msra.mxu0 0.0
        %1433 = vmatprep.subr.mxu0 0.0
        %1434 = vmatpush2.msra.mxu0 0.0
        %1435 = vmatprep.subr.mxu0 0.0
        %1436 = vmatpush2.msra.mxu0 0.0
        %1437 = vmatprep.subr.mxu0 0.0
        %1438 = vmatpush2.msra.mxu0 0.0
        %1439 = vmatprep.subr.mxu0 0.0
        %1440 = vmatpush2.msra.mxu0 0.0
        %1441 = vmatprep.subr.mxu0 0.0
        %1442 = vmatpush2.msra.mxu0 0.0
        %1443 = vmatprep.subr.mxu0 0.0
        %1444 = vmatpush2.msra.mxu0 0.0
        %1445 = vmatprep.subr.mxu0 0.0
        %1446 = vmatpush2.msra.mxu0 0.0
        %1447 = vmatprep.subr.mxu0 0.0
        %1448 = vmatpush2.msra.mxu0 0.0
        %1449 = vmatprep.subr.mxu0 0.0
        %1450 = vmatpush2.msra.mxu0 0.0
        %1451 = vmatprep.subr.mxu0 0.0
        %1452 = vmatpush2.msra.mxu0 0.0
        %1453 = vmatprep.subr.mxu0 0.0
        %1454 = vmatpush2.msra.mxu0 0.0
        %1455 = vmatprep.mubr.f32.mxu0 0.0
        %1456 = vmatmul.mubr.f32.gmra.mxu0 %v1389
        %v1457 = vpop.f32.mrf.mxu0
        %v1458 = vadd.f32 0.0, %v1457
        %v1459 = vpop.f32.mrf.mxu0
        %1460 = vdwg.mxu0
        %1461 = vrot.lane.b32.xlu0 %v1366, 116
        %v1462 = vpop.permute.xlu0 %1461
        %1464 = vrot.lane.b32.xlu0 %v1342, 124
        %v1465 = vpop.permute.xlu0 %1464
        %v1467 = vsel %vm516, %v1462, %v1465
        %v1468 = vmul.f32 %v1342, %v614
        %v1469 = vmul.f32 %v1467, %v383
        %1471 = vrot.lane.b32.xlu0 %v1469, 8
        %v1472 = vpop.permute.xlu0 %1471
        %v1474 = vadd.f32 %v1468, %v1472
        %v1475 = vsel %vm623, %v1342, %v1474
        %1477 = vrot.lane.b32.xlu0 %v1382, 88
        %v1478 = vpop.permute.xlu0 %1477
        %v1480 = vsel %vm623, %v1458, %v1478
        %v1482 = vsel %vm489, %v1475, 0
        %v1485 = vsel %vm489, %v1480, 0
        %1487 = vmatprep.subr.mxu0 0.0
        %1488 = vmatpush1.xpose.msra.mxu0 0.0
        %1489 = vmatprep.subr.mxu0 0.0
        %1490 = vmatpush1.xpose.msra.mxu0 0.0
        %1491 = vmatprep.subr.mxu0 0.0
        %1492 = vmatpush1.xpose.msra.mxu0 0.0
        %1493 = vmatprep.subr.mxu0 0.0
        %1494 = vmatpush1.xpose.msra.mxu0 0.0
        %1495 = vmatprep.subr.mxu0 0.0
        %1496 = vmatpush1.xpose.msra.mxu0 0.0
        %1497 = vmatprep.subr.mxu0 0.0
        %1498 = vmatpush1.xpose.msra.mxu0 0.0
        %1499 = vmatprep.subr.mxu0 0.0
        %1500 = vmatpush1.xpose.msra.mxu0 0.0
        %1501 = vmatprep.subr.mxu0 0.0
        %1502 = vmatpush1.xpose.msra.mxu0 0.0
        %1503 = vmatprep.subr.mxu0 0.0
        %1504 = vmatpush1.xpose.msra.mxu0 0.0
        %1505 = vmatprep.subr.mxu0 0.0
        %1506 = vmatpush1.xpose.msra.mxu0 0.0
        %1507 = vmatprep.subr.mxu0 0.0
        %1508 = vmatpush1.xpose.msra.mxu0 0.0
        %1509 = vmatprep.subr.mxu0 0.0
        %1510 = vmatpush1.xpose.msra.mxu0 0.0
        %1511 = vmatprep.subr.mxu0 0.0
        %1512 = vmatpush1.xpose.msra.mxu0 0.0
        %1513 = vmatprep.subr.mxu0 0.0
        %1514 = vmatpush1.xpose.msra.mxu0 0.0
        %1515 = vmatprep.subr.mxu0 0.0
        %1516 = vmatpush1.xpose.msra.mxu0 0.0
        %1517 = vmatprep.subr.mxu0 0.0
        %1518 = vmatpush1.xpose.msra.mxu0 %v1485
        %1519 = vmatprep.subr.mxu0 0.0
        %1520 = vmatpush2.xpose.msra.mxu0 0.0
        %1521 = vmatprep.subr.mxu0 0.0
        %1522 = vmatpush2.xpose.msra.mxu0 0.0
        %1523 = vmatprep.subr.mxu0 0.0
        %1524 = vmatpush2.xpose.msra.mxu0 0.0
        %1525 = vmatprep.subr.mxu0 0.0
        %1526 = vmatpush2.xpose.msra.mxu0 0.0
        %1527 = vmatprep.subr.mxu0 0.0
        %1528 = vmatpush2.xpose.msra.mxu0 0.0
        %1529 = vmatprep.subr.mxu0 0.0
        %1530 = vmatpush2.xpose.msra.mxu0 0.0
        %1531 = vmatprep.subr.mxu0 0.0
        %1532 = vmatpush2.xpose.msra.mxu0 0.0
        %1533 = vmatprep.subr.mxu0 0.0
        %1534 = vmatpush2.xpose.msra.mxu0 0.0
        %1535 = vmatprep.subr.mxu0 0.0
        %1536 = vmatpush2.xpose.msra.mxu0 0.0
        %1537 = vmatprep.subr.mxu0 0.0
        %1538 = vmatpush2.xpose.msra.mxu0 0.0
        %1539 = vmatprep.subr.mxu0 0.0
        %1540 = vmatpush2.xpose.msra.mxu0 0.0
        %1541 = vmatprep.subr.mxu0 0.0
        %1542 = vmatpush2.xpose.msra.mxu0 0.0
        %1543 = vmatprep.subr.mxu0 0.0
        %1544 = vmatpush2.xpose.msra.mxu0 0.0
        %1545 = vmatprep.subr.mxu0 0.0
        %1546 = vmatpush2.xpose.msra.mxu0 0.0
        %1547 = vmatprep.subr.mxu0 0.0
        %1548 = vmatpush2.xpose.msra.mxu0 0.0
        %1549 = vmatprep.subr.mxu0 0.0
        %1550 = vmatpush2.xpose.msra.mxu0 0.0
        %1551 = vmatprep.mubr.f32.mxu0 0.0
        %1552 = vmatmul.mubr.f32.gmra.mxu0 %v1482
        %v1553 = vpop.f32.mrf.mxu0
        %v1554 = vadd.f32 0.0, %v1553
        %v1555 = vpop.f32.mrf.mxu0
        %1556 = vdwg.mxu0
        %v1557 = vmul.f32 %v1554, 0.25
        %v1558 = vsel %vm391, %v1557, -1e+30
        %v1559 = vsel %vm623, %v1558, -inf
        %1560 = vmax.xlane.f32.xlu0 %v1559
        %v1561 = vpop.xlane.xlu0 %1560
        %v1562 = vsub.f32 %v1558, %v1561
        %v1563 = vmul.f32 %v1562, 1.442695
        %v1564 = vpow.pop %v1563
        %v1565 = vsel %vm623, %v1564, 0.0
        %1566 = vadd.xlane.f32.xlu0 %v1565
        %v1567 = vpop.xlane.xlu0 %1566
        %v1568 = vrcp.pop %v1567
        %v1569 = vmul.f32 %v1564, %v1568
        %1571 = vrot.lane.b32.xlu0 %v1458, 120
        %v1572 = vpop.permute.xlu0 %1571
        %v1575 = vsel %vm623, %v1569, 0
        %1577 = vmatprep.subr.mxu0 0.0
        %1578 = vmatpush1.msra.mxu0 0.0
        %1579 = vmatprep.subr.mxu0 0.0
        %1580 = vmatpush1.msra.mxu0 0.0
        %1581 = vmatprep.subr.mxu0 0.0
        %1582 = vmatpush1.msra.mxu0 0.0
        %1583 = vmatprep.subr.mxu0 0.0
        %1584 = vmatpush1.msra.mxu0 0.0
        %1585 = vmatprep.subr.mxu0 0.0
        %1586 = vmatpush1.msra.mxu0 0.0
        %1587 = vmatprep.subr.mxu0 0.0
        %1588 = vmatpush1.msra.mxu0 0.0
        %1589 = vmatprep.subr.mxu0 0.0
        %1590 = vmatpush1.msra.mxu0 0.0
        %1591 = vmatprep.subr.mxu0 0.0
        %1592 = vmatpush1.msra.mxu0 0.0
        %1593 = vmatprep.subr.mxu0 0.0
        %1594 = vmatpush1.msra.mxu0 0.0
        %1595 = vmatprep.subr.mxu0 0.0
        %1596 = vmatpush1.msra.mxu0 0.0
        %1597 = vmatprep.subr.mxu0 0.0
        %1598 = vmatpush1.msra.mxu0 0.0
        %1599 = vmatprep.subr.mxu0 0.0
        %1600 = vmatpush1.msra.mxu0 0.0
        %1601 = vmatprep.subr.mxu0 0.0
        %1602 = vmatpush1.msra.mxu0 0.0
        %1603 = vmatprep.subr.mxu0 0.0
        %1604 = vmatpush1.msra.mxu0 0.0
        %1605 = vmatprep.subr.mxu0 0.0
        %1606 = vmatpush1.msra.mxu0 0.0
        %1607 = vmatprep.subr.mxu0 0.0
        %1608 = vmatpush1.msra.mxu0 %v1572
        %1609 = vmatprep.subr.mxu0 0.0
        %1610 = vmatpush2.msra.mxu0 0.0
        %1611 = vmatprep.subr.mxu0 0.0
        %1612 = vmatpush2.msra.mxu0 0.0
        %1613 = vmatprep.subr.mxu0 0.0
        %1614 = vmatpush2.msra.mxu0 0.0
        %1615 = vmatprep.subr.mxu0 0.0
        %1616 = vmatpush2.msra.mxu0 0.0
        %1617 = vmatprep.subr.mxu0 0.0
        %1618 = vmatpush2.msra.mxu0 0.0
        %1619 = vmatprep.subr.mxu0 0.0
        %1620 = vmatpush2.msra.mxu0 0.0
        %1621 = vmatprep.subr.mxu0 0.0
        %1622 = vmatpush2.msra.mxu0 0.0
        %1623 = vmatprep.subr.mxu0 0.0
        %1624 = vmatpush2.msra.mxu0 0.0
        %1625 = vmatprep.subr.mxu0 0.0
        %1626 = vmatpush2.msra.mxu0 0.0
        %1627 = vmatprep.subr.mxu0 0.0
        %1628 = vmatpush2.msra.mxu0 0.0
        %1629 = vmatprep.subr.mxu0 0.0
        %1630 = vmatpush2.msra.mxu0 0.0
        %1631 = vmatprep.subr.mxu0 0.0
        %1632 = vmatpush2.msra.mxu0 0.0
        %1633 = vmatprep.subr.mxu0 0.0
        %1634 = vmatpush2.msra.mxu0 0.0
        %1635 = vmatprep.subr.mxu0 0.0
        %1636 = vmatpush2.msra.mxu0 0.0
        %1637 = vmatprep.subr.mxu0 0.0
        %1638 = vmatpush2.msra.mxu0 0.0
        %1639 = vmatprep.subr.mxu0 0.0
        %1640 = vmatpush2.msra.mxu0 0.0
        %1641 = vmatprep.mubr.f32.mxu0 0.0
        %1642 = vmatmul.mubr.f32.gmra.mxu0 %v1575
        %v1643 = vpop.f32.mrf.mxu0
        %v1644 = vadd.f32 0.0, %v1643
        %v1645 = vpop.f32.mrf.mxu0
        %1646 = vdwg.mxu0
        %1647 = vrot.lane.b32.xlu0 %v1366, 100
        %v1648 = vpop.permute.xlu0 %1647
        %1650 = vrot.lane.b32.xlu0 %v1342, 108
        %v1651 = vpop.permute.xlu0 %1650
        %v1653 = vsel %vm516, %v1648, %v1651
        %v1654 = vmul.f32 %v1342, %v804
        %v1655 = vmul.f32 %v1653, %v383
        %1657 = vrot.lane.b32.xlu0 %v1655, 24
        %v1658 = vpop.permute.xlu0 %1657
        %v1660 = vadd.f32 %v1654, %v1658
        %1661 = vrot.lane.b32.xlu0 %v1342, 112
        %v1662 = vpop.permute.xlu0 %1661
        %1665 = vrot.lane.b32.xlu0 %v1660, 112
        %v1666 = vpop.permute.xlu0 %1665
        %v1668 = vsel %vm623, %v1662, %v1666
        %1669 = vrot.lane.b32.xlu0 %v1458, 112
        %v1670 = vpop.permute.xlu0 %1669
        %v1672 = vsel %vm623, %v1670, %v1478
        %v1674 = vsel %vm489, %v1668, 0
        %v1677 = vsel %vm489, %v1672, 0
        %1679 = vmatprep.subr.mxu0 0.0
        %1680 = vmatpush1.xpose.msra.mxu0 0.0
        %1681 = vmatprep.subr.mxu0 0.0
        %1682 = vmatpush1.xpose.msra.mxu0 0.0
        %1683 = vmatprep.subr.mxu0 0.0
        %1684 = vmatpush1.xpose.msra.mxu0 0.0
        %1685 = vmatprep.subr.mxu0 0.0
        %1686 = vmatpush1.xpose.msra.mxu0 0.0
        %1687 = vmatprep.subr.mxu0 0.0
        %1688 = vmatpush1.xpose.msra.mxu0 0.0
        %1689 = vmatprep.subr.mxu0 0.0
        %1690 = vmatpush1.xpose.msra.mxu0 0.0
        %1691 = vmatprep.subr.mxu0 0.0
        %1692 = vmatpush1.xpose.msra.mxu0 0.0
        %1693 = vmatprep.subr.mxu0 0.0
        %1694 = vmatpush1.xpose.msra.mxu0 0.0
        %1695 = vmatprep.subr.mxu0 0.0
        %1696 = vmatpush1.xpose.msra.mxu0 0.0
        %1697 = vmatprep.subr.mxu0 0.0
        %1698 = vmatpush1.xpose.msra.mxu0 0.0
        %1699 = vmatprep.subr.mxu0 0.0
        %1700 = vmatpush1.xpose.msra.mxu0 0.0
        %1701 = vmatprep.subr.mxu0 0.0
        %1702 = vmatpush1.xpose.msra.mxu0 0.0
        %1703 = vmatprep.subr.mxu0 0.0
        %1704 = vmatpush1.xpose.msra.mxu0 0.0
        %1705 = vmatprep.subr.mxu0 0.0
        %1706 = vmatpush1.xpose.msra.mxu0 0.0
        %1707 = vmatprep.subr.mxu0 0.0
        %1708 = vmatpush1.xpose.msra.mxu0 0.0
        %1709 = vmatprep.subr.mxu0 0.0
        %1710 = vmatpush1.xpose.msra.mxu0 %v1677
        %1711 = vmatprep.subr.mxu0 0.0
        %1712 = vmatpush2.xpose.msra.mxu0 0.0
        %1713 = vmatprep.subr.mxu0 0.0
        %1714 = vmatpush2.xpose.msra.mxu0 0.0
        %1715 = vmatprep.subr.mxu0 0.0
        %1716 = vmatpush2.xpose.msra.mxu0 0.0
        %1717 = vmatprep.subr.mxu0 0.0
        %1718 = vmatpush2.xpose.msra.mxu0 0.0
        %1719 = vmatprep.subr.mxu0 0.0
        %1720 = vmatpush2.xpose.msra.mxu0 0.0
        %1721 = vmatprep.subr.mxu0 0.0
        %1722 = vmatpush2.xpose.msra.mxu0 0.0
        %1723 = vmatprep.subr.mxu0 0.0
        %1724 = vmatpush2.xpose.msra.mxu0 0.0
        %1725 = vmatprep.subr.mxu0 0.0
        %1726 = vmatpush2.xpose.msra.mxu0 0.0
        %1727 = vmatprep.subr.mxu0 0.0
        %1728 = vmatpush2.xpose.msra.mxu0 0.0
        %1729 = vmatprep.subr.mxu0 0.0
        %1730 = vmatpush2.xpose.msra.mxu0 0.0
        %1731 = vmatprep.subr.mxu0 0.0
        %1732 = vmatpush2.xpose.msra.mxu0 0.0
        %1733 = vmatprep.subr.mxu0 0.0
        %1734 = vmatpush2.xpose.msra.mxu0 0.0
        %1735 = vmatprep.subr.mxu0 0.0
        %1736 = vmatpush2.xpose.msra.mxu0 0.0
        %1737 = vmatprep.subr.mxu0 0.0
        %1738 = vmatpush2.xpose.msra.mxu0 0.0
        %1739 = vmatprep.subr.mxu0 0.0
        %1740 = vmatpush2.xpose.msra.mxu0 0.0
        %1741 = vmatprep.subr.mxu0 0.0
        %1742 = vmatpush2.xpose.msra.mxu0 0.0
        %1743 = vmatprep.mubr.f32.mxu0 0.0
        %1744 = vmatmul.mubr.f32.gmra.mxu0 %v1674
        %v1745 = vpop.f32.mrf.mxu0
        %v1746 = vadd.f32 0.0, %v1745
        %v1747 = vpop.f32.mrf.mxu0
        %1748 = vdwg.mxu0
        %v1749 = vmul.f32 %v1746, 0.25
        %v1750 = vsel %vm391, %v1749, -1e+30
        %v1751 = vsel %vm623, %v1750, -inf
        %1752 = vmax.xlane.f32.xlu0 %v1751
        %v1753 = vpop.xlane.xlu0 %1752
        %v1754 = vsub.f32 %v1750, %v1753
        %v1755 = vmul.f32 %v1754, 1.442695
        %v1756 = vpow.pop %v1755
        %v1757 = vsel %vm623, %v1756, 0.0
        %1758 = vadd.xlane.f32.xlu0 %v1757
        %v1759 = vpop.xlane.xlu0 %1758
        %v1760 = vrcp.pop %v1759
        %v1761 = vmul.f32 %v1756, %v1760
        %1762 = vrot.lane.b32.xlu0 %v1458, 104
        %v1763 = vpop.permute.xlu0 %1762
        %v1766 = vsel %vm623, %v1761, 0
        %1768 = vmatprep.subr.mxu0 0.0
        %1769 = vmatpush1.msra.mxu0 0.0
        %1770 = vmatprep.subr.mxu0 0.0
        %1771 = vmatpush1.msra.mxu0 0.0
        %1772 = vmatprep.subr.mxu0 0.0
        %1773 = vmatpush1.msra.mxu0 0.0
        %1774 = vmatprep.subr.mxu0 0.0
        %1775 = vmatpush1.msra.mxu0 0.0
        %1776 = vmatprep.subr.mxu0 0.0
        %1777 = vmatpush1.msra.mxu0 0.0
        %1778 = vmatprep.subr.mxu0 0.0
        %1779 = vmatpush1.msra.mxu0 0.0
        %1780 = vmatprep.subr.mxu0 0.0
        %1781 = vmatpush1.msra.mxu0 0.0
        %1782 = vmatprep.subr.mxu0 0.0
        %1783 = vmatpush1.msra.mxu0 0.0
        %1784 = vmatprep.subr.mxu0 0.0
        %1785 = vmatpush1.msra.mxu0 0.0
        %1786 = vmatprep.subr.mxu0 0.0
        %1787 = vmatpush1.msra.mxu0 0.0
        %1788 = vmatprep.subr.mxu0 0.0
        %1789 = vmatpush1.msra.mxu0 0.0
        %1790 = vmatprep.subr.mxu0 0.0
        %1791 = vmatpush1.msra.mxu0 0.0
        %1792 = vmatprep.subr.mxu0 0.0
        %1793 = vmatpush1.msra.mxu0 0.0
        %1794 = vmatprep.subr.mxu0 0.0
        %1795 = vmatpush1.msra.mxu0 0.0
        %1796 = vmatprep.subr.mxu0 0.0
        %1797 = vmatpush1.msra.mxu0 0.0
        %1798 = vmatprep.subr.mxu0 0.0
        %1799 = vmatpush1.msra.mxu0 %v1763
        %1800 = vmatprep.subr.mxu0 0.0
        %1801 = vmatpush2.msra.mxu0 0.0
        %1802 = vmatprep.subr.mxu0 0.0
        %1803 = vmatpush2.msra.mxu0 0.0
        %1804 = vmatprep.subr.mxu0 0.0
        %1805 = vmatpush2.msra.mxu0 0.0
        %1806 = vmatprep.subr.mxu0 0.0
        %1807 = vmatpush2.msra.mxu0 0.0
        %1808 = vmatprep.subr.mxu0 0.0
        %1809 = vmatpush2.msra.mxu0 0.0
        %1810 = vmatprep.subr.mxu0 0.0
        %1811 = vmatpush2.msra.mxu0 0.0
        %1812 = vmatprep.subr.mxu0 0.0
        %1813 = vmatpush2.msra.mxu0 0.0
        %1814 = vmatprep.subr.mxu0 0.0
        %1815 = vmatpush2.msra.mxu0 0.0
        %1816 = vmatprep.subr.mxu0 0.0
        %1817 = vmatpush2.msra.mxu0 0.0
        %1818 = vmatprep.subr.mxu0 0.0
        %1819 = vmatpush2.msra.mxu0 0.0
        %1820 = vmatprep.subr.mxu0 0.0
        %1821 = vmatpush2.msra.mxu0 0.0
        %1822 = vmatprep.subr.mxu0 0.0
        %1823 = vmatpush2.msra.mxu0 0.0
        %1824 = vmatprep.subr.mxu0 0.0
        %1825 = vmatpush2.msra.mxu0 0.0
        %1826 = vmatprep.subr.mxu0 0.0
        %1827 = vmatpush2.msra.mxu0 0.0
        %1828 = vmatprep.subr.mxu0 0.0
        %1829 = vmatpush2.msra.mxu0 0.0
        %1830 = vmatprep.subr.mxu0 0.0
        %1831 = vmatpush2.msra.mxu0 0.0
        %1832 = vmatprep.mubr.f32.mxu0 0.0
        %1833 = vmatmul.mubr.f32.gmra.mxu0 %v1766
        %v1834 = vpop.f32.mrf.mxu0
        %v1835 = vadd.f32 0.0, %v1834
        %v1836 = vpop.f32.mrf.mxu0
        %1837 = vdwg.mxu0
        %1839 = vrot.lane.b32.xlu0 %v1835, 8
        %v1840 = vpop.permute.xlu0 %1839
        %v1842 = vsel %vm623, %v1644, %v1840
        %s1843 = scalar_lea.vmem %s8, 16
        %v1844 = vld [vmem:[%s1843] sm:$0xff]
        %v1845 = vld [vmem:[%s1843 + $0x8] sm:$0xff]
        %v1847 = vsel %vm489, %v1842, 0
        %1849 = vmatprep.subr.mxu0 0.0
        %1850 = vmatpush1.msra.mxu0 0.0
        %1851 = vmatprep.subr.mxu0 0.0
        %1852 = vmatpush1.msra.mxu0 0.0
        %1853 = vmatprep.subr.mxu0 0.0
        %1854 = vmatpush1.msra.mxu0 0.0
        %1855 = vmatprep.subr.mxu0 0.0
        %1856 = vmatpush1.msra.mxu0 0.0
        %1857 = vmatprep.subr.mxu0 0.0
        %1858 = vmatpush1.msra.mxu0 0.0
        %1859 = vmatprep.subr.mxu0 0.0
        %1860 = vmatpush1.msra.mxu0 0.0
        %1861 = vmatprep.subr.mxu0 0.0
        %1862 = vmatpush1.msra.mxu0 0.0
        %1863 = vmatprep.subr.mxu0 0.0
        %1864 = vmatpush1.msra.mxu0 0.0
        %1865 = vmatprep.subr.mxu0 0.0
        %1866 = vmatpush1.msra.mxu0 0.0
        %1867 = vmatprep.subr.mxu0 0.0
        %1868 = vmatpush1.msra.mxu0 0.0
        %1869 = vmatprep.subr.mxu0 0.0
        %1870 = vmatpush1.msra.mxu0 0.0
        %1871 = vmatprep.subr.mxu0 0.0
        %1872 = vmatpush1.msra.mxu0 0.0
        %1873 = vmatprep.subr.mxu0 0.0
        %1874 = vmatpush1.msra.mxu0 0.0
        %1875 = vmatprep.subr.mxu0 0.0
        %1876 = vmatpush1.msra.mxu0 0.0
        %1877 = vmatprep.subr.mxu0 0.0
        %1878 = vmatpush1.msra.mxu0 %v1845
        %1879 = vmatprep.subr.mxu0 0.0
        %1880 = vmatpush1.msra.mxu0 %v1844
        %1881 = vmatprep.subr.mxu0 0.0
        %1882 = vmatpush2.msra.mxu0 0.0
        %1883 = vmatprep.subr.mxu0 0.0
        %1884 = vmatpush2.msra.mxu0 0.0
        %1885 = vmatprep.subr.mxu0 0.0
        %1886 = vmatpush2.msra.mxu0 0.0
        %1887 = vmatprep.subr.mxu0 0.0
        %1888 = vmatpush2.msra.mxu0 0.0
        %1889 = vmatprep.subr.mxu0 0.0
        %1890 = vmatpush2.msra.mxu0 0.0
        %1891 = vmatprep.subr.mxu0 0.0
        %1892 = vmatpush2.msra.mxu0 0.0
        %1893 = vmatprep.subr.mxu0 0.0
        %1894 = vmatpush2.msra.mxu0 0.0
        %1895 = vmatprep.subr.mxu0 0.0
        %1896 = vmatpush2.msra.mxu0 0.0
        %1897 = vmatprep.subr.mxu0 0.0
        %1898 = vmatpush2.msra.mxu0 0.0
        %1899 = vmatprep.subr.mxu0 0.0
        %1900 = vmatpush2.msra.mxu0 0.0
        %1901 = vmatprep.subr.mxu0 0.0
        %1902 = vmatpush2.msra.mxu0 0.0
        %1903 = vmatprep.subr.mxu0 0.0
        %1904 = vmatpush2.msra.mxu0 0.0
        %1905 = vmatprep.subr.mxu0 0.0
        %1906 = vmatpush2.msra.mxu0 0.0
        %1907 = vmatprep.subr.mxu0 0.0
        %1908 = vmatpush2.msra.mxu0 0.0
        %1909 = vmatprep.subr.mxu0 0.0
        %1910 = vmatpush2.msra.mxu0 0.0
        %1911 = vmatprep.subr.mxu0 0.0
        %1912 = vmatpush2.msra.mxu0 0.0
        %1913 = vmatprep.mubr.f32.mxu0 0.0
        %1914 = vmatmul.mubr.f32.gmra.mxu0 %v1847
        %v1915 = vpop.f32.mrf.mxu0
        %v1916 = vadd.f32 0.0, %v1915
        %v1917 = vpop.f32.mrf.mxu0
        %1918 = vdwg.mxu0
        %v1919 = vadd.f32 %v1253, %v1916
        %v1920 = vmul.f32 %v1919, %v1919
        %v1921 = vsel %vm393, %v1920, 0.0
        %1922 = vadd.xlane.f32.xlu0 %v1921
        %v1923 = vpop.xlane.xlu0 %1922
        %v1924 = vmul.f32 %v1923, %v397
        %v1925 = vadd.f32 %v1924, 1e-06
        %v1926 = vrsqrt.pop %v1925
        %v1927 = vmul.f32 %v1919, %v1926
        %v1928 = vlaneseq
        %v1929 = vshrl.u32 %v1928, 7
        %v1930 = vsub.s32 1, %v1929
        %v1931 = vrot.slane %v385, %v1930
        %v1932 = vmul.f32 %v1927, %v1931
        %s1933 = scalar_lea.vmem %s9, 32
        %v1934 = vld [vmem:[%s1933] sm:$0xff]
        %v1935 = vld [vmem:[%s1933 + $0x8] sm:$0xff]
        %v1936 = vld [vmem:[%s1933 + $0x10] sm:$0xff]
        %v1937 = vld [vmem:[%s1933 + $0x18] sm:$0xff]
        %v1939 = vsel %vm393, %v1932, 0
        %1941 = vmatprep.subr.mxu0 0.0
        %1942 = vmatpush1.msra.mxu0 0.0
        %1943 = vmatprep.subr.mxu0 0.0
        %1944 = vmatpush1.msra.mxu0 0.0
        %1945 = vmatprep.subr.mxu0 0.0
        %1946 = vmatpush1.msra.mxu0 0.0
        %1947 = vmatprep.subr.mxu0 0.0
        %1948 = vmatpush1.msra.mxu0 0.0
        %1949 = vmatprep.subr.mxu0 0.0
        %1950 = vmatpush1.msra.mxu0 0.0
        %1951 = vmatprep.subr.mxu0 0.0
        %1952 = vmatpush1.msra.mxu0 0.0
        %1953 = vmatprep.subr.mxu0 0.0
        %1954 = vmatpush1.msra.mxu0 0.0
        %1955 = vmatprep.subr.mxu0 0.0
        %1956 = vmatpush1.msra.mxu0 0.0
        %1957 = vmatprep.subr.mxu0 0.0
        %1958 = vmatpush1.msra.mxu0 0.0
        %1959 = vmatprep.subr.mxu0 0.0
        %1960 = vmatpush1.msra.mxu0 0.0
        %1961 = vmatprep.subr.mxu0 0.0
        %1962 = vmatpush1.msra.mxu0 0.0
        %1963 = vmatprep.subr.mxu0 0.0
        %1964 = vmatpush1.msra.mxu0 0.0
        %1965 = vmatprep.subr.mxu0 0.0
        %1966 = vmatpush1.msra.mxu0 %v1937
        %1967 = vmatprep.subr.mxu0 0.0
        %1968 = vmatpush1.msra.mxu0 %v1936
        %1969 = vmatprep.subr.mxu0 0.0
        %1970 = vmatpush1.msra.mxu0 %v1935
        %1971 = vmatprep.subr.mxu0 0.0
        %1972 = vmatpush1.msra.mxu0 %v1934
        %1973 = vmatprep.subr.mxu0 0.0
        %1974 = vmatpush2.msra.mxu0 0.0
        %1975 = vmatprep.subr.mxu0 0.0
        %1976 = vmatpush2.msra.mxu0 0.0
        %1977 = vmatprep.subr.mxu0 0.0
        %1978 = vmatpush2.msra.mxu0 0.0
        %1979 = vmatprep.subr.mxu0 0.0
        %1980 = vmatpush2.msra.mxu0 0.0
        %1981 = vmatprep.subr.mxu0 0.0
        %1982 = vmatpush2.msra.mxu0 0.0
        %1983 = vmatprep.subr.mxu0 0.0
        %1984 = vmatpush2.msra.mxu0 0.0
        %1985 = vmatprep.subr.mxu0 0.0
        %1986 = vmatpush2.msra.mxu0 0.0
        %1987 = vmatprep.subr.mxu0 0.0
        %1988 = vmatpush2.msra.mxu0 0.0
        %1989 = vmatprep.subr.mxu0 0.0
        %1990 = vmatpush2.msra.mxu0 0.0
        %1991 = vmatprep.subr.mxu0 0.0
        %1992 = vmatpush2.msra.mxu0 0.0
        %1993 = vmatprep.subr.mxu0 0.0
        %1994 = vmatpush2.msra.mxu0 0.0
        %1995 = vmatprep.subr.mxu0 0.0
        %1996 = vmatpush2.msra.mxu0 0.0
        %1997 = vmatprep.subr.mxu0 0.0
        %1998 = vmatpush2.msra.mxu0 0.0
        %1999 = vmatprep.subr.mxu0 0.0
        %2000 = vmatpush2.msra.mxu0 0.0
        %2001 = vmatprep.subr.mxu0 0.0
        %2002 = vmatpush2.msra.mxu0 0.0
        %2003 = vmatprep.subr.mxu0 0.0
        %2004 = vmatpush2.msra.mxu0 0.0
        %2005 = vmatprep.mubr.f32.mxu0 0.0
        %2006 = vmatmul.mubr.f32.gmra.mxu0 %v1939
        %v2007 = vpop.f32.mrf.mxu0
        %v2008 = vadd.f32 0.0, %v2007
        %v2009 = vpop.f32.mrf.mxu0
        %2010 = vdwg.mxu0
        %v2011 = vxor.u32 %v2008, 2147483648
        %v2012 = vmul.f32 %v2011, 1.442695
        %v2013 = vpow.pop %v2012
        %v2014 = vadd.f32 %v2013, 1.0
        %v2015 = vrcp.pop %v2014
        %v2016 = vmul.f32 1.0, %v2015
        %v2017 = vmul.f32 %v2008, %v2016
        %2019 = vrot.lane.b32.xlu0 %v2008, 80
        %v2020 = vpop.permute.xlu0 %2019
        %v2022 = vmul.f32 %v2017, %v2020
        %s2023 = scalar_lea.vmem %s10, 48
        %v2024 = vld [vmem:[%s2023] sm:$0xff]
        %v2025 = vld [vmem:[%s2023 + $0x8] sm:$0xff]
        %v2026 = vld [vmem:[%s2023 + $0x10] sm:$0xff]
        %v2027 = vld [vmem:[%s2023 + $0x18] sm:$0xff]
        %v2028 = vld [vmem:[%s2023 + $0x20] sm:$0xff]
        %v2029 = vld [vmem:[%s2023 + $0x28] sm:$0xff]
        %v2031 = vsel %vm1179, %v2022, 0
        %2033 = vmatprep.subr.mxu0 0.0
        %2034 = vmatpush1.msra.mxu0 0.0
        %2035 = vmatprep.subr.mxu0 0.0
        %2036 = vmatpush1.msra.mxu0 0.0
        %2037 = vmatprep.subr.mxu0 0.0
        %2038 = vmatpush1.msra.mxu0 0.0
        %2039 = vmatprep.subr.mxu0 0.0
        %2040 = vmatpush1.msra.mxu0 0.0
        %2041 = vmatprep.subr.mxu0 0.0
        %2042 = vmatpush1.msra.mxu0 0.0
        %2043 = vmatprep.subr.mxu0 0.0
        %2044 = vmatpush1.msra.mxu0 0.0
        %2045 = vmatprep.subr.mxu0 0.0
        %2046 = vmatpush1.msra.mxu0 0.0
        %2047 = vmatprep.subr.mxu0 0.0
        %2048 = vmatpush1.msra.mxu0 0.0
        %2049 = vmatprep.subr.mxu0 0.0
        %2050 = vmatpush1.msra.mxu0 0.0
        %2051 = vmatprep.subr.mxu0 0.0
        %2052 = vmatpush1.msra.mxu0 0.0
        %2053 = vmatprep.subr.mxu0 0.0
        %2054 = vmatpush1.msra.mxu0 %v2029
        %2055 = vmatprep.subr.mxu0 0.0
        %2056 = vmatpush1.msra.mxu0 %v2028
        %2057 = vmatprep.subr.mxu0 0.0
        %2058 = vmatpush1.msra.mxu0 %v2027
        %2059 = vmatprep.subr.mxu0 0.0
        %2060 = vmatpush1.msra.mxu0 %v2026
        %2061 = vmatprep.subr.mxu0 0.0
        %2062 = vmatpush1.msra.mxu0 %v2025
        %2063 = vmatprep.subr.mxu0 0.0
        %2064 = vmatpush1.msra.mxu0 %v2024
        %2065 = vmatprep.subr.mxu0 0.0
        %2066 = vmatpush2.msra.mxu0 0.0
        %2067 = vmatprep.subr.mxu0 0.0
        %2068 = vmatpush2.msra.mxu0 0.0
        %2069 = vmatprep.subr.mxu0 0.0
        %2070 = vmatpush2.msra.mxu0 0.0
        %2071 = vmatprep.subr.mxu0 0.0
        %2072 = vmatpush2.msra.mxu0 0.0
        %2073 = vmatprep.subr.mxu0 0.0
        %2074 = vmatpush2.msra.mxu0 0.0
        %2075 = vmatprep.subr.mxu0 0.0
        %2076 = vmatpush2.msra.mxu0 0.0
        %2077 = vmatprep.subr.mxu0 0.0
        %2078 = vmatpush2.msra.mxu0 0.0
        %2079 = vmatprep.subr.mxu0 0.0
        %2080 = vmatpush2.msra.mxu0 0.0
        %2081 = vmatprep.subr.mxu0 0.0
        %2082 = vmatpush2.msra.mxu0 0.0
        %2083 = vmatprep.subr.mxu0 0.0
        %2084 = vmatpush2.msra.mxu0 0.0
        %2085 = vmatprep.subr.mxu0 0.0
        %2086 = vmatpush2.msra.mxu0 0.0
        %2087 = vmatprep.subr.mxu0 0.0
        %2088 = vmatpush2.msra.mxu0 0.0
        %2089 = vmatprep.subr.mxu0 0.0
        %2090 = vmatpush2.msra.mxu0 0.0
        %2091 = vmatprep.subr.mxu0 0.0
        %2092 = vmatpush2.msra.mxu0 0.0
        %2093 = vmatprep.subr.mxu0 0.0
        %2094 = vmatpush2.msra.mxu0 0.0
        %2095 = vmatprep.subr.mxu0 0.0
        %2096 = vmatpush2.msra.mxu0 0.0
        %2097 = vmatprep.mubr.f32.mxu0 0.0
        %2098 = vmatmul.mubr.f32.gmra.mxu0 %v2031
        %v2099 = vpop.f32.mrf.mxu0
        %v2100 = vadd.f32 0.0, %v2099
        %v2101 = vpop.f32.mrf.mxu0
        %2102 = vdwg.mxu0
        %v2103 = vadd.f32 %v1919, %v2100
        %v2104 = vsel %vm393, %v2103, 0.0
        %v2105 = vrot.slane %v2104, 4
        %v2106 = vadd.f32 %v2104, %v2105
        %v2107 = vrot.slane %v2106, 2
        %v2108 = vadd.f32 %v2106, %v2107
        %v2109 = vrot.slane %v2108, 1
        %v2110 = vadd.f32 %v2108, %v2109
        %v2111 = vrcp.pop 8.0
        %v2112 = vmul.f32 %v2110, %v2111
        %vm2113 = vcmask 253952
        %2114 = vst.msk [vmem:[%s376] sm:$0x1] %vm2113, %v2112
        %s2115 = sand.u32 %s269, 1
        %s2116 = scalar_lea.sflag [#allocation3], %s2115
        %s2117 = sand.u32 %s269, 1
        %s2118 = scalar_lea.vmem [#allocation2], %s2117
        // Predicated region
        $region65: #{siglip_forward.3} parent=63 // pred_check
          %p2119 = pneg %p279
        $region66: #{siglip_forward.3} parent=63 // pred_check_branch
          %2121 = sbr.rel (%p2119) target = $region68
        $region67: #{siglip_forward.3} parent=63 // pred_region
          %s2123 = ssub.s32 16, 16
          %2124 = vsyncadd %s2116, %s2123
          %s2125 = smul.addr %s25, 16
          %s2126 = scalar_lea.hbm %s11, %s2125
          %s2128 = sshll.u32 %s2118, 4
          %s2129 = int_to_ptr.vmem [resolvable:$true] %s2128
          %2131 = dma.vmem_to_hbm [thread:$0]  %s2129, 16, %s2126, %s2116
        $region68: #{siglip_forward.3} parent=63 // pred_fallthru
          _
      $region64: #{siglip_forward.3} parent=5 // pred_fallthru
        _
      %p2132 = scmp.le.s32.totalorder 2, %s20
      // Predicated region
      $region69: #{siglip_forward.3} parent=5 // pred_check
        %p2133 = pneg %p2132
      $region70: #{siglip_forward.3} parent=5 // pred_check_branch
        %2135 = sbr.rel (%p2133) target = $region72
      $region71: #{siglip_forward.3} parent=5 // pred_region
        %s2136 = ssub.s32 %s20, 2
        // Predicated region
        $region73: #{siglip_forward.3} parent=71 // pred_check
          %p2137 = pneg %p285
        $region74: #{siglip_forward.3} parent=71 // pred_check_branch
          %2139 = sbr.rel (%p2137) target = $region76
        $region75: #{siglip_forward.3} parent=71 // pred_region
          %s2140 = sand.u32 %s270, 1
          %s2141 = scalar_lea.sflag [#allocation3], %s2140
          %s2142 = sand.u32 %s270, 1
          %s2143 = scalar_lea.vmem [#allocation2], %s2142
          %2144 = dma.done %s2141, 16
        $region76: #{siglip_forward.3} parent=71 // pred_fallthru
          _
      $region72: #{siglip_forward.3} parent=5 // pred_fallthru
        _
    $region6: #{siglip_forward.3} parent=1 // loop_footer
      %s24 = sadd.s32 1, %s20
    $region7: #{siglip_forward.3} parent=1 // loop_footer_branch
      %19 = sbr.rel target = $region3
    $region8: #{siglip_forward.3} parent=1 // loop_exit
      _
    %2145 = vsyncpa [#allocation3], 1
    %s2146 = scalar_lea.sflag [#allocation3], 1
    %2147 = vsyncpa %s2146, 1

// kernel: siglip_forward.2
$region0: #{siglip_forward.2}
  #allocation0 [shape = 'u32[]', space=smem, size = 0x4, offset = 0x4, fixed_abs, tag = 'smem constant byte address 0x4 - core index']
  #allocation1 [shape = 'u32[144,128]{1,0:T(1,128)}', space=vmem, size = 0x12000, scoped, tag = 'internal scratch']
  #allocation2 [shape = 'f32[5,32]{1,0:T(8,128)}', space=vmem, size = 0x1000, scoped, tag = 'scratch operand']
  %s0 = inlined_call_operand.vmem [shape: f32[2,4,192], index: 0, kind: input, shape index: {}]
  %s1 = inlined_call_operand.vmem [shape: f32[1,192], index: 1, kind: input, shape index: {}]
  %s2 = inlined_call_operand.vmem [shape: f32[192,32], index: 2, kind: input, shape index: {}]
  %s3 = inlined_call_operand.vmem [shape: f32[1,32], index: 3, kind: input, shape index: {}]
  %s4 = inlined_call_operand.vmem [shape: f32[1,32], index: 4, kind: input, shape index: {}]
  %s5 = inlined_call_operand.vmem [shape: f32[5,8], index: 5, kind: input, shape index: {}]
  %s6 = inlined_call_operand.vmem [shape: f32[5,8], index: 6, kind: input, shape index: {}]
  %s7 = inlined_call_operand.vmem [shape: f32[2,32], index: 7, kind: input, shape index: {}]
  %s8 = inlined_call_operand.vmem [shape: f32[2,32], index: 8, kind: input, shape index: {}]
  %s9 = inlined_call_operand.vmem [shape: f32[2,16], index: 9, kind: input, shape index: {}]
  %s10 = inlined_call_operand.vmem [shape: f32[2,32,56], index: 10, kind: input, shape index: {}]
  %s11 = inlined_call_operand.vmem [shape: f32[2,16,32], index: 11, kind: input, shape index: {}]
  %s12 = inlined_call_operand.vmem [shape: f32[2,16,32], index: 12, kind: input, shape index: {}]
  %s13 = inlined_call_operand.vmem [shape: f32[2,32,96], index: 13, kind: input, shape index: {}]
  %s14 = inlined_call_operand.vmem [shape: f32[2,48,32], index: 14, kind: input, shape index: {}]
  %s15 = inlined_call_operand.hbm [shape: f32[2,1,32], index: 15, kind: output, shape index: {}]
  %s16 = sld [smem:[#allocation0]]
  $region93: #{siglip_forward.2} parent=0
    _
  %s18 = ssub.s32 1, %s16
  %s19 = scalar_select 0, %s18, %s16
  $region1: #{siglip_forward.2} parent=0
    #allocation3 [shape = 'u8[1024]{0}', space=vmem, size = 0x400, scoped, tag = 'output window, operand 0']
    #allocation4 [shape = 's32[2]{0}', space=sflag, size = 0x8, scoped, tag = 'scoped memory for siglip_forward.2']
    %20 = vsyncpa [#allocation4], 0
    %s21 = scalar_lea.sflag [#allocation4], 1
    %22 = vsyncpa %s21, 0
    loop: start=0, step=1, limit=4
    $region2: #{siglip_forward.2} parent=1 // loop_pre_header
      _
    $region3: #{siglip_forward.2} parent=1 // loop_header
      %s24 = sphi 0, %s28
      %p25 = scmp.ge.s32.totalorder %s24, 4
      %s34 = sphi 0, %s36
      %s37 = sphi 0, %s34
      %s38 = sphi 0, %s37
      %s54 = sphi 0, %s38
      %s58 = sphi 0, %s58
      %s60 = sphi 0, %s58
      %s61 = sphi 0, %s60
      %s75 = sphi 0, %s61
      %s79 = sphi 0, %s79
      %s81 = sphi 0, %s79
      %s82 = sphi 0, %s81
      %s96 = sphi 0, %s82
      %s100 = sphi 0, %s100
      %s102 = sphi 0, %s100
      %s103 = sphi 0, %s102
      %s117 = sphi 0, %s103
      %s121 = sphi 0, %s121
      %s123 = sphi 0, %s121
      %s124 = sphi 0, %s123
      %s138 = sphi 0, %s124
      %s142 = sphi 0, %s142
      %s144 = sphi 0, %s142
      %s145 = sphi 0, %s144
      %s159 = sphi 0, %s145
      %s163 = sphi 0, %s163
      %s165 = sphi 0, %s163
      %s166 = sphi 0, %s165
      %s180 = sphi 0, %s166
      %s184 = sphi 0, %s184
      %s186 = sphi 0, %s184
      %s187 = sphi 0, %s186
      %s201 = sphi 0, %s187
      %s205 = sphi 0, %s205
      %s207 = sphi 0, %s205
      %s208 = sphi 0, %s207
      %s222 = sphi 0, %s208
      %s226 = sphi 0, %s226
      %s228 = sphi 0, %s226
      %s229 = sphi 0, %s228
      %s243 = sphi 0, %s229
      %s247 = sphi 0, %s247
      %s249 = sphi 0, %s247
      %s250 = sphi 0, %s249
      %s264 = sphi 0, %s250
      %s268 = sphi 0, %s268
      %s270 = sphi 0, %s268
      %s271 = sphi 0, %s270
      %s285 = sphi 0, %s271
      %s289 = sphi 0, %s289
      %s291 = sphi 0, %s289
      %s292 = sphi 0, %s291
      %s306 = sphi 0, %s292
      %s310 = sphi 0, %s310
      %s312 = sphi 0, %s310
      %s313 = sphi 0, %s312
      %s327 = sphi 0, %s313
      %s331 = sphi 0, %s331
      %s333 = sphi 0, %s331
      %s334 = sphi 0, %s333
      %s348 = sphi 0, %s334
      %s354 = sphi 0, %s356
      %s357 = sphi 0, %s354
      %s358 = sphi 0, %s357
      %s374 = sphi 0, %s358
    $region4: #{siglip_forward.2} parent=1 // loop_header_branch
      %27 = sbr.rel (%p25) target = $region8
    $region5: #{siglip_forward.2} parent=1 // loop_body
      %s29 = ssub.s32 %s24, 1
      %s30 = ssub.s32 %s24, 2
      %s31 = sadd.s32 %s24, 1
      %s32 = ssub.s32 %s24, %s31
      %p33 = scmp.eq.s32.totalorder %s32, 0
      %s35 = sadd.s32 %s34, 1
      %s36 = scalar_select %p33, %s34, %s35
      %p39 = pneg %p33
      %p40 = scmp.eq.s32.totalorder %s24, 1
      %p41 = por %p39, %p40
      %p42 = scmp.ne.s32.totalorder %s34, %s37
      %p43 = scmp.eq.s32.totalorder %s24, 0
      %p44 = por %p42, %p43
      %p45 = scmp.ne.s32.totalorder %s34, %s37
      %p46 = scmp.eq.s32.totalorder %s29, 1
      %p47 = por %p45, %p46
      %p48 = scmp.ne.s32.totalorder %s37, %s38
      %p49 = scmp.eq.s32.totalorder %s29, 0
      %p50 = por %p48, %p49
      %p51 = scmp.ne.s32.totalorder %s37, %s38
      %p52 = scmp.eq.s32.totalorder %s30, 1
      %p53 = por %p51, %p52
      %p55 = scmp.ne.s32.totalorder %s38, %s54
      %p56 = scmp.eq.s32.totalorder %s30, 0
      %p57 = por %p55, %p56
      %s59 = sadd.s32 %s58, 1
      %p62 = scmp.eq.s32.totalorder %s24, 1
      %p63 = scmp.ne.s32.totalorder %s58, %s60
      %p64 = scmp.eq.s32.totalorder %s24, 0
      %p65 = por %p63, %p64
      %p66 = scmp.ne.s32.totalorder %s58, %s60
      %p67 = scmp.eq.s32.totalorder %s29, 1
      %p68 = por %p66, %p67
      %p69 = scmp.ne.s32.totalorder %s60, %s61
      %p70 = scmp.eq.s32.totalorder %s29, 0
      %p71 = por %p69, %p70
      %p72 = scmp.ne.s32.totalorder %s60, %s61
      %p73 = scmp.eq.s32.totalorder %s30, 1
      %p74 = por %p72, %p73
      %p76 = scmp.ne.s32.totalorder %s61, %s75
      %p77 = scmp.eq.s32.totalorder %s30, 0
      %p78 = por %p76, %p77
      %s80 = sadd.s32 %s79, 1
      %p83 = scmp.eq.s32.totalorder %s24, 1
      %p84 = scmp.ne.s32.totalorder %s79, %s81
      %p85 = scmp.eq.s32.totalorder %s24, 0
      %p86 = por %p84, %p85
      %p87 = scmp.ne.s32.totalorder %s79, %s81
      %p88 = scmp.eq.s32.totalorder %s29, 1
      %p89 = por %p87, %p88
      %p90 = scmp.ne.s32.totalorder %s81, %s82
      %p91 = scmp.eq.s32.totalorder %s29, 0
      %p92 = por %p90, %p91
      %p93 = scmp.ne.s32.totalorder %s81, %s82
      %p94 = scmp.eq.s32.totalorder %s30, 1
      %p95 = por %p93, %p94
      %p97 = scmp.ne.s32.totalorder %s82, %s96
      %p98 = scmp.eq.s32.totalorder %s30, 0
      %p99 = por %p97, %p98
      %s101 = sadd.s32 %s100, 1
      %p104 = scmp.eq.s32.totalorder %s24, 1
      %p105 = scmp.ne.s32.totalorder %s100, %s102
      %p106 = scmp.eq.s32.totalorder %s24, 0
      %p107 = por %p105, %p106
      %p108 = scmp.ne.s32.totalorder %s100, %s102
      %p109 = scmp.eq.s32.totalorder %s29, 1
      %p110 = por %p108, %p109
      %p111 = scmp.ne.s32.totalorder %s102, %s103
      %p112 = scmp.eq.s32.totalorder %s29, 0
      %p113 = por %p111, %p112
      %p114 = scmp.ne.s32.totalorder %s102, %s103
      %p115 = scmp.eq.s32.totalorder %s30, 1
      %p116 = por %p114, %p115
      %p118 = scmp.ne.s32.totalorder %s103, %s117
      %p119 = scmp.eq.s32.totalorder %s30, 0
      %p120 = por %p118, %p119
      %s122 = sadd.s32 %s121, 1
      %p125 = scmp.eq.s32.totalorder %s24, 1
      %p126 = scmp.ne.s32.totalorder %s121, %s123
      %p127 = scmp.eq.s32.totalorder %s24, 0
      %p128 = por %p126, %p127
      %p129 = scmp.ne.s32.totalorder %s121, %s123
      %p130 = scmp.eq.s32.totalorder %s29, 1
      %p131 = por %p129, %p130
      %p132 = scmp.ne.s32.totalorder %s123, %s124
      %p133 = scmp.eq.s32.totalorder %s29, 0
      %p134 = por %p132, %p133
      %p135 = scmp.ne.s32.totalorder %s123, %s124
      %p136 = scmp.eq.s32.totalorder %s30, 1
      %p137 = por %p135, %p136
      %p139 = scmp.ne.s32.totalorder %s124, %s138
      %p140 = scmp.eq.s32.totalorder %s30, 0
      %p141 = por %p139, %p140
      %s143 = sadd.s32 %s142, 1
      %p146 = scmp.eq.s32.totalorder %s24, 1
      %p147 = scmp.ne.s32.totalorder %s142, %s144
      %p148 = scmp.eq.s32.totalorder %s24, 0
      %p149 = por %p147, %p148
      %p150 = scmp.ne.s32.totalorder %s142, %s144
      %p151 = scmp.eq.s32.totalorder %s29, 1
      %p152 = por %p150, %p151
      %p153 = scmp.ne.s32.totalorder %s144, %s145
      %p154 = scmp.eq.s32.totalorder %s29, 0
      %p155 = por %p153, %p154
      %p156 = scmp.ne.s32.totalorder %s144, %s145
      %p157 = scmp.eq.s32.totalorder %s30, 1
      %p158 = por %p156, %p157
      %p160 = scmp.ne.s32.totalorder %s145, %s159
      %p161 = scmp.eq.s32.totalorder %s30, 0
      %p162 = por %p160, %p161
      %s164 = sadd.s32 %s163, 1
      %p167 = scmp.eq.s32.totalorder %s24, 1
      %p168 = scmp.ne.s32.totalorder %s163, %s165
      %p169 = scmp.eq.s32.totalorder %s24, 0
      %p170 = por %p168, %p169
      %p171 = scmp.ne.s32.totalorder %s163, %s165
      %p172 = scmp.eq.s32.totalorder %s29, 1
      %p173 = por %p171, %p172
      %p174 = scmp.ne.s32.totalorder %s165, %s166
      %p175 = scmp.eq.s32.totalorder %s29, 0
      %p176 = por %p174, %p175
      %p177 = scmp.ne.s32.totalorder %s165, %s166
      %p178 = scmp.eq.s32.totalorder %s30, 1
      %p179 = por %p177, %p178
      %p181 = scmp.ne.s32.totalorder %s166, %s180
      %p182 = scmp.eq.s32.totalorder %s30, 0
      %p183 = por %p181, %p182
      %s185 = sadd.s32 %s184, 1
      %p188 = scmp.eq.s32.totalorder %s24, 1
      %p189 = scmp.ne.s32.totalorder %s184, %s186
      %p190 = scmp.eq.s32.totalorder %s24, 0
      %p191 = por %p189, %p190
      %p192 = scmp.ne.s32.totalorder %s184, %s186
      %p193 = scmp.eq.s32.totalorder %s29, 1
      %p194 = por %p192, %p193
      %p195 = scmp.ne.s32.totalorder %s186, %s187
      %p196 = scmp.eq.s32.totalorder %s29, 0
      %p197 = por %p195, %p196
      %p198 = scmp.ne.s32.totalorder %s186, %s187
      %p199 = scmp.eq.s32.totalorder %s30, 1
      %p200 = por %p198, %p199
      %p202 = scmp.ne.s32.totalorder %s187, %s201
      %p203 = scmp.eq.s32.totalorder %s30, 0
      %p204 = por %p202, %p203
      %s206 = sadd.s32 %s205, 1
      %p209 = scmp.eq.s32.totalorder %s24, 1
      %p210 = scmp.ne.s32.totalorder %s205, %s207
      %p211 = scmp.eq.s32.totalorder %s24, 0
      %p212 = por %p210, %p211
      %p213 = scmp.ne.s32.totalorder %s205, %s207
      %p214 = scmp.eq.s32.totalorder %s29, 1
      %p215 = por %p213, %p214
      %p216 = scmp.ne.s32.totalorder %s207, %s208
      %p217 = scmp.eq.s32.totalorder %s29, 0
      %p218 = por %p216, %p217
      %p219 = scmp.ne.s32.totalorder %s207, %s208
      %p220 = scmp.eq.s32.totalorder %s30, 1
      %p221 = por %p219, %p220
      %p223 = scmp.ne.s32.totalorder %s208, %s222
      %p224 = scmp.eq.s32.totalorder %s30, 0
      %p225 = por %p223, %p224
      %s227 = sadd.s32 %s226, 1
      %p230 = scmp.eq.s32.totalorder %s24, 1
      %p231 = scmp.ne.s32.totalorder %s226, %s228
      %p232 = scmp.eq.s32.totalorder %s24, 0
      %p233 = por %p231, %p232
      %p234 = scmp.ne.s32.totalorder %s226, %s228
      %p235 = scmp.eq.s32.totalorder %s29, 1
      %p236 = por %p234, %p235
      %p237 = scmp.ne.s32.totalorder %s228, %s229
      %p238 = scmp.eq.s32.totalorder %s29, 0
      %p239 = por %p237, %p238
      %p240 = scmp.ne.s32.totalorder %s228, %s229
      %p241 = scmp.eq.s32.totalorder %s30, 1
      %p242 = por %p240, %p241
      %p244 = scmp.ne.s32.totalorder %s229, %s243
      %p245 = scmp.eq.s32.totalorder %s30, 0
      %p246 = por %p244, %p245
      %s248 = sadd.s32 %s247, 1
      %p251 = scmp.eq.s32.totalorder %s24, 1
      %p252 = scmp.ne.s32.totalorder %s247, %s249
      %p253 = scmp.eq.s32.totalorder %s24, 0
      %p254 = por %p252, %p253
      %p255 = scmp.ne.s32.totalorder %s247, %s249
      %p256 = scmp.eq.s32.totalorder %s29, 1
      %p257 = por %p255, %p256
      %p258 = scmp.ne.s32.totalorder %s249, %s250
      %p259 = scmp.eq.s32.totalorder %s29, 0
      %p260 = por %p258, %p259
      %p261 = scmp.ne.s32.totalorder %s249, %s250
      %p262 = scmp.eq.s32.totalorder %s30, 1
      %p263 = por %p261, %p262
      %p265 = scmp.ne.s32.totalorder %s250, %s264
      %p266 = scmp.eq.s32.totalorder %s30, 0
      %p267 = por %p265, %p266
      %s269 = sadd.s32 %s268, 1
      %p272 = scmp.eq.s32.totalorder %s24, 1
      %p273 = scmp.ne.s32.totalorder %s268, %s270
      %p274 = scmp.eq.s32.totalorder %s24, 0
      %p275 = por %p273, %p274
      %p276 = scmp.ne.s32.totalorder %s268, %s270
      %p277 = scmp.eq.s32.totalorder %s29, 1
      %p278 = por %p276, %p277
      %p279 = scmp.ne.s32.totalorder %s270, %s271
      %p280 = scmp.eq.s32.totalorder %s29, 0
      %p281 = por %p279, %p280
      %p282 = scmp.ne.s32.totalorder %s270, %s271
      %p283 = scmp.eq.s32.totalorder %s30, 1
      %p284 = por %p282, %p283
      %p286 = scmp.ne.s32.totalorder %s271, %s285
      %p287 = scmp.eq.s32.totalorder %s30, 0
      %p288 = por %p286, %p287
      %s290 = sadd.s32 %s289, 1
      %p293 = scmp.eq.s32.totalorder %s24, 1
      %p294 = scmp.ne.s32.totalorder %s289, %s291
      %p295 = scmp.eq.s32.totalorder %s24, 0
      %p296 = por %p294, %p295
      %p297 = scmp.ne.s32.totalorder %s289, %s291
      %p298 = scmp.eq.s32.totalorder %s29, 1
      %p299 = por %p297, %p298
      %p300 = scmp.ne.s32.totalorder %s291, %s292
      %p301 = scmp.eq.s32.totalorder %s29, 0
      %p302 = por %p300, %p301
      %p303 = scmp.ne.s32.totalorder %s291, %s292
      %p304 = scmp.eq.s32.totalorder %s30, 1
      %p305 = por %p303, %p304
      %p307 = scmp.ne.s32.totalorder %s292, %s306
      %p308 = scmp.eq.s32.totalorder %s30, 0
      %p309 = por %p307, %p308
      %s311 = sadd.s32 %s310, 1
      %p314 = scmp.eq.s32.totalorder %s24, 1
      %p315 = scmp.ne.s32.totalorder %s310, %s312
      %p316 = scmp.eq.s32.totalorder %s24, 0
      %p317 = por %p315, %p316
      %p318 = scmp.ne.s32.totalorder %s310, %s312
      %p319 = scmp.eq.s32.totalorder %s29, 1
      %p320 = por %p318, %p319
      %p321 = scmp.ne.s32.totalorder %s312, %s313
      %p322 = scmp.eq.s32.totalorder %s29, 0
      %p323 = por %p321, %p322
      %p324 = scmp.ne.s32.totalorder %s312, %s313
      %p325 = scmp.eq.s32.totalorder %s30, 1
      %p326 = por %p324, %p325
      %p328 = scmp.ne.s32.totalorder %s313, %s327
      %p329 = scmp.eq.s32.totalorder %s30, 0
      %p330 = por %p328, %p329
      %s332 = sadd.s32 %s331, 1
      %p335 = scmp.eq.s32.totalorder %s24, 1
      %p336 = scmp.ne.s32.totalorder %s331, %s333
      %p337 = scmp.eq.s32.totalorder %s24, 0
      %p338 = por %p336, %p337
      %p339 = scmp.ne.s32.totalorder %s331, %s333
      %p340 = scmp.eq.s32.totalorder %s29, 1
      %p341 = por %p339, %p340
      %p342 = scmp.ne.s32.totalorder %s333, %s334
      %p343 = scmp.eq.s32.totalorder %s29, 0
      %p344 = por %p342, %p343
      %p345 = scmp.ne.s32.totalorder %s333, %s334
      %p346 = scmp.eq.s32.totalorder %s30, 1
      %p347 = por %p345, %p346
      %p349 = scmp.ne.s32.totalorder %s334, %s348
      %p350 = scmp.eq.s32.totalorder %s30, 0
      %p351 = por %p349, %p350
      %s352 = ssub.s32 %s24, %s31
      %p353 = scmp.eq.s32.totalorder %s352, 0
      %s355 = sadd.s32 %s354, 1
      %s356 = scalar_select %p353, %s354, %s355
      %p359 = pneg %p353
      %p360 = scmp.eq.s32.totalorder %s24, 1
      %p361 = por %p359, %p360
      %p362 = scmp.ne.s32.totalorder %s354, %s357
      %p363 = scmp.eq.s32.totalorder %s24, 0
      %p364 = por %p362, %p363
      %p365 = scmp.ne.s32.totalorder %s354, %s357
      %p366 = scmp.eq.s32.totalorder %s29, 1
      %p367 = por %p365, %p366
      %p368 = scmp.ne.s32.totalorder %s357, %s358
      %p369 = scmp.eq.s32.totalorder %s29, 0
      %p370 = por %p368, %p369
      %p371 = scmp.ne.s32.totalorder %s357, %s358
      %p372 = scmp.eq.s32.totalorder %s30, 1
      %p373 = por %p371, %p372
      %p375 = scmp.ne.s32.totalorder %s358, %s374
      %p376 = scmp.eq.s32.totalorder %s30, 0
      %p377 = por %p375, %p376
      %p378 = scmp.le.s32.totalorder 1, %s24
      %p379 = scmp.lt.s32.totalorder %s24, 3
      %p380 = pnand %p378, %p379
      %p381 = pneg %p380
      // Predicated region
      $region9: #{siglip_forward.2} parent=5 // pred_check
        _
      $region10: #{siglip_forward.2} parent=5 // pred_check_branch
        %383 = sbr.rel (%p380) target = $region12
      $region11: #{siglip_forward.2} parent=5 // pred_region
        %s384 = ssub.s32 %s24, 1
        // Predicated region
        $region13: #{siglip_forward.2} parent=11 // pred_check
          %p385 = pneg %p71
        $region14: #{siglip_forward.2} parent=11 // pred_check_branch
          %387 = sbr.rel (%p385) target = $region16
        $region15: #{siglip_forward.2} parent=11 // pred_region
          _
        $region16: #{siglip_forward.2} parent=11 // pred_fallthru
          _
        // Predicated region
        $region17: #{siglip_forward.2} parent=11 // pred_check
          %p388 = pneg %p92
        $region18: #{siglip_forward.2} parent=11 // pred_check_branch
          %390 = sbr.rel (%p388) target = $region20
        $region19: #{siglip_forward.2} parent=11 // pred_region
          _
        $region20: #{siglip_forward.2} parent=11 // pred_fallthru
          _
        // Predicated region
        $region21: #{siglip_forward.2} parent=11 // pred_check
          %p391 = pneg %p113
        $region22: #{siglip_forward.2} parent=11 // pred_check_branch
          %393 = sbr.rel (%p391) target = $region24
        $region23: #{siglip_forward.2} parent=11 // pred_region
          _
        $region24: #{siglip_forward.2} parent=11 // pred_fallthru
          _
        // Predicated region
        $region25: #{siglip_forward.2} parent=11 // pred_check
          %p394 = pneg %p134
        $region26: #{siglip_forward.2} parent=11 // pred_check_branch
          %396 = sbr.rel (%p394) target = $region28
        $region27: #{siglip_forward.2} parent=11 // pred_region
          _
        $region28: #{siglip_forward.2} parent=11 // pred_fallthru
          _
        // Predicated region
        $region29: #{siglip_forward.2} parent=11 // pred_check
          %p397 = pneg %p155
        $region30: #{siglip_forward.2} parent=11 // pred_check_branch
          %399 = sbr.rel (%p397) target = $region32
        $region31: #{siglip_forward.2} parent=11 // pred_region
          _
        $region32: #{siglip_forward.2} parent=11 // pred_fallthru
          _
        // Predicated region
        $region33: #{siglip_forward.2} parent=11 // pred_check
          %p400 = pneg %p176
        $region34: #{siglip_forward.2} parent=11 // pred_check_branch
          %402 = sbr.rel (%p400) target = $region36
        $region35: #{siglip_forward.2} parent=11 // pred_region
          _
        $region36: #{siglip_forward.2} parent=11 // pred_fallthru
          _
        // Predicated region
        $region37: #{siglip_forward.2} parent=11 // pred_check
          %p403 = pneg %p197
        $region38: #{siglip_forward.2} parent=11 // pred_check_branch
          %405 = sbr.rel (%p403) target = $region40
        $region39: #{siglip_forward.2} parent=11 // pred_region
          _
        $region40: #{siglip_forward.2} parent=11 // pred_fallthru
          _
        // Predicated region
        $region41: #{siglip_forward.2} parent=11 // pred_check
          %p406 = pneg %p218
        $region42: #{siglip_forward.2} parent=11 // pred_check_branch
          %408 = sbr.rel (%p406) target = $region44
        $region43: #{siglip_forward.2} parent=11 // pred_region
          _
        $region44: #{siglip_forward.2} parent=11 // pred_fallthru
          _
        // Predicated region
        $region45: #{siglip_forward.2} parent=11 // pred_check
          %p409 = pneg %p239
        $region46: #{siglip_forward.2} parent=11 // pred_check_branch
          %411 = sbr.rel (%p409) target = $region48
        $region47: #{siglip_forward.2} parent=11 // pred_region
          _
        $region48: #{siglip_forward.2} parent=11 // pred_fallthru
          _
        // Predicated region
        $region49: #{siglip_forward.2} parent=11 // pred_check
          %p412 = pneg %p260
        $region50: #{siglip_forward.2} parent=11 // pred_check_branch
          %414 = sbr.rel (%p412) target = $region52
        $region51: #{siglip_forward.2} parent=11 // pred_region
          _
        $region52: #{siglip_forward.2} parent=11 // pred_fallthru
          _
        // Predicated region
        $region53: #{siglip_forward.2} parent=11 // pred_check
          %p415 = pneg %p281
        $region54: #{siglip_forward.2} parent=11 // pred_check_branch
          %417 = sbr.rel (%p415) target = $region56
        $region55: #{siglip_forward.2} parent=11 // pred_region
          _
        $region56: #{siglip_forward.2} parent=11 // pred_fallthru
          _
        // Predicated region
        $region57: #{siglip_forward.2} parent=11 // pred_check
          %p418 = pneg %p302
        $region58: #{siglip_forward.2} parent=11 // pred_check_branch
          %420 = sbr.rel (%p418) target = $region60
        $region59: #{siglip_forward.2} parent=11 // pred_region
          _
        $region60: #{siglip_forward.2} parent=11 // pred_fallthru
          _
        // Predicated region
        $region61: #{siglip_forward.2} parent=11 // pred_check
          %p421 = pneg %p323
        $region62: #{siglip_forward.2} parent=11 // pred_check_branch
          %423 = sbr.rel (%p421) target = $region64
        $region63: #{siglip_forward.2} parent=11 // pred_region
          _
        $region64: #{siglip_forward.2} parent=11 // pred_fallthru
          _
        // Predicated region
        $region65: #{siglip_forward.2} parent=11 // pred_check
          %p424 = pneg %p344
        $region66: #{siglip_forward.2} parent=11 // pred_check_branch
          %426 = sbr.rel (%p424) target = $region68
        $region67: #{siglip_forward.2} parent=11 // pred_region
          _
        $region68: #{siglip_forward.2} parent=11 // pred_fallthru
          _
      $region12: #{siglip_forward.2} parent=5 // pred_fallthru
        _
      %p427 = scmp.lt.s32.totalorder %s24, 2
      // Predicated region
      $region69: #{siglip_forward.2} parent=5 // pred_check
        %p428 = pneg %p427
      $region70: #{siglip_forward.2} parent=5 // pred_check_branch
        %430 = sbr.rel (%p428) target = $region72
      $region71: #{siglip_forward.2} parent=5 // pred_region
        // Predicated region
        $region73: #{siglip_forward.2} parent=71 // pred_check
          %p431 = pneg %p44
        $region74: #{siglip_forward.2} parent=71 // pred_check_branch
          %433 = sbr.rel (%p431) target = $region76
        $region75: #{siglip_forward.2} parent=71 // pred_region
          %p434 = scmp.lt.s32.totalorder %s24, 1
          %s435 = scalar_select %p434, %s24, 1
          %s436 = smul.addr %s435, 2
          %s437 = smul.addr %s436, 4
          %s438 = scalar_lea.vmem %s0, %s437
        $region76: #{siglip_forward.2} parent=71 // pred_fallthru
          _
      $region72: #{siglip_forward.2} parent=5 // pred_fallthru
        _
      %p439 = scmp.le.s32.totalorder 1, %s24
      %p440 = scmp.lt.s32.totalorder %s24, 3
      %p441 = pnand %p439, %p440
      %p442 = pneg %p441
      // Predicated region
      $region77: #{siglip_forward.2} parent=5 // pred_check
        _
      $region78: #{siglip_forward.2} parent=5 // pred_check_branch
        %444 = sbr.rel (%p441) target = $region80
      $region79: #{siglip_forward.2} parent=5 // pred_region
        %s445 = ssub.s32 %s24, 1
        %p446 = scmp.lt.s32.totalorder %s29, 1
        %s447 = scalar_select %p446, %s29, 1
        %s448 = smul.addr %s447, 2
        %s449 = smul.addr %s448, 4
        %s450 = scalar_lea.vmem %s0, %s449
        %p451 = pneg %p50
        %p452 = pneg %p47
        %p453 = pneg %p71
        %p454 = pneg %p68
        %p455 = pneg %p92
        %p456 = pneg %p89
        %p457 = pneg %p113
        %p458 = pneg %p110
        %p459 = pneg %p134
        %p460 = pneg %p131
        %p461 = pneg %p155
        %p462 = pneg %p152
        %p463 = pneg %p176
        %p464 = pneg %p173
        %p465 = pneg %p197
        %p466 = pneg %p194
        %p467 = pneg %p218
        %p468 = pneg %p215
        %p469 = pneg %p239
        %p470 = pneg %p236
        %p471 = pneg %p260
        %p472 = pneg %p257
        %p473 = pneg %p281
        %p474 = pneg %p278
        %p475 = pneg %p302
        %p476 = pneg %p299
        %p477 = pneg %p323
        %p478 = pneg %p320
        %p479 = pneg %p344
        %p480 = pneg %p341
        %p481 = pneg %p370
        %p482 = pneg %p367
        %s483 = sand.u32 %s357, 1
        %s484 = scalar_lea.sflag [#allocation4], %s483
        %s485 = sand.u32 %s357, 1
        %s486 = scalar_lea.vmem [#allocation3], %s485
        %p487 = scmp.lt.s32.totalorder %s29, 1
        %s488 = scalar_select %p487, %s29, 1
        %s489 = smul.addr %s488, 2
        %s490 = smul.addr %s489, 4
        %s491 = scalar_lea.vmem %s0, %s490
        %v492 = vld [vmem:[%s491] sm:$0xff]
        %v493 = vld [vmem:[%s1] sm:$0x3]
        %v494 = vmul.f32 %v492, %v492
        %v496 = vcombine.high %v494, %v494
        %vm498 = vcmask 1043456
        %v499 = vsel %vm498, %v494, 0.0
        %vm500 = vcmask 519168
        %v501 = vsel %vm500, %v496, 0.0
        %v502 = vadd.f32 %v499, %v501
        %503 = vadd.xlane.f32.xlu0 %v502
        %v504 = vpop.xlane.xlu0 %503
        %v505 = vrcp.pop 192.0
        %v506 = vmul.f32 %v504, %v505
        %v507 = vadd.f32 %v506, 1e-06
        %v508 = vrsqrt.pop %v507
        %v511 = vunpack.c.l.s4 839922192
        %v512 = vunpack.c.0.s8 %v511
        %v513 = vlaneseq
        %v514 = vshrl.u32 %v513, 7
        %v515 = vsub.s32 %v512, %v514
        %v516 = vrot.slane %v508, %v515
        %v518 = vmul.f32 %v492, %v516
        %v520 = vlaneseq
        %v521 = vshrl.u32 %v520, 7
        %v522 = vsub.s32 0, %v521
        %v523 = vrot.slane %v493, %v522
        %v524 = vlaneseq
        %v525 = vshrl.u32 %v524, 7
        %v526 = vsub.s32 1, %v525
        %v527 = vrot.slane %v493, %v526
        %v528 = vcombine.low %v523, %v527
        %v530 = vmul.f32 %v518, %v528
        %v531 = vld [vmem:[%s2] sm:$0xff]
        %v532 = vld [vmem:[%s2 + $0x8] sm:$0xff]
        %v533 = vld [vmem:[%s2 + $0x10] sm:$0xff]
        %v534 = vld [vmem:[%s2 + $0x18] sm:$0xff]
        %v535 = vld [vmem:[%s2 + $0x20] sm:$0xff]
        %v536 = vld [vmem:[%s2 + $0x28] sm:$0xff]
        %v537 = vld [vmem:[%s2 + $0x30] sm:$0xff]
        %v538 = vld [vmem:[%s2 + $0x38] sm:$0xff]
        %v539 = vld [vmem:[%s2 + $0x40] sm:$0xff]
        %v540 = vld [vmem:[%s2 + $0x48] sm:$0xff]
        %v541 = vld [vmem:[%s2 + $0x50] sm:$0xff]
        %v542 = vld [vmem:[%s2 + $0x58] sm:$0xff]
        %v543 = vld [vmem:[%s2 + $0x60] sm:$0xff]
        %v544 = vld [vmem:[%s2 + $0x68] sm:$0xff]
        %v545 = vld [vmem:[%s2 + $0x70] sm:$0xff]
        %v546 = vld [vmem:[%s2 + $0x78] sm:$0xff]
        %v547 = vld [vmem:[%s2 + $0x80] sm:$0xff]
        %v548 = vld [vmem:[%s2 + $0x88] sm:$0xff]
        %v549 = vld [vmem:[%s2 + $0x90] sm:$0xff]
        %v550 = vld [vmem:[%s2 + $0x98] sm:$0xff]
        %v551 = vld [vmem:[%s2 + $0xa0] sm:$0xff]
        %v552 = vld [vmem:[%s2 + $0xa8] sm:$0xff]
        %v553 = vld [vmem:[%s2 + $0xb0] sm:$0xff]
        %v554 = vld [vmem:[%s2 + $0xb8] sm:$0xff]
        %v555 = vld [vmem:[%s3] sm:$0x1]
        %v557 = vlaneseq
        %v558 = vshrl.u32 %v557, 7
        %v559 = vsub.s32 0, %v558
        %v560 = vrot.slane %v555, %v559
        %v563 = vcombine.high %v530, %v530
        %vm564 = vcmask 523264
        %v565 = vsel %vm564, %v563, 0
        %567 = vmatprep.subr.mxu0 0.0
        %568 = vmatpush1.msra.mxu0 %v546
        %569 = vmatprep.subr.mxu0 0.0
        %570 = vmatpush1.msra.mxu0 %v545
        %571 = vmatprep.subr.mxu0 0.0
        %572 = vmatpush1.msra.mxu0 %v544
        %573 = vmatprep.subr.mxu0 0.0
        %574 = vmatpush1.msra.mxu0 %v543
        %575 = vmatprep.subr.mxu0 0.0
        %576 = vmatpush1.msra.mxu0 %v542
        %577 = vmatprep.subr.mxu0 0.0
        %578 = vmatpush1.msra.mxu0 %v541
        %579 = vmatprep.subr.mxu0 0.0
        %580 = vmatpush1.msra.mxu0 %v540
        %581 = vmatprep.subr.mxu0 0.0
        %582 = vmatpush1.msra.mxu0 %v539
        %583 = vmatprep.subr.mxu0 0.0
        %584 = vmatpush1.msra.mxu0 %v538
        %585 = vmatprep.subr.mxu0 0.0
        %586 = vmatpush1.msra.mxu0 %v537
        %587 = vmatprep.subr.mxu0 0.0
        %588 = vmatpush1.msra.mxu0 %v536
        %589 = vmatprep.subr.mxu0 0.0
        %590 = vmatpush1.msra.mxu0 %v535
        %591 = vmatprep.subr.mxu0 0.0
        %592 = vmatpush1.msra.mxu0 %v534
        %593 = vmatprep.subr.mxu0 0.0
        %594 = vmatpush1.msra.mxu0 %v533
        %595 = vmatprep.subr.mxu0 0.0
        %596 = vmatpush1.msra.mxu0 %v532
        %597 = vmatprep.subr.mxu0 0.0
        %598 = vmatpush1.msra.mxu0 %v531
        %599 = vmatprep.subr.mxu0 0.0
        %600 = vmatpush2.msra.mxu0 0.0
        %601 = vmatprep.subr.mxu0 0.0
        %602 = vmatpush2.msra.mxu0 0.0
        %603 = vmatprep.subr.mxu0 0.0
        %604 = vmatpush2.msra.mxu0 0.0
        %605 = vmatprep.subr.mxu0 0.0
        %606 = vmatpush2.msra.mxu0 0.0
        %607 = vmatprep.subr.mxu0 0.0
        %608 = vmatpush2.msra.mxu0 0.0
        %609 = vmatprep.subr.mxu0 0.0
        %610 = vmatpush2.msra.mxu0 0.0
        %611 = vmatprep.subr.mxu0 0.0
        %612 = vmatpush2.msra.mxu0 0.0
        %613 = vmatprep.subr.mxu0 0.0
        %614 = vmatpush2.msra.mxu0 0.0
        %615 = vmatprep.subr.mxu0 0.0
        %616 = vmatpush2.msra.mxu0 %v554
        %617 = vmatprep.subr.mxu0 0.0
        %618 = vmatpush2.msra.mxu0 %v553
        %619 = vmatprep.subr.mxu0 0.0
        %620 = vmatpush2.msra.mxu0 %v552
        %621 = vmatprep.subr.mxu0 0.0
        %622 = vmatpush2.msra.mxu0 %v551
        %623 = vmatprep.subr.mxu0 0.0
        %624 = vmatpush2.msra.mxu0 %v550
        %625 = vmatprep.subr.mxu0 0.0
        %626 = vmatpush2.msra.mxu0 %v549
        %627 = vmatprep.subr.mxu0 0.0
        %628 = vmatpush2.msra.mxu0 %v548
        %629 = vmatprep.subr.mxu0 0.0
        %630 = vmatpush2.msra.mxu0 %v547
        %631 = vmatprep.mubr.f32.mxu0 %v565
        %632 = vmatmul.mubr.f32.gmra.mxu0 %v530
        %v633 = vpop.f32.mrf.mxu0
        %v634 = vadd.f32 %v560, %v633
        %v635 = vpop.f32.mrf.mxu0
        %636 = vdwg.mxu0
        %v637 = vld [vmem:[%s4] sm:$0x1]
        %vm638 = vcmask 253952
        %639 = vst.msk [vmem:[#allocation2] sm:$0x1] %vm638, %v637
        %vm640 = vcmask 257024
        %641 = vst.msk [vmem:[#allocation2 + $0x1] sm:$0xf] %vm640, %v634
        %v642 = vld [vmem:[#allocation2] sm:$0x1f]
        %v643 = vld [vmem:[%s5] sm:$0x1f]
        %v644 = vld [vmem:[%s6] sm:$0x1f]
        %v645 = vld [vmem:[%s7] sm:$0x3]
        %v646 = vld [vmem:[%s8] sm:$0x3]
        %v647 = vld [vmem:[%s9] sm:$0x3]
        %v648 = vmul.f32 %v642, %v642
        %vm649 = vcmask 258048
        %v650 = vsel %vm649, %v648, 0.0
        %651 = vadd.xlane.f32.xlu0 %v650
        %v652 = vpop.xlane.xlu0 %651
        %v653 = vrcp.pop 32.0
        %v654 = vmul.f32 %v652, %v653
        %v655 = vadd.f32 %v654, 1e-06
        %v656 = vrsqrt.pop %v655
        %v657 = vmul.f32 %v642, %v656
        %v658 = vlaneseq
        %v659 = vshrl.u32 %v658, 7
        %v660 = vsub.s32 0, %v659
        %v661 = vrot.slane %v645, %v660
        %v662 = vmul.f32 %v657, %v661
        %v663 = vld [vmem:[%s10] sm:$0xff]
        %v664 = vld [vmem:[%s10 + $0x8] sm:$0xff]
        %v665 = vld [vmem:[%s10 + $0x10] sm:$0xff]
        %v666 = vld [vmem:[%s10 + $0x18] sm:$0xff]
        %vm667 = vcmask 261120
        %v669 = vsel %vm667, %v662, 0
        %671 = vmatprep.subr.mxu0 0.0
        %672 = vmatpush1.msra.mxu0 0.0
        %673 = vmatprep.subr.mxu0 0.0
        %674 = vmatpush1.msra.mxu0 0.0
        %675 = vmatprep.subr.mxu0 0.0
        %676 = vmatpush1.msra.mxu0 0.0
        %677 = vmatprep.subr.mxu0 0.0
        %678 = vmatpush1.msra.mxu0 0.0
        %679 = vmatprep.subr.mxu0 0.0
        %680 = vmatpush1.msra.mxu0 0.0
        %681 = vmatprep.subr.mxu0 0.0
        %682 = vmatpush1.msra.mxu0 0.0
        %683 = vmatprep.subr.mxu0 0.0
        %684 = vmatpush1.msra.mxu0 0.0
        %685 = vmatprep.subr.mxu0 0.0
        %686 = vmatpush1.msra.mxu0 0.0
        %687 = vmatprep.subr.mxu0 0.0
        %688 = vmatpush1.msra.mxu0 0.0
        %689 = vmatprep.subr.mxu0 0.0
        %690 = vmatpush1.msra.mxu0 0.0
        %691 = vmatprep.subr.mxu0 0.0
        %692 = vmatpush1.msra.mxu0 0.0
        %693 = vmatprep.subr.mxu0 0.0
        %694 = vmatpush1.msra.mxu0 0.0
        %695 = vmatprep.subr.mxu0 0.0
        %696 = vmatpush1.msra.mxu0 %v666
        %697 = vmatprep.subr.mxu0 0.0
        %698 = vmatpush1.msra.mxu0 %v665
        %699 = vmatprep.subr.mxu0 0.0
        %700 = vmatpush1.msra.mxu0 %v664
        %701 = vmatprep.subr.mxu0 0.0
        %702 = vmatpush1.msra.mxu0 %v663
        %703 = vmatprep.subr.mxu0 0.0
        %704 = vmatpush2.msra.mxu0 0.0
        %705 = vmatprep.subr.mxu0 0.0
        %706 = vmatpush2.msra.mxu0 0.0
        %707 = vmatprep.subr.mxu0 0.0
        %708 = vmatpush2.msra.mxu0 0.0
        %709 = vmatprep.subr.mxu0 0.0
        %710 = vmatpush2.msra.mxu0 0.0
        %711 = vmatprep.subr.mxu0 0.0
        %712 = vmatpush2.msra.mxu0 0.0
        %713 = vmatprep.subr.mxu0 0.0
        %714 = vmatpush2.msra.mxu0 0.0
        %715 = vmatprep.subr.mxu0 0.0
        %716 = vmatpush2.msra.mxu0 0.0
        %717 = vmatprep.subr.mxu0 0.0
        %718 = vmatpush2.msra.mxu0 0.0
        %719 = vmatprep.subr.mxu0 0.0
        %720 = vmatpush2.msra.mxu0 0.0
        %721 = vmatprep.subr.mxu0 0.0
        %722 = vmatpush2.msra.mxu0 0.0
        %723 = vmatprep.subr.mxu0 0.0
        %724 = vmatpush2.msra.mxu0 0.0
        %725 = vmatprep.subr.mxu0 0.0
        %726 = vmatpush2.msra.mxu0 0.0
        %727 = vmatprep.subr.mxu0 0.0
        %728 = vmatpush2.msra.mxu0 0.0
        %729 = vmatprep.subr.mxu0 0.0
        %730 = vmatpush2.msra.mxu0 0.0
        %731 = vmatprep.subr.mxu0 0.0
        %732 = vmatpush2.msra.mxu0 0.0
        %733 = vmatprep.subr.mxu0 0.0
        %734 = vmatpush2.msra.mxu0 0.0
        %735 = vmatprep.mubr.f32.mxu0 0.0
        %736 = vmatmul.mubr.f32.gmra.mxu0 %v669
        %v737 = vpop.f32.mrf.mxu0
        %v738 = vadd.f32 0.0, %v737
        %v739 = vpop.f32.mrf.mxu0
        %740 = vdwg.mxu0
        %v741 = vmul.f32 %v738, %v738
        %743 = vrot.lane.b32.xlu0 %v741, 96
        %v744 = vpop.permute.xlu0 %743
        %vm746 = vcmask 126976
        %v747 = vsel %vm746, %v744, 0.0
        %748 = vadd.xlane.f32.xlu0 %v747
        %v749 = vpop.xlane.xlu0 %748
        %v750 = vrcp.pop 16.0
        %v751 = vmul.f32 %v749, %v750
        %v752 = vadd.f32 %v751, 1e-06
        %v753 = vrsqrt.pop %v752
        %v754 = vmul.f32 %v738, %v753
        %v755 = vlaneseq
        %v756 = vshrl.u32 %v755, 7
        %v757 = vsub.s32 0, %v756
        %v758 = vrot.slane %v647, %v757
        %760 = vrot.lane.b32.xlu0 %v758, 32
        %v761 = vpop.permute.xlu0 %760
        %v763 = vmul.f32 %v754, %v761
        %v764 = vsub.f32 0.0, %v738
        %766 = vrot.lane.b32.xlu0 %v764, 76
        %v767 = vpop.permute.xlu0 %766
        %770 = vrot.lane.b32.xlu0 %v738, 84
        %v771 = vpop.permute.xlu0 %770
        %vm773 = vcmask 31744
        %v774 = vsel %vm773, %v767, %v771
        %776 = vrot.lane.b32.xlu0 %v643, 48
        %v777 = vpop.permute.xlu0 %776
        %v779 = vmul.f32 %v738, %v777
        %v780 = vmul.f32 %v774, %v644
        %782 = vrot.lane.b32.xlu0 %v780, 48
        %v783 = vpop.permute.xlu0 %782
        %v785 = vadd.f32 %v779, %v783
        %v786 = vld [vmem:[%s11] sm:$0xff]
        %v787 = vld [vmem:[%s11 + $0x8] sm:$0xff]
        %789 = vrot.lane.b32.xlu0 %v763, 96
        %v790 = vpop.permute.xlu0 %789
        %vm791 = vcmask 130048
        %v792 = vsel %vm791, %v790, 0
        %794 = vmatprep.subr.mxu0 0.0
        %795 = vmatpush1.msra.mxu0 0.0
        %796 = vmatprep.subr.mxu0 0.0
        %797 = vmatpush1.msra.mxu0 0.0
        %798 = vmatprep.subr.mxu0 0.0
        %799 = vmatpush1.msra.mxu0 0.0
        %800 = vmatprep.subr.mxu0 0.0
        %801 = vmatpush1.msra.mxu0 0.0
        %802 = vmatprep.subr.mxu0 0.0
        %803 = vmatpush1.msra.mxu0 0.0
        %804 = vmatprep.subr.mxu0 0.0
        %805 = vmatpush1.msra.mxu0 0.0
        %806 = vmatprep.subr.mxu0 0.0
        %807 = vmatpush1.msra.mxu0 0.0
        %808 = vmatprep.subr.mxu0 0.0
        %809 = vmatpush1.msra.mxu0 0.0
        %810 = vmatprep.subr.mxu0 0.0
        %811 = vmatpush1.msra.mxu0 0.0
        %812 = vmatprep.subr.mxu0 0.0
        %813 = vmatpush1.msra.mxu0 0.0
        %814 = vmatprep.subr.mxu0 0.0
        %815 = vmatpush1.msra.mxu0 0.0
        %816 = vmatprep.subr.mxu0 0.0
        %817 = vmatpush1.msra.mxu0 0.0
        %818 = vmatprep.subr.mxu0 0.0
        %819 = vmatpush1.msra.mxu0 0.0
        %820 = vmatprep.subr.mxu0 0.0
        %821 = vmatpush1.msra.mxu0 0.0
        %822 = vmatprep.subr.mxu0 0.0
        %823 = vmatpush1.msra.mxu0 %v787
        %824 = vmatprep.subr.mxu0 0.0
        %825 = vmatpush1.msra.mxu0 %v786
        %826 = vmatprep.subr.mxu0 0.0
        %827 = vmatpush2.msra.mxu0 0.0
        %828 = vmatprep.subr.mxu0 0.0
        %829 = vmatpush2.msra.mxu0 0.0
        %830 = vmatprep.subr.mxu0 0.0
        %831 = vmatpush2.msra.mxu0 0.0
        %832 = vmatprep.subr.mxu0 0.0
        %833 = vmatpush2.msra.mxu0 0.0
        %834 = vmatprep.subr.mxu0 0.0
        %835 = vmatpush2.msra.mxu0 0.0
        %836 = vmatprep.subr.mxu0 0.0
        %837 = vmatpush2.msra.mxu0 0.0
        %838 = vmatprep.subr.mxu0 0.0
        %839 = vmatpush2.msra.mxu0 0.0
        %840 = vmatprep.subr.mxu0 0.0
        %841 = vmatpush2.msra.mxu0 0.0
        %842 = vmatprep.subr.mxu0 0.0
        %843 = vmatpush2.msra.mxu0 0.0
        %844 = vmatprep.subr.mxu0 0.0
        %845 = vmatpush2.msra.mxu0 0.0
        %846 = vmatprep.subr.mxu0 0.0
        %847 = vmatpush2.msra.mxu0 0.0
        %848 = vmatprep.subr.mxu0 0.0
        %849 = vmatpush2.msra.mxu0 0.0
        %850 = vmatprep.subr.mxu0 0.0
        %851 = vmatpush2.msra.mxu0 0.0
        %852 = vmatprep.subr.mxu0 0.0
        %853 = vmatpush2.msra.mxu0 0.0
        %854 = vmatprep.subr.mxu0 0.0
        %855 = vmatpush2.msra.mxu0 0.0
        %856 = vmatprep.subr.mxu0 0.0
        %857 = vmatpush2.msra.mxu0 0.0
        %858 = vmatprep.mubr.f32.mxu0 0.0
        %859 = vmatmul.mubr.f32.gmra.mxu0 %v792
        %v860 = vpop.f32.mrf.mxu0
        %v861 = vadd.f32 0.0, %v860
        %v862 = vpop.f32.mrf.mxu0
        %863 = vdwg.mxu0
        %864 = vrot.lane.b32.xlu0 %v764, 116
        %v865 = vpop.permute.xlu0 %864
        %867 = vrot.lane.b32.xlu0 %v738, 124
        %v868 = vpop.permute.xlu0 %867
        %v870 = vsel %vm773, %v865, %v868
        %871 = vrot.lane.b32.xlu0 %v643, 8
        %v872 = vpop.permute.xlu0 %871
        %v874 = vmul.f32 %v738, %v872
        %v875 = vmul.f32 %v870, %v644
        %877 = vrot.lane.b32.xlu0 %v875, 8
        %v878 = vpop.permute.xlu0 %877
        %v880 = vadd.f32 %v874, %v878
        %vm881 = vcmask 64512
        %v882 = vsel %vm881, %v738, %v880
        %884 = vrot.lane.b32.xlu0 %v785, 88
        %v885 = vpop.permute.xlu0 %884
        %v887 = vsel %vm881, %v861, %v885
        %v889 = vsel %vm791, %v882, 0
        %v892 = vsel %vm791, %v887, 0
        %894 = vmatprep.subr.mxu0 0.0
        %895 = vmatpush1.xpose.msra.mxu0 0.0
        %896 = vmatprep.subr.mxu0 0.0
        %897 = vmatpush1.xpose.msra.mxu0 0.0
        %898 = vmatprep.subr.mxu0 0.0
        %899 = vmatpush1.xpose.msra.mxu0 0.0
        %900 = vmatprep.subr.mxu0 0.0
        %901 = vmatpush1.xpose.msra.mxu0 0.0
        %902 = vmatprep.subr.mxu0 0.0
        %903 = vmatpush1.xpose.msra.mxu0 0.0
        %904 = vmatprep.subr.mxu0 0.0
        %905 = vmatpush1.xpose.msra.mxu0 0.0
        %906 = vmatprep.subr.mxu0 0.0
        %907 = vmatpush1.xpose.msra.mxu0 0.0
        %908 = vmatprep.subr.mxu0 0.0
        %909 = vmatpush1.xpose.msra.mxu0 0.0
        %910 = vmatprep.subr.mxu0 0.0
        %911 = vmatpush1.xpose.msra.mxu0 0.0
        %912 = vmatprep.subr.mxu0 0.0
        %913 = vmatpush1.xpose.msra.mxu0 0.0
        %914 = vmatprep.subr.mxu0 0.0
        %915 = vmatpush1.xpose.msra.mxu0 0.0
        %916 = vmatprep.subr.mxu0 0.0
        %917 = vmatpush1.xpose.msra.mxu0 0.0
        %918 = vmatprep.subr.mxu0 0.0
        %919 = vmatpush1.xpose.msra.mxu0 0.0
        %920 = vmatprep.subr.mxu0 0.0
        %921 = vmatpush1.xpose.msra.mxu0 0.0
        %922 = vmatprep.subr.mxu0 0.0
        %923 = vmatpush1.xpose.msra.mxu0 0.0
        %924 = vmatprep.subr.mxu0 0.0
        %925 = vmatpush1.xpose.msra.mxu0 %v892
        %926 = vmatprep.subr.mxu0 0.0
        %927 = vmatpush2.xpose.msra.mxu0 0.0
        %928 = vmatprep.subr.mxu0 0.0
        %929 = vmatpush2.xpose.msra.mxu0 0.0
        %930 = vmatprep.subr.mxu0 0.0
        %931 = vmatpush2.xpose.msra.mxu0 0.0
        %932 = vmatprep.subr.mxu0 0.0
        %933 = vmatpush2.xpose.msra.mxu0 0.0
        %934 = vmatprep.subr.mxu0 0.0
        %935 = vmatpush2.xpose.msra.mxu0 0.0
        %936 = vmatprep.subr.mxu0 0.0
        %937 = vmatpush2.xpose.msra.mxu0 0.0
        %938 = vmatprep.subr.mxu0 0.0
        %939 = vmatpush2.xpose.msra.mxu0 0.0
        %940 = vmatprep.subr.mxu0 0.0
        %941 = vmatpush2.xpose.msra.mxu0 0.0
        %942 = vmatprep.subr.mxu0 0.0
        %943 = vmatpush2.xpose.msra.mxu0 0.0
        %944 = vmatprep.subr.mxu0 0.0
        %945 = vmatpush2.xpose.msra.mxu0 0.0
        %946 = vmatprep.subr.mxu0 0.0
        %947 = vmatpush2.xpose.msra.mxu0 0.0
        %948 = vmatprep.subr.mxu0 0.0
        %949 = vmatpush2.xpose.msra.mxu0 0.0
        %950 = vmatprep.subr.mxu0 0.0
        %951 = vmatpush2.xpose.msra.mxu0 0.0
        %952 = vmatprep.subr.mxu0 0.0
        %953 = vmatpush2.xpose.msra.mxu0 0.0
        %954 = vmatprep.subr.mxu0 0.0
        %955 = vmatpush2.xpose.msra.mxu0 0.0
        %956 = vmatprep.subr.mxu0 0.0
        %957 = vmatpush2.xpose.msra.mxu0 0.0
        %958 = vmatprep.mubr.f32.mxu0 0.0
        %959 = vmatmul.mubr.f32.gmra.mxu0 %v889
        %v960 = vpop.f32.mrf.mxu0
        %v961 = vadd.f32 0.0, %v960
        %v962 = vpop.f32.mrf.mxu0
        %963 = vdwg.mxu0
        %v964 = vmul.f32 %v961, 0.25
        %vm965 = vcmask 36864
        %v966 = vsel %vm965, %v964, -inf
        %967 = vmax.xlane.f32.xlu0 %v966
        %v968 = vpop.xlane.xlu0 %967
        %v969 = vsub.f32 %v964, %v968
        %v970 = vmul.f32 %v969, 1.442695
        %v971 = vpow.pop %v970
        %v972 = vsel %vm965, %v971, 0.0
        %973 = vadd.xlane.f32.xlu0 %v972
        %v974 = vpop.xlane.xlu0 %973
        %v975 = vrcp.pop %v974
        %v976 = vmul.f32 %v971, %v975
        %978 = vrot.lane.b32.xlu0 %v861, 120
        %v979 = vpop.permute.xlu0 %978
        %vm980 = vcmask 39936
        %v982 = vsel %vm980, %v976, 0
        %vm984 = vcmask 1044480
        %v985 = vsel %vm984, %v979, 0
        %987 = vmatprep.subr.mxu0 0.0
        %988 = vmatpush1.msra.mxu0 0.0
        %989 = vmatprep.subr.mxu0 0.0
        %990 = vmatpush1.msra.mxu0 0.0
        %991 = vmatprep.subr.mxu0 0.0
        %992 = vmatpush1.msra.mxu0 0.0
        %993 = vmatprep.subr.mxu0 0.0
        %994 = vmatpush1.msra.mxu0 0.0
        %995 = vmatprep.subr.mxu0 0.0
        %996 = vmatpush1.msra.mxu0 0.0
        %997 = vmatprep.subr.mxu0 0.0
        %998 = vmatpush1.msra.mxu0 0.0
        %999 = vmatprep.subr.mxu0 0.0
        %1000 = vmatpush1.msra.mxu0 0.0
        %1001 = vmatprep.subr.mxu0 0.0
        %1002 = vmatpush1.msra.mxu0 0.0
        %1003 = vmatprep.subr.mxu0 0.0
        %1004 = vmatpush1.msra.mxu0 0.0
        %1005 = vmatprep.subr.mxu0 0.0
        %1006 = vmatpush1.msra.mxu0 0.0
        %1007 = vmatprep.subr.mxu0 0.0
        %1008 = vmatpush1.msra.mxu0 0.0
        %1009 = vmatprep.subr.mxu0 0.0
        %1010 = vmatpush1.msra.mxu0 0.0
        %1011 = vmatprep.subr.mxu0 0.0
        %1012 = vmatpush1.msra.mxu0 0.0
        %1013 = vmatprep.subr.mxu0 0.0
        %1014 = vmatpush1.msra.mxu0 0.0
        %1015 = vmatprep.subr.mxu0 0.0
        %1016 = vmatpush1.msra.mxu0 0.0
        %1017 = vmatprep.subr.mxu0 0.0
        %1018 = vmatpush1.msra.mxu0 %v985
        %1019 = vmatprep.subr.mxu0 0.0
        %1020 = vmatpush2.msra.mxu0 0.0
        %1021 = vmatprep.subr.mxu0 0.0
        %1022 = vmatpush2.msra.mxu0 0.0
        %1023 = vmatprep.subr.mxu0 0.0
        %1024 = vmatpush2.msra.mxu0 0.0
        %1025 = vmatprep.subr.mxu0 0.0
        %1026 = vmatpush2.msra.mxu0 0.0
        %1027 = vmatprep.subr.mxu0 0.0
        %1028 = vmatpush2.msra.mxu0 0.0
        %1029 = vmatprep.subr.mxu0 0.0
        %1030 = vmatpush2.msra.mxu0 0.0
        %1031 = vmatprep.subr.mxu0 0.0
        %1032 = vmatpush2.msra.mxu0 0.0
        %1033 = vmatprep.subr.mxu0 0.0
        %1034 = vmatpush2.msra.mxu0 0.0
        %1035 = vmatprep.subr.mxu0 0.0
        %1036 = vmatpush2.msra.mxu0 0.0
        %1037 = vmatprep.subr.mxu0 0.0
        %1038 = vmatpush2.msra.mxu0 0.0
        %1039 = vmatprep.subr.mxu0 0.0
        %1040 = vmatpush2.msra.mxu0 0.0
        %1041 = vmatprep.subr.mxu0 0.0
        %1042 = vmatpush2.msra.mxu0 0.0
        %1043 = vmatprep.subr.mxu0 0.0
        %1044 = vmatpush2.msra.mxu0 0.0
        %1045 = vmatprep.subr.mxu0 0.0
        %1046 = vmatpush2.msra.mxu0 0.0
        %1047 = vmatprep.subr.mxu0 0.0
        %1048 = vmatpush2.msra.mxu0 0.0
        %1049 = vmatprep.subr.mxu0 0.0
        %1050 = vmatpush2.msra.mxu0 0.0
        %1051 = vmatprep.mubr.f32.mxu0 0.0
        %1052 = vmatmul.mubr.f32.gmra.mxu0 %v982
        %v1053 = vpop.f32.mrf.mxu0
        %v1054 = vadd.f32 0.0, %v1053
        %v1055 = vpop.f32.mrf.mxu0
        %1056 = vdwg.mxu0
        %1057 = vrot.lane.b32.xlu0 %v764, 100
        %v1058 = vpop.permute.xlu0 %1057
        %1060 = vrot.lane.b32.xlu0 %v738, 108
        %v1061 = vpop.permute.xlu0 %1060
        %v1063 = vsel %vm773, %v1058, %v1061
        %1064 = vrot.lane.b32.xlu0 %v643, 24
        %v1065 = vpop.permute.xlu0 %1064
        %v1067 = vmul.f32 %v738, %v1065
        %v1068 = vmul.f32 %v1063, %v644
        %1070 = vrot.lane.b32.xlu0 %v1068, 24
        %v1071 = vpop.permute.xlu0 %1070
        %v1073 = vadd.f32 %v1067, %v1071
        %1074 = vrot.lane.b32.xlu0 %v738, 112
        %v1075 = vpop.permute.xlu0 %1074
        %1078 = vrot.lane.b32.xlu0 %v1073, 112
        %v1079 = vpop.permute.xlu0 %1078
        %v1081 = vsel %vm881, %v1075, %v1079
        %1082 = vrot.lane.b32.xlu0 %v861, 112
        %v1083 = vpop.permute.xlu0 %1082
        %v1085 = vsel %vm881, %v1083, %v885
        %v1087 = vsel %vm791, %v1081, 0
        %v1090 = vsel %vm791, %v1085, 0
        %1092 = vmatprep.subr.mxu0 0.0
        %1093 = vmatpush1.xpose.msra.mxu0 0.0
        %1094 = vmatprep.subr.mxu0 0.0
        %1095 = vmatpush1.xpose.msra.mxu0 0.0
        %1096 = vmatprep.subr.mxu0 0.0
        %1097 = vmatpush1.xpose.msra.mxu0 0.0
        %1098 = vmatprep.subr.mxu0 0.0
        %1099 = vmatpush1.xpose.msra.mxu0 0.0
        %1100 = vmatprep.subr.mxu0 0.0
        %1101 = vmatpush1.xpose.msra.mxu0 0.0
        %1102 = vmatprep.subr.mxu0 0.0
        %1103 = vmatpush1.xpose.msra.mxu0 0.0
        %1104 = vmatprep.subr.mxu0 0.0
        %1105 = vmatpush1.xpose.msra.mxu0 0.0
        %1106 = vmatprep.subr.mxu0 0.0
        %1107 = vmatpush1.xpose.msra.mxu0 0.0
        %1108 = vmatprep.subr.mxu0 0.0
        %1109 = vmatpush1.xpose.msra.mxu0 0.0
        %1110 = vmatprep.subr.mxu0 0.0
        %1111 = vmatpush1.xpose.msra.mxu0 0.0
        %1112 = vmatprep.subr.mxu0 0.0
        %1113 = vmatpush1.xpose.msra.mxu0 0.0
        %1114 = vmatprep.subr.mxu0 0.0
        %1115 = vmatpush1.xpose.msra.mxu0 0.0
        %1116 = vmatprep.subr.mxu0 0.0
        %1117 = vmatpush1.xpose.msra.mxu0 0.0
        %1118 = vmatprep.subr.mxu0 0.0
        %1119 = vmatpush1.xpose.msra.mxu0 0.0
        %1120 = vmatprep.subr.mxu0 0.0
        %1121 = vmatpush1.xpose.msra.mxu0 0.0
        %1122 = vmatprep.subr.mxu0 0.0
        %1123 = vmatpush1.xpose.msra.mxu0 %v1090
        %1124 = vmatprep.subr.mxu0 0.0
        %1125 = vmatpush2.xpose.msra.mxu0 0.0
        %1126 = vmatprep.subr.mxu0 0.0
        %1127 = vmatpush2.xpose.msra.mxu0 0.0
        %1128 = vmatprep.subr.mxu0 0.0
        %1129 = vmatpush2.xpose.msra.mxu0 0.0
        %1130 = vmatprep.subr.mxu0 0.0
        %1131 = vmatpush2.xpose.msra.mxu0 0.0
        %1132 = vmatprep.subr.mxu0 0.0
        %1133 = vmatpush2.xpose.msra.mxu0 0.0
        %1134 = vmatprep.subr.mxu0 0.0
        %1135 = vmatpush2.xpose.msra.mxu0 0.0
        %1136 = vmatprep.subr.mxu0 0.0
        %1137 = vmatpush2.xpose.msra.mxu0 0.0
        %1138 = vmatprep.subr.mxu0 0.0
        %1139 = vmatpush2.xpose.msra.mxu0 0.0
        %1140 = vmatprep.subr.mxu0 0.0
        %1141 = vmatpush2.xpose.msra.mxu0 0.0
        %1142 = vmatprep.subr.mxu0 0.0
        %1143 = vmatpush2.xpose.msra.mxu0 0.0
        %1144 = vmatprep.subr.mxu0 0.0
        %1145 = vmatpush2.xpose.msra.mxu0 0.0
        %1146 = vmatprep.subr.mxu0 0.0
        %1147 = vmatpush2.xpose.msra.mxu0 0.0
        %1148 = vmatprep.subr.mxu0 0.0
        %1149 = vmatpush2.xpose.msra.mxu0 0.0
        %1150 = vmatprep.subr.mxu0 0.0
        %1151 = vmatpush2.xpose.msra.mxu0 0.0
        %1152 = vmatprep.subr.mxu0 0.0
        %1153 = vmatpush2.xpose.msra.mxu0 0.0
        %1154 = vmatprep.subr.mxu0 0.0
        %1155 = vmatpush2.xpose.msra.mxu0 0.0
        %1156 = vmatprep.mubr.f32.mxu0 0.0
        %1157 = vmatmul.mubr.f32.gmra.mxu0 %v1087
        %v1158 = vpop.f32.mrf.mxu0
        %v1159 = vadd.f32 0.0, %v1158
        %v1160 = vpop.f32.mrf.mxu0
        %1161 = vdwg.mxu0
        %v1162 = vmul.f32 %v1159, 0.25
        %v1163 = vsel %vm965, %v1162, -inf
        %1164 = vmax.xlane.f32.xlu0 %v1163
        %v1165 = vpop.xlane.xlu0 %1164
        %v1166 = vsub.f32 %v1162, %v1165
        %v1167 = vmul.f32 %v1166, 1.442695
        %v1168 = vpow.pop %v1167
        %v1169 = vsel %vm965, %v1168, 0.0
        %1170 = vadd.xlane.f32.xlu0 %v1169
        %v1171 = vpop.xlane.xlu0 %1170
        %v1172 = vrcp.pop %v1171
        %v1173 = vmul.f32 %v1168, %v1172
        %1174 = vrot.lane.b32.xlu0 %v861, 104
        %v1175 = vpop.permute.xlu0 %1174
        %v1177 = vsel %vm980, %v1173, 0
        %v1179 = vsel %vm984, %v1175, 0
        %1181 = vmatprep.subr.mxu0 0.0
        %1182 = vmatpush1.msra.mxu0 0.0
        %1183 = vmatprep.subr.mxu0 0.0
        %1184 = vmatpush1.msra.mxu0 0.0
        %1185 = vmatprep.subr.mxu0 0.0
        %1186 = vmatpush1.msra.mxu0 0.0
        %1187 = vmatprep.subr.mxu0 0.0
        %1188 = vmatpush1.msra.mxu0 0.0
        %1189 = vmatprep.subr.mxu0 0.0
        %1190 = vmatpush1.msra.mxu0 0.0
        %1191 = vmatprep.subr.mxu0 0.0
        %1192 = vmatpush1.msra.mxu0 0.0
        %1193 = vmatprep.subr.mxu0 0.0
        %1194 = vmatpush1.msra.mxu0 0.0
        %1195 = vmatprep.subr.mxu0 0.0
        %1196 = vmatpush1.msra.mxu0 0.0
        %1197 = vmatprep.subr.mxu0 0.0
        %1198 = vmatpush1.msra.mxu0 0.0
        %1199 = vmatprep.subr.mxu0 0.0
        %1200 = vmatpush1.msra.mxu0 0.0
        %1201 = vmatprep.subr.mxu0 0.0
        %1202 = vmatpush1.msra.mxu0 0.0
        %1203 = vmatprep.subr.mxu0 0.0
        %1204 = vmatpush1.msra.mxu0 0.0
        %1205 = vmatprep.subr.mxu0 0.0
        %1206 = vmatpush1.msra.mxu0 0.0
        %1207 = vmatprep.subr.mxu0 0.0
        %1208 = vmatpush1.msra.mxu0 0.0
        %1209 = vmatprep.subr.mxu0 0.0
        %1210 = vmatpush1.msra.mxu0 0.0
        %1211 = vmatprep.subr.mxu0 0.0
        %1212 = vmatpush1.msra.mxu0 %v1179
        %1213 = vmatprep.subr.mxu0 0.0
        %1214 = vmatpush2.msra.mxu0 0.0
        %1215 = vmatprep.subr.mxu0 0.0
        %1216 = vmatpush2.msra.mxu0 0.0
        %1217 = vmatprep.subr.mxu0 0.0
        %1218 = vmatpush2.msra.mxu0 0.0
        %1219 = vmatprep.subr.mxu0 0.0
        %1220 = vmatpush2.msra.mxu0 0.0
        %1221 = vmatprep.subr.mxu0 0.0
        %1222 = vmatpush2.msra.mxu0 0.0
        %1223 = vmatprep.subr.mxu0 0.0
        %1224 = vmatpush2.msra.mxu0 0.0
        %1225 = vmatprep.subr.mxu0 0.0
        %1226 = vmatpush2.msra.mxu0 0.0
        %1227 = vmatprep.subr.mxu0 0.0
        %1228 = vmatpush2.msra.mxu0 0.0
        %1229 = vmatprep.subr.mxu0 0.0
        %1230 = vmatpush2.msra.mxu0 0.0
        %1231 = vmatprep.subr.mxu0 0.0
        %1232 = vmatpush2.msra.mxu0 0.0
        %1233 = vmatprep.subr.mxu0 0.0
        %1234 = vmatpush2.msra.mxu0 0.0
        %1235 = vmatprep.subr.mxu0 0.0
        %1236 = vmatpush2.msra.mxu0 0.0
        %1237 = vmatprep.subr.mxu0 0.0
        %1238 = vmatpush2.msra.mxu0 0.0
        %1239 = vmatprep.subr.mxu0 0.0
        %1240 = vmatpush2.msra.mxu0 0.0
        %1241 = vmatprep.subr.mxu0 0.0
        %1242 = vmatpush2.msra.mxu0 0.0
        %1243 = vmatprep.subr.mxu0 0.0
        %1244 = vmatpush2.msra.mxu0 0.0
        %1245 = vmatprep.mubr.f32.mxu0 0.0
        %1246 = vmatmul.mubr.f32.gmra.mxu0 %v1177
        %v1247 = vpop.f32.mrf.mxu0
        %v1248 = vadd.f32 0.0, %v1247
        %v1249 = vpop.f32.mrf.mxu0
        %1250 = vdwg.mxu0
        %1252 = vrot.lane.b32.xlu0 %v1248, 8
        %v1253 = vpop.permute.xlu0 %1252
        %v1255 = vsel %vm881, %v1054, %v1253
        %v1256 = vld [vmem:[%s12] sm:$0xff]
        %v1257 = vld [vmem:[%s12 + $0x8] sm:$0xff]
        %v1259 = vsel %vm791, %v1255, 0
        %1261 = vmatprep.subr.mxu0 0.0
        %1262 = vmatpush1.msra.mxu0 0.0
        %1263 = vmatprep.subr.mxu0 0.0
        %1264 = vmatpush1.msra.mxu0 0.0
        %1265 = vmatprep.subr.mxu0 0.0
        %1266 = vmatpush1.msra.mxu0 0.0
        %1267 = vmatprep.subr.mxu0 0.0
        %1268 = vmatpush1.msra.mxu0 0.0
        %1269 = vmatprep.subr.mxu0 0.0
        %1270 = vmatpush1.msra.mxu0 0.0
        %1271 = vmatprep.subr.mxu0 0.0
        %1272 = vmatpush1.msra.mxu0 0.0
        %1273 = vmatprep.subr.mxu0 0.0
        %1274 = vmatpush1.msra.mxu0 0.0
        %1275 = vmatprep.subr.mxu0 0.0
        %1276 = vmatpush1.msra.mxu0 0.0
        %1277 = vmatprep.subr.mxu0 0.0
        %1278 = vmatpush1.msra.mxu0 0.0
        %1279 = vmatprep.subr.mxu0 0.0
        %1280 = vmatpush1.msra.mxu0 0.0
        %1281 = vmatprep.subr.mxu0 0.0
        %1282 = vmatpush1.msra.mxu0 0.0
        %1283 = vmatprep.subr.mxu0 0.0
        %1284 = vmatpush1.msra.mxu0 0.0
        %1285 = vmatprep.subr.mxu0 0.0
        %1286 = vmatpush1.msra.mxu0 0.0
        %1287 = vmatprep.subr.mxu0 0.0
        %1288 = vmatpush1.msra.mxu0 0.0
        %1289 = vmatprep.subr.mxu0 0.0
        %1290 = vmatpush1.msra.mxu0 %v1257
        %1291 = vmatprep.subr.mxu0 0.0
        %1292 = vmatpush1.msra.mxu0 %v1256
        %1293 = vmatprep.subr.mxu0 0.0
        %1294 = vmatpush2.msra.mxu0 0.0
        %1295 = vmatprep.subr.mxu0 0.0
        %1296 = vmatpush2.msra.mxu0 0.0
        %1297 = vmatprep.subr.mxu0 0.0
        %1298 = vmatpush2.msra.mxu0 0.0
        %1299 = vmatprep.subr.mxu0 0.0
        %1300 = vmatpush2.msra.mxu0 0.0
        %1301 = vmatprep.subr.mxu0 0.0
        %1302 = vmatpush2.msra.mxu0 0.0
        %1303 = vmatprep.subr.mxu0 0.0
        %1304 = vmatpush2.msra.mxu0 0.0
        %1305 = vmatprep.subr.mxu0 0.0
        %1306 = vmatpush2.msra.mxu0 0.0
        %1307 = vmatprep.subr.mxu0 0.0
        %1308 = vmatpush2.msra.mxu0 0.0
        %1309 = vmatprep.subr.mxu0 0.0
        %1310 = vmatpush2.msra.mxu0 0.0
        %1311 = vmatprep.subr.mxu0 0.0
        %1312 = vmatpush2.msra.mxu0 0.0
        %1313 = vmatprep.subr.mxu0 0.0
        %1314 = vmatpush2.msra.mxu0 0.0
        %1315 = vmatprep.subr.mxu0 0.0
        %1316 = vmatpush2.msra.mxu0 0.0
        %1317 = vmatprep.subr.mxu0 0.0
        %1318 = vmatpush2.msra.mxu0 0.0
        %1319 = vmatprep.subr.mxu0 0.0
        %1320 = vmatpush2.msra.mxu0 0.0
        %1321 = vmatprep.subr.mxu0 0.0
        %1322 = vmatpush2.msra.mxu0 0.0
        %1323 = vmatprep.subr.mxu0 0.0
        %1324 = vmatpush2.msra.mxu0 0.0
        %1325 = vmatprep.mubr.f32.mxu0 0.0
        %1326 = vmatmul.mubr.f32.gmra.mxu0 %v1259
        %v1327 = vpop.f32.mrf.mxu0
        %v1328 = vadd.f32 0.0, %v1327
        %v1329 = vpop.f32.mrf.mxu0
        %1330 = vdwg.mxu0
        %v1331 = vadd.f32 %v642, %v1328
        %v1332 = vmul.f32 %v1331, %v1331
        %v1333 = vsel %vm649, %v1332, 0.0
        %1334 = vadd.xlane.f32.xlu0 %v1333
        %v1335 = vpop.xlane.xlu0 %1334
        %v1336 = vmul.f32 %v1335, %v653
        %v1337 = vadd.f32 %v1336, 1e-06
        %v1338 = vrsqrt.pop %v1337
        %v1339 = vmul.f32 %v1331, %v1338
        %v1340 = vlaneseq
        %v1341 = vshrl.u32 %v1340, 7
        %v1342 = vsub.s32 0, %v1341
        %v1343 = vrot.slane %v646, %v1342
        %v1344 = vmul.f32 %v1339, %v1343
        %v1345 = vld [vmem:[%s13] sm:$0xff]
        %v1346 = vld [vmem:[%s13 + $0x8] sm:$0xff]
        %v1347 = vld [vmem:[%s13 + $0x10] sm:$0xff]
        %v1348 = vld [vmem:[%s13 + $0x18] sm:$0xff]
        %v1350 = vsel %vm667, %v1344, 0
        %1352 = vmatprep.subr.mxu0 0.0
        %1353 = vmatpush1.msra.mxu0 0.0
        %1354 = vmatprep.subr.mxu0 0.0
        %1355 = vmatpush1.msra.mxu0 0.0
        %1356 = vmatprep.subr.mxu0 0.0
        %1357 = vmatpush1.msra.mxu0 0.0
        %1358 = vmatprep.subr.mxu0 0.0
        %1359 = vmatpush1.msra.mxu0 0.0
        %1360 = vmatprep.subr.mxu0 0.0
        %1361 = vmatpush1.msra.mxu0 0.0
        %1362 = vmatprep.subr.mxu0 0.0
        %1363 = vmatpush1.msra.mxu0 0.0
        %1364 = vmatprep.subr.mxu0 0.0
        %1365 = vmatpush1.msra.mxu0 0.0
        %1366 = vmatprep.subr.mxu0 0.0
        %1367 = vmatpush1.msra.mxu0 0.0
        %1368 = vmatprep.subr.mxu0 0.0
        %1369 = vmatpush1.msra.mxu0 0.0
        %1370 = vmatprep.subr.mxu0 0.0
        %1371 = vmatpush1.msra.mxu0 0.0
        %1372 = vmatprep.subr.mxu0 0.0
        %1373 = vmatpush1.msra.mxu0 0.0
        %1374 = vmatprep.subr.mxu0 0.0
        %1375 = vmatpush1.msra.mxu0 0.0
        %1376 = vmatprep.subr.mxu0 0.0
        %1377 = vmatpush1.msra.mxu0 %v1348
        %1378 = vmatprep.subr.mxu0 0.0
        %1379 = vmatpush1.msra.mxu0 %v1347
        %1380 = vmatprep.subr.mxu0 0.0
        %1381 = vmatpush1.msra.mxu0 %v1346
        %1382 = vmatprep.subr.mxu0 0.0
        %1383 = vmatpush1.msra.mxu0 %v1345
        %1384 = vmatprep.subr.mxu0 0.0
        %1385 = vmatpush2.msra.mxu0 0.0
        %1386 = vmatprep.subr.mxu0 0.0
        %1387 = vmatpush2.msra.mxu0 0.0
        %1388 = vmatprep.subr.mxu0 0.0
        %1389 = vmatpush2.msra.mxu0 0.0
        %1390 = vmatprep.subr.mxu0 0.0
        %1391 = vmatpush2.msra.mxu0 0.0
        %1392 = vmatprep.subr.mxu0 0.0
        %1393 = vmatpush2.msra.mxu0 0.0
        %1394 = vmatprep.subr.mxu0 0.0
        %1395 = vmatpush2.msra.mxu0 0.0
        %1396 = vmatprep.subr.mxu0 0.0
        %1397 = vmatpush2.msra.mxu0 0.0
        %1398 = vmatprep.subr.mxu0 0.0
        %1399 = vmatpush2.msra.mxu0 0.0
        %1400 = vmatprep.subr.mxu0 0.0
        %1401 = vmatpush2.msra.mxu0 0.0
        %1402 = vmatprep.subr.mxu0 0.0
        %1403 = vmatpush2.msra.mxu0 0.0
        %1404 = vmatprep.subr.mxu0 0.0
        %1405 = vmatpush2.msra.mxu0 0.0
        %1406 = vmatprep.subr.mxu0 0.0
        %1407 = vmatpush2.msra.mxu0 0.0
        %1408 = vmatprep.subr.mxu0 0.0
        %1409 = vmatpush2.msra.mxu0 0.0
        %1410 = vmatprep.subr.mxu0 0.0
        %1411 = vmatpush2.msra.mxu0 0.0
        %1412 = vmatprep.subr.mxu0 0.0
        %1413 = vmatpush2.msra.mxu0 0.0
        %1414 = vmatprep.subr.mxu0 0.0
        %1415 = vmatpush2.msra.mxu0 0.0
        %1416 = vmatprep.mubr.f32.mxu0 0.0
        %1417 = vmatmul.mubr.f32.gmra.mxu0 %v1350
        %v1418 = vpop.f32.mrf.mxu0
        %v1419 = vadd.f32 0.0, %v1418
        %v1420 = vpop.f32.mrf.mxu0
        %1421 = vdwg.mxu0
        %v1422 = vxor.u32 %v1419, 2147483648
        %v1423 = vmul.f32 %v1422, 1.442695
        %v1424 = vpow.pop %v1423
        %v1425 = vadd.f32 %v1424, 1.0
        %v1426 = vrcp.pop %v1425
        %v1427 = vmul.f32 1.0, %v1426
        %v1428 = vmul.f32 %v1419, %v1427
        %1430 = vrot.lane.b32.xlu0 %v1419, 80
        %v1431 = vpop.permute.xlu0 %1430
        %v1433 = vmul.f32 %v1428, %v1431
        %v1434 = vld [vmem:[%s14] sm:$0xff]
        %v1435 = vld [vmem:[%s14 + $0x8] sm:$0xff]
        %v1436 = vld [vmem:[%s14 + $0x10] sm:$0xff]
        %v1437 = vld [vmem:[%s14 + $0x18] sm:$0xff]
        %v1438 = vld [vmem:[%s14 + $0x20] sm:$0xff]
        %v1439 = vld [vmem:[%s14 + $0x28] sm:$0xff]
        %vm1440 = vcmask 392192
        %v1442 = vsel %vm1440, %v1433, 0
        %1444 = vmatprep.subr.mxu0 0.0
        %1445 = vmatpush1.msra.mxu0 0.0
        %1446 = vmatprep.subr.mxu0 0.0
        %1447 = vmatpush1.msra.mxu0 0.0
        %1448 = vmatprep.subr.mxu0 0.0
        %1449 = vmatpush1.msra.mxu0 0.0
        %1450 = vmatprep.subr.mxu0 0.0
        %1451 = vmatpush1.msra.mxu0 0.0
        %1452 = vmatprep.subr.mxu0 0.0
        %1453 = vmatpush1.msra.mxu0 0.0
        %1454 = vmatprep.subr.mxu0 0.0
        %1455 = vmatpush1.msra.mxu0 0.0
        %1456 = vmatprep.subr.mxu0 0.0
        %1457 = vmatpush1.msra.mxu0 0.0
        %1458 = vmatprep.subr.mxu0 0.0
        %1459 = vmatpush1.msra.mxu0 0.0
        %1460 = vmatprep.subr.mxu0 0.0
        %1461 = vmatpush1.msra.mxu0 0.0
        %1462 = vmatprep.subr.mxu0 0.0
        %1463 = vmatpush1.msra.mxu0 0.0
        %1464 = vmatprep.subr.mxu0 0.0
        %1465 = vmatpush1.msra.mxu0 %v1439
        %1466 = vmatprep.subr.mxu0 0.0
        %1467 = vmatpush1.msra.mxu0 %v1438
        %1468 = vmatprep.subr.mxu0 0.0
        %1469 = vmatpush1.msra.mxu0 %v1437
        %1470 = vmatprep.subr.mxu0 0.0
        %1471 = vmatpush1.msra.mxu0 %v1436
        %1472 = vmatprep.subr.mxu0 0.0
        %1473 = vmatpush1.msra.mxu0 %v1435
        %1474 = vmatprep.subr.mxu0 0.0
        %1475 = vmatpush1.msra.mxu0 %v1434
        %1476 = vmatprep.subr.mxu0 0.0
        %1477 = vmatpush2.msra.mxu0 0.0
        %1478 = vmatprep.subr.mxu0 0.0
        %1479 = vmatpush2.msra.mxu0 0.0
        %1480 = vmatprep.subr.mxu0 0.0
        %1481 = vmatpush2.msra.mxu0 0.0
        %1482 = vmatprep.subr.mxu0 0.0
        %1483 = vmatpush2.msra.mxu0 0.0
        %1484 = vmatprep.subr.mxu0 0.0
        %1485 = vmatpush2.msra.mxu0 0.0
        %1486 = vmatprep.subr.mxu0 0.0
        %1487 = vmatpush2.msra.mxu0 0.0
        %1488 = vmatprep.subr.mxu0 0.0
        %1489 = vmatpush2.msra.mxu0 0.0
        %1490 = vmatprep.subr.mxu0 0.0
        %1491 = vmatpush2.msra.mxu0 0.0
        %1492 = vmatprep.subr.mxu0 0.0
        %1493 = vmatpush2.msra.mxu0 0.0
        %1494 = vmatprep.subr.mxu0 0.0
        %1495 = vmatpush2.msra.mxu0 0.0
        %1496 = vmatprep.subr.mxu0 0.0
        %1497 = vmatpush2.msra.mxu0 0.0
        %1498 = vmatprep.subr.mxu0 0.0
        %1499 = vmatpush2.msra.mxu0 0.0
        %1500 = vmatprep.subr.mxu0 0.0
        %1501 = vmatpush2.msra.mxu0 0.0
        %1502 = vmatprep.subr.mxu0 0.0
        %1503 = vmatpush2.msra.mxu0 0.0
        %1504 = vmatprep.subr.mxu0 0.0
        %1505 = vmatpush2.msra.mxu0 0.0
        %1506 = vmatprep.subr.mxu0 0.0
        %1507 = vmatpush2.msra.mxu0 0.0
        %1508 = vmatprep.mubr.f32.mxu0 0.0
        %1509 = vmatmul.mubr.f32.gmra.mxu0 %v1442
        %v1510 = vpop.f32.mrf.mxu0
        %v1511 = vadd.f32 0.0, %v1510
        %v1512 = vpop.f32.mrf.mxu0
        %1513 = vdwg.mxu0
        %v1514 = vadd.f32 %v1331, %v1511
        %v1515 = vmul.f32 %v1514, %v1514
        %v1516 = vsel %vm649, %v1515, 0.0
        %1517 = vadd.xlane.f32.xlu0 %v1516
        %v1518 = vpop.xlane.xlu0 %1517
        %v1519 = vmul.f32 %v1518, %v653
        %v1520 = vadd.f32 %v1519, 1e-06
        %v1521 = vrsqrt.pop %v1520
        %v1522 = vmul.f32 %v1514, %v1521
        %v1523 = vlaneseq
        %v1524 = vshrl.u32 %v1523, 7
        %v1525 = vsub.s32 1, %v1524
        %v1526 = vrot.slane %v645, %v1525
        %v1527 = vmul.f32 %v1522, %v1526
        %s1528 = scalar_lea.vmem %s10, 32
        %v1529 = vld [vmem:[%s1528] sm:$0xff]
        %v1530 = vld [vmem:[%s1528 + $0x8] sm:$0xff]
        %v1531 = vld [vmem:[%s1528 + $0x10] sm:$0xff]
        %v1532 = vld [vmem:[%s1528 + $0x18] sm:$0xff]
        %v1534 = vsel %vm667, %v1527, 0
        %1536 = vmatprep.subr.mxu0 0.0
        %1537 = vmatpush1.msra.mxu0 0.0
        %1538 = vmatprep.subr.mxu0 0.0
        %1539 = vmatpush1.msra.mxu0 0.0
        %1540 = vmatprep.subr.mxu0 0.0
        %1541 = vmatpush1.msra.mxu0 0.0
        %1542 = vmatprep.subr.mxu0 0.0
        %1543 = vmatpush1.msra.mxu0 0.0
        %1544 = vmatprep.subr.mxu0 0.0
        %1545 = vmatpush1.msra.mxu0 0.0
        %1546 = vmatprep.subr.mxu0 0.0
        %1547 = vmatpush1.msra.mxu0 0.0
        %1548 = vmatprep.subr.mxu0 0.0
        %1549 = vmatpush1.msra.mxu0 0.0
        %1550 = vmatprep.subr.mxu0 0.0
        %1551 = vmatpush1.msra.mxu0 0.0
        %1552 = vmatprep.subr.mxu0 0.0
        %1553 = vmatpush1.msra.mxu0 0.0
        %1554 = vmatprep.subr.mxu0 0.0
        %1555 = vmatpush1.msra.mxu0 0.0
        %1556 = vmatprep.subr.mxu0 0.0
        %1557 = vmatpush1.msra.mxu0 0.0
        %1558 = vmatprep.subr.mxu0 0.0
        %1559 = vmatpush1.msra.mxu0 0.0
        %1560 = vmatprep.subr.mxu0 0.0
        %1561 = vmatpush1.msra.mxu0 %v1532
        %1562 = vmatprep.subr.mxu0 0.0
        %1563 = vmatpush1.msra.mxu0 %v1531
        %1564 = vmatprep.subr.mxu0 0.0
        %1565 = vmatpush1.msra.mxu0 %v1530
        %1566 = vmatprep.subr.mxu0 0.0
        %1567 = vmatpush1.msra.mxu0 %v1529
        %1568 = vmatprep.subr.mxu0 0.0
        %1569 = vmatpush2.msra.mxu0 0.0
        %1570 = vmatprep.subr.mxu0 0.0
        %1571 = vmatpush2.msra.mxu0 0.0
        %1572 = vmatprep.subr.mxu0 0.0
        %1573 = vmatpush2.msra.mxu0 0.0
        %1574 = vmatprep.subr.mxu0 0.0
        %1575 = vmatpush2.msra.mxu0 0.0
        %1576 = vmatprep.subr.mxu0 0.0
        %1577 = vmatpush2.msra.mxu0 0.0
        %1578 = vmatprep.subr.mxu0 0.0
        %1579 = vmatpush2.msra.mxu0 0.0
        %1580 = vmatprep.subr.mxu0 0.0
        %1581 = vmatpush2.msra.mxu0 0.0
        %1582 = vmatprep.subr.mxu0 0.0
        %1583 = vmatpush2.msra.mxu0 0.0
        %1584 = vmatprep.subr.mxu0 0.0
        %1585 = vmatpush2.msra.mxu0 0.0
        %1586 = vmatprep.subr.mxu0 0.0
        %1587 = vmatpush2.msra.mxu0 0.0
        %1588 = vmatprep.subr.mxu0 0.0
        %1589 = vmatpush2.msra.mxu0 0.0
        %1590 = vmatprep.subr.mxu0 0.0
        %1591 = vmatpush2.msra.mxu0 0.0
        %1592 = vmatprep.subr.mxu0 0.0
        %1593 = vmatpush2.msra.mxu0 0.0
        %1594 = vmatprep.subr.mxu0 0.0
        %1595 = vmatpush2.msra.mxu0 0.0
        %1596 = vmatprep.subr.mxu0 0.0
        %1597 = vmatpush2.msra.mxu0 0.0
        %1598 = vmatprep.subr.mxu0 0.0
        %1599 = vmatpush2.msra.mxu0 0.0
        %1600 = vmatprep.mubr.f32.mxu0 0.0
        %1601 = vmatmul.mubr.f32.gmra.mxu0 %v1534
        %v1602 = vpop.f32.mrf.mxu0
        %v1603 = vadd.f32 0.0, %v1602
        %v1604 = vpop.f32.mrf.mxu0
        %1605 = vdwg.mxu0
        %v1606 = vmul.f32 %v1603, %v1603
        %1608 = vrot.lane.b32.xlu0 %v1606, 96
        %v1609 = vpop.permute.xlu0 %1608
        %v1611 = vsel %vm746, %v1609, 0.0
        %1612 = vadd.xlane.f32.xlu0 %v1611
        %v1613 = vpop.xlane.xlu0 %1612
        %v1614 = vmul.f32 %v1613, %v750
        %v1615 = vadd.f32 %v1614, 1e-06
        %v1616 = vrsqrt.pop %v1615
        %v1617 = vmul.f32 %v1603, %v1616
        %v1618 = vlaneseq
        %v1619 = vshrl.u32 %v1618, 7
        %v1620 = vsub.s32 1, %v1619
        %v1621 = vrot.slane %v647, %v1620
        %1623 = vrot.lane.b32.xlu0 %v1621, 32
        %v1624 = vpop.permute.xlu0 %1623
        %v1626 = vmul.f32 %v1617, %v1624
        %v1627 = vsub.f32 0.0, %v1603
        %1629 = vrot.lane.b32.xlu0 %v1627, 76
        %v1630 = vpop.permute.xlu0 %1629
        %1633 = vrot.lane.b32.xlu0 %v1603, 84
        %v1634 = vpop.permute.xlu0 %1633
        %v1636 = vsel %vm773, %v1630, %v1634
        %v1637 = vmul.f32 %v1603, %v777
        %v1638 = vmul.f32 %v1636, %v644
        %1640 = vrot.lane.b32.xlu0 %v1638, 48
        %v1641 = vpop.permute.xlu0 %1640
        %v1643 = vadd.f32 %v1637, %v1641
        %s1644 = scalar_lea.vmem %s11, 16
        %v1645 = vld [vmem:[%s1644] sm:$0xff]
        %v1646 = vld [vmem:[%s1644 + $0x8] sm:$0xff]
        %1648 = vrot.lane.b32.xlu0 %v1626, 96
        %v1649 = vpop.permute.xlu0 %1648
        %v1650 = vsel %vm791, %v1649, 0
        %1652 = vmatprep.subr.mxu0 0.0
        %1653 = vmatpush1.msra.mxu0 0.0
        %1654 = vmatprep.subr.mxu0 0.0
        %1655 = vmatpush1.msra.mxu0 0.0
        %1656 = vmatprep.subr.mxu0 0.0
        %1657 = vmatpush1.msra.mxu0 0.0
        %1658 = vmatprep.subr.mxu0 0.0
        %1659 = vmatpush1.msra.mxu0 0.0
        %1660 = vmatprep.subr.mxu0 0.0
        %1661 = vmatpush1.msra.mxu0 0.0
        %1662 = vmatprep.subr.mxu0 0.0
        %1663 = vmatpush1.msra.mxu0 0.0
        %1664 = vmatprep.subr.mxu0 0.0
        %1665 = vmatpush1.msra.mxu0 0.0
        %1666 = vmatprep.subr.mxu0 0.0
        %1667 = vmatpush1.msra.mxu0 0.0
        %1668 = vmatprep.subr.mxu0 0.0
        %1669 = vmatpush1.msra.mxu0 0.0
        %1670 = vmatprep.subr.mxu0 0.0
        %1671 = vmatpush1.msra.mxu0 0.0
        %1672 = vmatprep.subr.mxu0 0.0
        %1673 = vmatpush1.msra.mxu0 0.0
        %1674 = vmatprep.subr.mxu0 0.0
        %1675 = vmatpush1.msra.mxu0 0.0
        %1676 = vmatprep.subr.mxu0 0.0
        %1677 = vmatpush1.msra.mxu0 0.0
        %1678 = vmatprep.subr.mxu0 0.0
        %1679 = vmatpush1.msra.mxu0 0.0
        %1680 = vmatprep.subr.mxu0 0.0
        %1681 = vmatpush1.msra.mxu0 %v1646
        %1682 = vmatprep.subr.mxu0 0.0
        %1683 = vmatpush1.msra.mxu0 %v1645
        %1684 = vmatprep.subr.mxu0 0.0
        %1685 = vmatpush2.msra.mxu0 0.0
        %1686 = vmatprep.subr.mxu0 0.0
        %1687 = vmatpush2.msra.mxu0 0.0
        %1688 = vmatprep.subr.mxu0 0.0
        %1689 = vmatpush2.msra.mxu0 0.0
        %1690 = vmatprep.subr.mxu0 0.0
        %1691 = vmatpush2.msra.mxu0 0.0
        %1692 = vmatprep.subr.mxu0 0.0
        %1693 = vmatpush2.msra.mxu0 0.0
        %1694 = vmatprep.subr.mxu0 0.0
        %1695 = vmatpush2.msra.mxu0 0.0
        %1696 = vmatprep.subr.mxu0 0.0
        %1697 = vmatpush2.msra.mxu0 0.0
        %1698 = vmatprep.subr.mxu0 0.0
        %1699 = vmatpush2.msra.mxu0 0.0
        %1700 = vmatprep.subr.mxu0 0.0
        %1701 = vmatpush2.msra.mxu0 0.0
        %1702 = vmatprep.subr.mxu0 0.0
        %1703 = vmatpush2.msra.mxu0 0.0
        %1704 = vmatprep.subr.mxu0 0.0
        %1705 = vmatpush2.msra.mxu0 0.0
        %1706 = vmatprep.subr.mxu0 0.0
        %1707 = vmatpush2.msra.mxu0 0.0
        %1708 = vmatprep.subr.mxu0 0.0
        %1709 = vmatpush2.msra.mxu0 0.0
        %1710 = vmatprep.subr.mxu0 0.0
        %1711 = vmatpush2.msra.mxu0 0.0
        %1712 = vmatprep.subr.mxu0 0.0
        %1713 = vmatpush2.msra.mxu0 0.0
        %1714 = vmatprep.subr.mxu0 0.0
        %1715 = vmatpush2.msra.mxu0 0.0
        %1716 = vmatprep.mubr.f32.mxu0 0.0
        %1717 = vmatmul.mubr.f32.gmra.mxu0 %v1650
        %v1718 = vpop.f32.mrf.mxu0
        %v1719 = vadd.f32 0.0, %v1718
        %v1720 = vpop.f32.mrf.mxu0
        %1721 = vdwg.mxu0
        %1722 = vrot.lane.b32.xlu0 %v1627, 116
        %v1723 = vpop.permute.xlu0 %1722
        %1725 = vrot.lane.b32.xlu0 %v1603, 124
        %v1726 = vpop.permute.xlu0 %1725
        %v1728 = vsel %vm773, %v1723, %v1726
        %v1729 = vmul.f32 %v1603, %v872
        %v1730 = vmul.f32 %v1728, %v644
        %1732 = vrot.lane.b32.xlu0 %v1730, 8
        %v1733 = vpop.permute.xlu0 %1732
        %v1735 = vadd.f32 %v1729, %v1733
        %v1736 = vsel %vm881, %v1603, %v1735
        %1738 = vrot.lane.b32.xlu0 %v1643, 88
        %v1739 = vpop.permute.xlu0 %1738
        %v1741 = vsel %vm881, %v1719, %v1739
        %v1743 = vsel %vm791, %v1736, 0
        %v1746 = vsel %vm791, %v1741, 0
        %1748 = vmatprep.subr.mxu0 0.0
        %1749 = vmatpush1.xpose.msra.mxu0 0.0
        %1750 = vmatprep.subr.mxu0 0.0
        %1751 = vmatpush1.xpose.msra.mxu0 0.0
        %1752 = vmatprep.subr.mxu0 0.0
        %1753 = vmatpush1.xpose.msra.mxu0 0.0
        %1754 = vmatprep.subr.mxu0 0.0
        %1755 = vmatpush1.xpose.msra.mxu0 0.0
        %1756 = vmatprep.subr.mxu0 0.0
        %1757 = vmatpush1.xpose.msra.mxu0 0.0
        %1758 = vmatprep.subr.mxu0 0.0
        %1759 = vmatpush1.xpose.msra.mxu0 0.0
        %1760 = vmatprep.subr.mxu0 0.0
        %1761 = vmatpush1.xpose.msra.mxu0 0.0
        %1762 = vmatprep.subr.mxu0 0.0
        %1763 = vmatpush1.xpose.msra.mxu0 0.0
        %1764 = vmatprep.subr.mxu0 0.0
        %1765 = vmatpush1.xpose.msra.mxu0 0.0
        %1766 = vmatprep.subr.mxu0 0.0
        %1767 = vmatpush1.xpose.msra.mxu0 0.0
        %1768 = vmatprep.subr.mxu0 0.0
        %1769 = vmatpush1.xpose.msra.mxu0 0.0
        %1770 = vmatprep.subr.mxu0 0.0
        %1771 = vmatpush1.xpose.msra.mxu0 0.0
        %1772 = vmatprep.subr.mxu0 0.0
        %1773 = vmatpush1.xpose.msra.mxu0 0.0
        %1774 = vmatprep.subr.mxu0 0.0
        %1775 = vmatpush1.xpose.msra.mxu0 0.0
        %1776 = vmatprep.subr.mxu0 0.0
        %1777 = vmatpush1.xpose.msra.mxu0 0.0
        %1778 = vmatprep.subr.mxu0 0.0
        %1779 = vmatpush1.xpose.msra.mxu0 %v1746
        %1780 = vmatprep.subr.mxu0 0.0
        %1781 = vmatpush2.xpose.msra.mxu0 0.0
        %1782 = vmatprep.subr.mxu0 0.0
        %1783 = vmatpush2.xpose.msra.mxu0 0.0
        %1784 = vmatprep.subr.mxu0 0.0
        %1785 = vmatpush2.xpose.msra.mxu0 0.0
        %1786 = vmatprep.subr.mxu0 0.0
        %1787 = vmatpush2.xpose.msra.mxu0 0.0
        %1788 = vmatprep.subr.mxu0 0.0
        %1789 = vmatpush2.xpose.msra.mxu0 0.0
        %1790 = vmatprep.subr.mxu0 0.0
        %1791 = vmatpush2.xpose.msra.mxu0 0.0
        %1792 = vmatprep.subr.mxu0 0.0
        %1793 = vmatpush2.xpose.msra.mxu0 0.0
        %1794 = vmatprep.subr.mxu0 0.0
        %1795 = vmatpush2.xpose.msra.mxu0 0.0
        %1796 = vmatprep.subr.mxu0 0.0
        %1797 = vmatpush2.xpose.msra.mxu0 0.0
        %1798 = vmatprep.subr.mxu0 0.0
        %1799 = vmatpush2.xpose.msra.mxu0 0.0
        %1800 = vmatprep.subr.mxu0 0.0
        %1801 = vmatpush2.xpose.msra.mxu0 0.0
        %1802 = vmatprep.subr.mxu0 0.0
        %1803 = vmatpush2.xpose.msra.mxu0 0.0
        %1804 = vmatprep.subr.mxu0 0.0
        %1805 = vmatpush2.xpose.msra.mxu0 0.0
        %1806 = vmatprep.subr.mxu0 0.0
        %1807 = vmatpush2.xpose.msra.mxu0 0.0
        %1808 = vmatprep.subr.mxu0 0.0
        %1809 = vmatpush2.xpose.msra.mxu0 0.0
        %1810 = vmatprep.subr.mxu0 0.0
        %1811 = vmatpush2.xpose.msra.mxu0 0.0
        %1812 = vmatprep.mubr.f32.mxu0 0.0
        %1813 = vmatmul.mubr.f32.gmra.mxu0 %v1743
        %v1814 = vpop.f32.mrf.mxu0
        %v1815 = vadd.f32 0.0, %v1814
        %v1816 = vpop.f32.mrf.mxu0
        %1817 = vdwg.mxu0
        %v1818 = vmul.f32 %v1815, 0.25
        %v1819 = vsel %vm965, %v1818, -inf
        %1820 = vmax.xlane.f32.xlu0 %v1819
        %v1821 = vpop.xlane.xlu0 %1820
        %v1822 = vsub.f32 %v1818, %v1821
        %v1823 = vmul.f32 %v1822, 1.442695
        %v1824 = vpow.pop %v1823
        %v1825 = vsel %vm965, %v1824, 0.0
        %1826 = vadd.xlane.f32.xlu0 %v1825
        %v1827 = vpop.xlane.xlu0 %1826
        %v1828 = vrcp.pop %v1827
        %v1829 = vmul.f32 %v1824, %v1828
        %1831 = vrot.lane.b32.xlu0 %v1719, 120
        %v1832 = vpop.permute.xlu0 %1831
        %v1834 = vsel %vm980, %v1829, 0
        %v1836 = vsel %vm984, %v1832, 0
        %1838 = vmatprep.subr.mxu0 0.0
        %1839 = vmatpush1.msra.mxu0 0.0
        %1840 = vmatprep.subr.mxu0 0.0
        %1841 = vmatpush1.msra.mxu0 0.0
        %1842 = vmatprep.subr.mxu0 0.0
        %1843 = vmatpush1.msra.mxu0 0.0
        %1844 = vmatprep.subr.mxu0 0.0
        %1845 = vmatpush1.msra.mxu0 0.0
        %1846 = vmatprep.subr.mxu0 0.0
        %1847 = vmatpush1.msra.mxu0 0.0
        %1848 = vmatprep.subr.mxu0 0.0
        %1849 = vmatpush1.msra.mxu0 0.0
        %1850 = vmatprep.subr.mxu0 0.0
        %1851 = vmatpush1.msra.mxu0 0.0
        %1852 = vmatprep.subr.mxu0 0.0
        %1853 = vmatpush1.msra.mxu0 0.0
        %1854 = vmatprep.subr.mxu0 0.0
        %1855 = vmatpush1.msra.mxu0 0.0
        %1856 = vmatprep.subr.mxu0 0.0
        %1857 = vmatpush1.msra.mxu0 0.0
        %1858 = vmatprep.subr.mxu0 0.0
        %1859 = vmatpush1.msra.mxu0 0.0
        %1860 = vmatprep.subr.mxu0 0.0
        %1861 = vmatpush1.msra.mxu0 0.0
        %1862 = vmatprep.subr.mxu0 0.0
        %1863 = vmatpush1.msra.mxu0 0.0
        %1864 = vmatprep.subr.mxu0 0.0
        %1865 = vmatpush1.msra.mxu0 0.0
        %1866 = vmatprep.subr.mxu0 0.0
        %1867 = vmatpush1.msra.mxu0 0.0
        %1868 = vmatprep.subr.mxu0 0.0
        %1869 = vmatpush1.msra.mxu0 %v1836
        %1870 = vmatprep.subr.mxu0 0.0
        %1871 = vmatpush2.msra.mxu0 0.0
        %1872 = vmatprep.subr.mxu0 0.0
        %1873 = vmatpush2.msra.mxu0 0.0
        %1874 = vmatprep.subr.mxu0 0.0
        %1875 = vmatpush2.msra.mxu0 0.0
        %1876 = vmatprep.subr.mxu0 0.0
        %1877 = vmatpush2.msra.mxu0 0.0
        %1878 = vmatprep.subr.mxu0 0.0
        %1879 = vmatpush2.msra.mxu0 0.0
        %1880 = vmatprep.subr.mxu0 0.0
        %1881 = vmatpush2.msra.mxu0 0.0
        %1882 = vmatprep.subr.mxu0 0.0
        %1883 = vmatpush2.msra.mxu0 0.0
        %1884 = vmatprep.subr.mxu0 0.0
        %1885 = vmatpush2.msra.mxu0 0.0
        %1886 = vmatprep.subr.mxu0 0.0
        %1887 = vmatpush2.msra.mxu0 0.0
        %1888 = vmatprep.subr.mxu0 0.0
        %1889 = vmatpush2.msra.mxu0 0.0
        %1890 = vmatprep.subr.mxu0 0.0
        %1891 = vmatpush2.msra.mxu0 0.0
        %1892 = vmatprep.subr.mxu0 0.0
        %1893 = vmatpush2.msra.mxu0 0.0
        %1894 = vmatprep.subr.mxu0 0.0
        %1895 = vmatpush2.msra.mxu0 0.0
        %1896 = vmatprep.subr.mxu0 0.0
        %1897 = vmatpush2.msra.mxu0 0.0
        %1898 = vmatprep.subr.mxu0 0.0
        %1899 = vmatpush2.msra.mxu0 0.0
        %1900 = vmatprep.subr.mxu0 0.0
        %1901 = vmatpush2.msra.mxu0 0.0
        %1902 = vmatprep.mubr.f32.mxu0 0.0
        %1903 = vmatmul.mubr.f32.gmra.mxu0 %v1834
        %v1904 = vpop.f32.mrf.mxu0
        %v1905 = vadd.f32 0.0, %v1904
        %v1906 = vpop.f32.mrf.mxu0
        %1907 = vdwg.mxu0
        %1908 = vrot.lane.b32.xlu0 %v1627, 100
        %v1909 = vpop.permute.xlu0 %1908
        %1911 = vrot.lane.b32.xlu0 %v1603, 108
        %v1912 = vpop.permute.xlu0 %1911
        %v1914 = vsel %vm773, %v1909, %v1912
        %v1915 = vmul.f32 %v1603, %v1065
        %v1916 = vmul.f32 %v1914, %v644
        %1918 = vrot.lane.b32.xlu0 %v1916, 24
        %v1919 = vpop.permute.xlu0 %1918
        %v1921 = vadd.f32 %v1915, %v1919
        %1922 = vrot.lane.b32.xlu0 %v1603, 112
        %v1923 = vpop.permute.xlu0 %1922
        %1926 = vrot.lane.b32.xlu0 %v1921, 112
        %v1927 = vpop.permute.xlu0 %1926
        %v1929 = vsel %vm881, %v1923, %v1927
        %1930 = vrot.lane.b32.xlu0 %v1719, 112
        %v1931 = vpop.permute.xlu0 %1930
        %v1933 = vsel %vm881, %v1931, %v1739
        %v1935 = vsel %vm791, %v1929, 0
        %v1938 = vsel %vm791, %v1933, 0
        %1940 = vmatprep.subr.mxu0 0.0
        %1941 = vmatpush1.xpose.msra.mxu0 0.0
        %1942 = vmatprep.subr.mxu0 0.0
        %1943 = vmatpush1.xpose.msra.mxu0 0.0
        %1944 = vmatprep.subr.mxu0 0.0
        %1945 = vmatpush1.xpose.msra.mxu0 0.0
        %1946 = vmatprep.subr.mxu0 0.0
        %1947 = vmatpush1.xpose.msra.mxu0 0.0
        %1948 = vmatprep.subr.mxu0 0.0
        %1949 = vmatpush1.xpose.msra.mxu0 0.0
        %1950 = vmatprep.subr.mxu0 0.0
        %1951 = vmatpush1.xpose.msra.mxu0 0.0
        %1952 = vmatprep.subr.mxu0 0.0
        %1953 = vmatpush1.xpose.msra.mxu0 0.0
        %1954 = vmatprep.subr.mxu0 0.0
        %1955 = vmatpush1.xpose.msra.mxu0 0.0
        %1956 = vmatprep.subr.mxu0 0.0
        %1957 = vmatpush1.xpose.msra.mxu0 0.0
        %1958 = vmatprep.subr.mxu0 0.0
        %1959 = vmatpush1.xpose.msra.mxu0 0.0
        %1960 = vmatprep.subr.mxu0 0.0
        %1961 = vmatpush1.xpose.msra.mxu0 0.0
        %1962 = vmatprep.subr.mxu0 0.0
        %1963 = vmatpush1.xpose.msra.mxu0 0.0
        %1964 = vmatprep.subr.mxu0 0.0
        %1965 = vmatpush1.xpose.msra.mxu0 0.0
        %1966 = vmatprep.subr.mxu0 0.0
        %1967 = vmatpush1.xpose.msra.mxu0 0.0
        %1968 = vmatprep.subr.mxu0 0.0
        %1969 = vmatpush1.xpose.msra.mxu0 0.0
        %1970 = vmatprep.subr.mxu0 0.0
        %1971 = vmatpush1.xpose.msra.mxu0 %v1938
        %1972 = vmatprep.subr.mxu0 0.0
        %1973 = vmatpush2.xpose.msra.mxu0 0.0
        %1974 = vmatprep.subr.mxu0 0.0
        %1975 = vmatpush2.xpose.msra.mxu0 0.0
        %1976 = vmatprep.subr.mxu0 0.0
        %1977 = vmatpush2.xpose.msra.mxu0 0.0
        %1978 = vmatprep.subr.mxu0 0.0
        %1979 = vmatpush2.xpose.msra.mxu0 0.0
        %1980 = vmatprep.subr.mxu0 0.0
        %1981 = vmatpush2.xpose.msra.mxu0 0.0
        %1982 = vmatprep.subr.mxu0 0.0
        %1983 = vmatpush2.xpose.msra.mxu0 0.0
        %1984 = vmatprep.subr.mxu0 0.0
        %1985 = vmatpush2.xpose.msra.mxu0 0.0
        %1986 = vmatprep.subr.mxu0 0.0
        %1987 = vmatpush2.xpose.msra.mxu0 0.0
        %1988 = vmatprep.subr.mxu0 0.0
        %1989 = vmatpush2.xpose.msra.mxu0 0.0
        %1990 = vmatprep.subr.mxu0 0.0
        %1991 = vmatpush2.xpose.msra.mxu0 0.0
        %1992 = vmatprep.subr.mxu0 0.0
        %1993 = vmatpush2.xpose.msra.mxu0 0.0
        %1994 = vmatprep.subr.mxu0 0.0
        %1995 = vmatpush2.xpose.msra.mxu0 0.0
        %1996 = vmatprep.subr.mxu0 0.0
        %1997 = vmatpush2.xpose.msra.mxu0 0.0
        %1998 = vmatprep.subr.mxu0 0.0
        %1999 = vmatpush2.xpose.msra.mxu0 0.0
        %2000 = vmatprep.subr.mxu0 0.0
        %2001 = vmatpush2.xpose.msra.mxu0 0.0
        %2002 = vmatprep.subr.mxu0 0.0
        %2003 = vmatpush2.xpose.msra.mxu0 0.0
        %2004 = vmatprep.mubr.f32.mxu0 0.0
        %2005 = vmatmul.mubr.f32.gmra.mxu0 %v1935
        %v2006 = vpop.f32.mrf.mxu0
        %v2007 = vadd.f32 0.0, %v2006
        %v2008 = vpop.f32.mrf.mxu0
        %2009 = vdwg.mxu0
        %v2010 = vmul.f32 %v2007, 0.25
        %v2011 = vsel %vm965, %v2010, -inf
        %2012 = vmax.xlane.f32.xlu0 %v2011
        %v2013 = vpop.xlane.xlu0 %2012
        %v2014 = vsub.f32 %v2010, %v2013
        %v2015 = vmul.f32 %v2014, 1.442695
        %v2016 = vpow.pop %v2015
        %v2017 = vsel %vm965, %v2016, 0.0
        %2018 = vadd.xlane.f32.xlu0 %v2017
        %v2019 = vpop.xlane.xlu0 %2018
        %v2020 = vrcp.pop %v2019
        %v2021 = vmul.f32 %v2016, %v2020
        %2022 = vrot.lane.b32.xlu0 %v1719, 104
        %v2023 = vpop.permute.xlu0 %2022
        %v2025 = vsel %vm980, %v2021, 0
        %v2027 = vsel %vm984, %v2023, 0
        %2029 = vmatprep.subr.mxu0 0.0
        %2030 = vmatpush1.msra.mxu0 0.0
        %2031 = vmatprep.subr.mxu0 0.0
        %2032 = vmatpush1.msra.mxu0 0.0
        %2033 = vmatprep.subr.mxu0 0.0
        %2034 = vmatpush1.msra.mxu0 0.0
        %2035 = vmatprep.subr.mxu0 0.0
        %2036 = vmatpush1.msra.mxu0 0.0
        %2037 = vmatprep.subr.mxu0 0.0
        %2038 = vmatpush1.msra.mxu0 0.0
        %2039 = vmatprep.subr.mxu0 0.0
        %2040 = vmatpush1.msra.mxu0 0.0
        %2041 = vmatprep.subr.mxu0 0.0
        %2042 = vmatpush1.msra.mxu0 0.0
        %2043 = vmatprep.subr.mxu0 0.0
        %2044 = vmatpush1.msra.mxu0 0.0
        %2045 = vmatprep.subr.mxu0 0.0
        %2046 = vmatpush1.msra.mxu0 0.0
        %2047 = vmatprep.subr.mxu0 0.0
        %2048 = vmatpush1.msra.mxu0 0.0
        %2049 = vmatprep.subr.mxu0 0.0
        %2050 = vmatpush1.msra.mxu0 0.0
        %2051 = vmatprep.subr.mxu0 0.0
        %2052 = vmatpush1.msra.mxu0 0.0
        %2053 = vmatprep.subr.mxu0 0.0
        %2054 = vmatpush1.msra.mxu0 0.0
        %2055 = vmatprep.subr.mxu0 0.0
        %2056 = vmatpush1.msra.mxu0 0.0
        %2057 = vmatprep.subr.mxu0 0.0
        %2058 = vmatpush1.msra.mxu0 0.0
        %2059 = vmatprep.subr.mxu0 0.0
        %2060 = vmatpush1.msra.mxu0 %v2027
        %2061 = vmatprep.subr.mxu0 0.0
        %2062 = vmatpush2.msra.mxu0 0.0
        %2063 = vmatprep.subr.mxu0 0.0
        %2064 = vmatpush2.msra.mxu0 0.0
        %2065 = vmatprep.subr.mxu0 0.0
        %2066 = vmatpush2.msra.mxu0 0.0
        %2067 = vmatprep.subr.mxu0 0.0
        %2068 = vmatpush2.msra.mxu0 0.0
        %2069 = vmatprep.subr.mxu0 0.0
        %2070 = vmatpush2.msra.mxu0 0.0
        %2071 = vmatprep.subr.mxu0 0.0
        %2072 = vmatpush2.msra.mxu0 0.0
        %2073 = vmatprep.subr.mxu0 0.0
        %2074 = vmatpush2.msra.mxu0 0.0
        %2075 = vmatprep.subr.mxu0 0.0
        %2076 = vmatpush2.msra.mxu0 0.0
        %2077 = vmatprep.subr.mxu0 0.0
        %2078 = vmatpush2.msra.mxu0 0.0
        %2079 = vmatprep.subr.mxu0 0.0
        %2080 = vmatpush2.msra.mxu0 0.0
        %2081 = vmatprep.subr.mxu0 0.0
        %2082 = vmatpush2.msra.mxu0 0.0
        %2083 = vmatprep.subr.mxu0 0.0
        %2084 = vmatpush2.msra.mxu0 0.0
        %2085 = vmatprep.subr.mxu0 0.0
        %2086 = vmatpush2.msra.mxu0 0.0
        %2087 = vmatprep.subr.mxu0 0.0
        %2088 = vmatpush2.msra.mxu0 0.0
        %2089 = vmatprep.subr.mxu0 0.0
        %2090 = vmatpush2.msra.mxu0 0.0
        %2091 = vmatprep.subr.mxu0 0.0
        %2092 = vmatpush2.msra.mxu0 0.0
        %2093 = vmatprep.mubr.f32.mxu0 0.0
        %2094 = vmatmul.mubr.f32.gmra.mxu0 %v2025
        %v2095 = vpop.f32.mrf.mxu0
        %v2096 = vadd.f32 0.0, %v2095
        %v2097 = vpop.f32.mrf.mxu0
        %2098 = vdwg.mxu0
        %2100 = vrot.lane.b32.xlu0 %v2096, 8
        %v2101 = vpop.permute.xlu0 %2100
        %v2103 = vsel %vm881, %v1905, %v2101
        %s2104 = scalar_lea.vmem %s12, 16
        %v2105 = vld [vmem:[%s2104] sm:$0xff]
        %v2106 = vld [vmem:[%s2104 + $0x8] sm:$0xff]
        %v2108 = vsel %vm791, %v2103, 0
        %2110 = vmatprep.subr.mxu0 0.0
        %2111 = vmatpush1.msra.mxu0 0.0
        %2112 = vmatprep.subr.mxu0 0.0
        %2113 = vmatpush1.msra.mxu0 0.0
        %2114 = vmatprep.subr.mxu0 0.0
        %2115 = vmatpush1.msra.mxu0 0.0
        %2116 = vmatprep.subr.mxu0 0.0
        %2117 = vmatpush1.msra.mxu0 0.0
        %2118 = vmatprep.subr.mxu0 0.0
        %2119 = vmatpush1.msra.mxu0 0.0
        %2120 = vmatprep.subr.mxu0 0.0
        %2121 = vmatpush1.msra.mxu0 0.0
        %2122 = vmatprep.subr.mxu0 0.0
        %2123 = vmatpush1.msra.mxu0 0.0
        %2124 = vmatprep.subr.mxu0 0.0
        %2125 = vmatpush1.msra.mxu0 0.0
        %2126 = vmatprep.subr.mxu0 0.0
        %2127 = vmatpush1.msra.mxu0 0.0
        %2128 = vmatprep.subr.mxu0 0.0
        %2129 = vmatpush1.msra.mxu0 0.0
        %2130 = vmatprep.subr.mxu0 0.0
        %2131 = vmatpush1.msra.mxu0 0.0
        %2132 = vmatprep.subr.mxu0 0.0
        %2133 = vmatpush1.msra.mxu0 0.0
        %2134 = vmatprep.subr.mxu0 0.0
        %2135 = vmatpush1.msra.mxu0 0.0
        %2136 = vmatprep.subr.mxu0 0.0
        %2137 = vmatpush1.msra.mxu0 0.0
        %2138 = vmatprep.subr.mxu0 0.0
        %2139 = vmatpush1.msra.mxu0 %v2106
        %2140 = vmatprep.subr.mxu0 0.0
        %2141 = vmatpush1.msra.mxu0 %v2105
        %2142 = vmatprep.subr.mxu0 0.0
        %2143 = vmatpush2.msra.mxu0 0.0
        %2144 = vmatprep.subr.mxu0 0.0
        %2145 = vmatpush2.msra.mxu0 0.0
        %2146 = vmatprep.subr.mxu0 0.0
        %2147 = vmatpush2.msra.mxu0 0.0
        %2148 = vmatprep.subr.mxu0 0.0
        %2149 = vmatpush2.msra.mxu0 0.0
        %2150 = vmatprep.subr.mxu0 0.0
        %2151 = vmatpush2.msra.mxu0 0.0
        %2152 = vmatprep.subr.mxu0 0.0
        %2153 = vmatpush2.msra.mxu0 0.0
        %2154 = vmatprep.subr.mxu0 0.0
        %2155 = vmatpush2.msra.mxu0 0.0
        %2156 = vmatprep.subr.mxu0 0.0
        %2157 = vmatpush2.msra.mxu0 0.0
        %2158 = vmatprep.subr.mxu0 0.0
        %2159 = vmatpush2.msra.mxu0 0.0
        %2160 = vmatprep.subr.mxu0 0.0
        %2161 = vmatpush2.msra.mxu0 0.0
        %2162 = vmatprep.subr.mxu0 0.0
        %2163 = vmatpush2.msra.mxu0 0.0
        %2164 = vmatprep.subr.mxu0 0.0
        %2165 = vmatpush2.msra.mxu0 0.0
        %2166 = vmatprep.subr.mxu0 0.0
        %2167 = vmatpush2.msra.mxu0 0.0
        %2168 = vmatprep.subr.mxu0 0.0
        %2169 = vmatpush2.msra.mxu0 0.0
        %2170 = vmatprep.subr.mxu0 0.0
        %2171 = vmatpush2.msra.mxu0 0.0
        %2172 = vmatprep.subr.mxu0 0.0
        %2173 = vmatpush2.msra.mxu0 0.0
        %2174 = vmatprep.mubr.f32.mxu0 0.0
        %2175 = vmatmul.mubr.f32.gmra.mxu0 %v2108
        %v2176 = vpop.f32.mrf.mxu0
        %v2177 = vadd.f32 0.0, %v2176
        %v2178 = vpop.f32.mrf.mxu0
        %2179 = vdwg.mxu0
        %v2180 = vadd.f32 %v1514, %v2177
        %v2181 = vmul.f32 %v2180, %v2180
        %v2182 = vsel %vm649, %v2181, 0.0
        %2183 = vadd.xlane.f32.xlu0 %v2182
        %v2184 = vpop.xlane.xlu0 %2183
        %v2185 = vmul.f32 %v2184, %v653
        %v2186 = vadd.f32 %v2185, 1e-06
        %v2187 = vrsqrt.pop %v2186
        %v2188 = vmul.f32 %v2180, %v2187
        %v2189 = vlaneseq
        %v2190 = vshrl.u32 %v2189, 7
        %v2191 = vsub.s32 1, %v2190
        %v2192 = vrot.slane %v646, %v2191
        %v2193 = vmul.f32 %v2188, %v2192
        %s2194 = scalar_lea.vmem %s13, 32
        %v2195 = vld [vmem:[%s2194] sm:$0xff]
        %v2196 = vld [vmem:[%s2194 + $0x8] sm:$0xff]
        %v2197 = vld [vmem:[%s2194 + $0x10] sm:$0xff]
        %v2198 = vld [vmem:[%s2194 + $0x18] sm:$0xff]
        %v2200 = vsel %vm667, %v2193, 0
        %2202 = vmatprep.subr.mxu0 0.0
        %2203 = vmatpush1.msra.mxu0 0.0
        %2204 = vmatprep.subr.mxu0 0.0
        %2205 = vmatpush1.msra.mxu0 0.0
        %2206 = vmatprep.subr.mxu0 0.0
        %2207 = vmatpush1.msra.mxu0 0.0
        %2208 = vmatprep.subr.mxu0 0.0
        %2209 = vmatpush1.msra.mxu0 0.0
        %2210 = vmatprep.subr.mxu0 0.0
        %2211 = vmatpush1.msra.mxu0 0.0
        %2212 = vmatprep.subr.mxu0 0.0
        %2213 = vmatpush1.msra.mxu0 0.0
        %2214 = vmatprep.subr.mxu0 0.0
        %2215 = vmatpush1.msra.mxu0 0.0
        %2216 = vmatprep.subr.mxu0 0.0
        %2217 = vmatpush1.msra.mxu0 0.0
        %2218 = vmatprep.subr.mxu0 0.0
        %2219 = vmatpush1.msra.mxu0 0.0
        %2220 = vmatprep.subr.mxu0 0.0
        %2221 = vmatpush1.msra.mxu0 0.0
        %2222 = vmatprep.subr.mxu0 0.0
        %2223 = vmatpush1.msra.mxu0 0.0
        %2224 = vmatprep.subr.mxu0 0.0
        %2225 = vmatpush1.msra.mxu0 0.0
        %2226 = vmatprep.subr.mxu0 0.0
        %2227 = vmatpush1.msra.mxu0 %v2198
        %2228 = vmatprep.subr.mxu0 0.0
        %2229 = vmatpush1.msra.mxu0 %v2197
        %2230 = vmatprep.subr.mxu0 0.0
        %2231 = vmatpush1.msra.mxu0 %v2196
        %2232 = vmatprep.subr.mxu0 0.0
        %2233 = vmatpush1.msra.mxu0 %v2195
        %2234 = vmatprep.subr.mxu0 0.0
        %2235 = vmatpush2.msra.mxu0 0.0
        %2236 = vmatprep.subr.mxu0 0.0
        %2237 = vmatpush2.msra.mxu0 0.0
        %2238 = vmatprep.subr.mxu0 0.0
        %2239 = vmatpush2.msra.mxu0 0.0
        %2240 = vmatprep.subr.mxu0 0.0
        %2241 = vmatpush2.msra.mxu0 0.0
        %2242 = vmatprep.subr.mxu0 0.0
        %2243 = vmatpush2.msra.mxu0 0.0
        %2244 = vmatprep.subr.mxu0 0.0
        %2245 = vmatpush2.msra.mxu0 0.0
        %2246 = vmatprep.subr.mxu0 0.0
        %2247 = vmatpush2.msra.mxu0 0.0
        %2248 = vmatprep.subr.mxu0 0.0
        %2249 = vmatpush2.msra.mxu0 0.0
        %2250 = vmatprep.subr.mxu0 0.0
        %2251 = vmatpush2.msra.mxu0 0.0
        %2252 = vmatprep.subr.mxu0 0.0
        %2253 = vmatpush2.msra.mxu0 0.0
        %2254 = vmatprep.subr.mxu0 0.0
        %2255 = vmatpush2.msra.mxu0 0.0
        %2256 = vmatprep.subr.mxu0 0.0
        %2257 = vmatpush2.msra.mxu0 0.0
        %2258 = vmatprep.subr.mxu0 0.0
        %2259 = vmatpush2.msra.mxu0 0.0
        %2260 = vmatprep.subr.mxu0 0.0
        %2261 = vmatpush2.msra.mxu0 0.0
        %2262 = vmatprep.subr.mxu0 0.0
        %2263 = vmatpush2.msra.mxu0 0.0
        %2264 = vmatprep.subr.mxu0 0.0
        %2265 = vmatpush2.msra.mxu0 0.0
        %2266 = vmatprep.mubr.f32.mxu0 0.0
        %2267 = vmatmul.mubr.f32.gmra.mxu0 %v2200
        %v2268 = vpop.f32.mrf.mxu0
        %v2269 = vadd.f32 0.0, %v2268
        %v2270 = vpop.f32.mrf.mxu0
        %2271 = vdwg.mxu0
        %v2272 = vxor.u32 %v2269, 2147483648
        %v2273 = vmul.f32 %v2272, 1.442695
        %v2274 = vpow.pop %v2273
        %v2275 = vadd.f32 %v2274, 1.0
        %v2276 = vrcp.pop %v2275
        %v2277 = vmul.f32 1.0, %v2276
        %v2278 = vmul.f32 %v2269, %v2277
        %2280 = vrot.lane.b32.xlu0 %v2269, 80
        %v2281 = vpop.permute.xlu0 %2280
        %v2283 = vmul.f32 %v2278, %v2281
        %s2284 = scalar_lea.vmem %s14, 48
        %v2285 = vld [vmem:[%s2284] sm:$0xff]
        %v2286 = vld [vmem:[%s2284 + $0x8] sm:$0xff]
        %v2287 = vld [vmem:[%s2284 + $0x10] sm:$0xff]
        %v2288 = vld [vmem:[%s2284 + $0x18] sm:$0xff]
        %v2289 = vld [vmem:[%s2284 + $0x20] sm:$0xff]
        %v2290 = vld [vmem:[%s2284 + $0x28] sm:$0xff]
        %v2292 = vsel %vm1440, %v2283, 0
        %2294 = vmatprep.subr.mxu0 0.0
        %2295 = vmatpush1.msra.mxu0 0.0
        %2296 = vmatprep.subr.mxu0 0.0
        %2297 = vmatpush1.msra.mxu0 0.0
        %2298 = vmatprep.subr.mxu0 0.0
        %2299 = vmatpush1.msra.mxu0 0.0
        %2300 = vmatprep.subr.mxu0 0.0
        %2301 = vmatpush1.msra.mxu0 0.0
        %2302 = vmatprep.subr.mxu0 0.0
        %2303 = vmatpush1.msra.mxu0 0.0
        %2304 = vmatprep.subr.mxu0 0.0
        %2305 = vmatpush1.msra.mxu0 0.0
        %2306 = vmatprep.subr.mxu0 0.0
        %2307 = vmatpush1.msra.mxu0 0.0
        %2308 = vmatprep.subr.mxu0 0.0
        %2309 = vmatpush1.msra.mxu0 0.0
        %2310 = vmatprep.subr.mxu0 0.0
        %2311 = vmatpush1.msra.mxu0 0.0
        %2312 = vmatprep.subr.mxu0 0.0
        %2313 = vmatpush1.msra.mxu0 0.0
        %2314 = vmatprep.subr.mxu0 0.0
        %2315 = vmatpush1.msra.mxu0 %v2290
        %2316 = vmatprep.subr.mxu0 0.0
        %2317 = vmatpush1.msra.mxu0 %v2289
        %2318 = vmatprep.subr.mxu0 0.0
        %2319 = vmatpush1.msra.mxu0 %v2288
        %2320 = vmatprep.subr.mxu0 0.0
        %2321 = vmatpush1.msra.mxu0 %v2287
        %2322 = vmatprep.subr.mxu0 0.0
        %2323 = vmatpush1.msra.mxu0 %v2286
        %2324 = vmatprep.subr.mxu0 0.0
        %2325 = vmatpush1.msra.mxu0 %v2285
        %2326 = vmatprep.subr.mxu0 0.0
        %2327 = vmatpush2.msra.mxu0 0.0
        %2328 = vmatprep.subr.mxu0 0.0
        %2329 = vmatpush2.msra.mxu0 0.0
        %2330 = vmatprep.subr.mxu0 0.0
        %2331 = vmatpush2.msra.mxu0 0.0
        %2332 = vmatprep.subr.mxu0 0.0
        %2333 = vmatpush2.msra.mxu0 0.0
        %2334 = vmatprep.subr.mxu0 0.0
        %2335 = vmatpush2.msra.mxu0 0.0
        %2336 = vmatprep.subr.mxu0 0.0
        %2337 = vmatpush2.msra.mxu0 0.0
        %2338 = vmatprep.subr.mxu0 0.0
        %2339 = vmatpush2.msra.mxu0 0.0
        %2340 = vmatprep.subr.mxu0 0.0
        %2341 = vmatpush2.msra.mxu0 0.0
        %2342 = vmatprep.subr.mxu0 0.0
        %2343 = vmatpush2.msra.mxu0 0.0
        %2344 = vmatprep.subr.mxu0 0.0
        %2345 = vmatpush2.msra.mxu0 0.0
        %2346 = vmatprep.subr.mxu0 0.0
        %2347 = vmatpush2.msra.mxu0 0.0
        %2348 = vmatprep.subr.mxu0 0.0
        %2349 = vmatpush2.msra.mxu0 0.0
        %2350 = vmatprep.subr.mxu0 0.0
        %2351 = vmatpush2.msra.mxu0 0.0
        %2352 = vmatprep.subr.mxu0 0.0
        %2353 = vmatpush2.msra.mxu0 0.0
        %2354 = vmatprep.subr.mxu0 0.0
        %2355 = vmatpush2.msra.mxu0 0.0
        %2356 = vmatprep.subr.mxu0 0.0
        %2357 = vmatpush2.msra.mxu0 0.0
        %2358 = vmatprep.mubr.f32.mxu0 0.0
        %2359 = vmatmul.mubr.f32.gmra.mxu0 %v2292
        %v2360 = vpop.f32.mrf.mxu0
        %v2361 = vadd.f32 0.0, %v2360
        %v2362 = vpop.f32.mrf.mxu0
        %2363 = vdwg.mxu0
        %v2364 = vadd.f32 %v2180, %v2361
        %2365 = vst.msk [vmem:[%s486] sm:$0x1] %vm638, %v2364
        %s2366 = sand.u32 %s357, 1
        %s2367 = scalar_lea.sflag [#allocation4], %s2366
        %s2368 = sand.u32 %s357, 1
        %s2369 = scalar_lea.vmem [#allocation3], %s2368
        // Predicated region
        $region81: #{siglip_forward.2} parent=79 // pred_check
          %p2370 = pneg %p367
        $region82: #{siglip_forward.2} parent=79 // pred_check_branch
          %2372 = sbr.rel (%p2370) target = $region84
        $region83: #{siglip_forward.2} parent=79 // pred_region
          %s2374 = ssub.s32 16, 16
          %2375 = vsyncadd %s2367, %s2374
          %s2376 = smul.addr %s29, 16
          %s2377 = scalar_lea.hbm %s15, %s2376
          %s2379 = sshll.u32 %s2369, 4
          %s2380 = int_to_ptr.vmem [resolvable:$true] %s2379
          %2382 = dma.vmem_to_hbm [thread:$0]  %s2380, 16, %s2377, %s2367
        $region84: #{siglip_forward.2} parent=79 // pred_fallthru
          _
      $region80: #{siglip_forward.2} parent=5 // pred_fallthru
        _
      %p2383 = scmp.le.s32.totalorder 2, %s24
      // Predicated region
      $region85: #{siglip_forward.2} parent=5 // pred_check
        %p2384 = pneg %p2383
      $region86: #{siglip_forward.2} parent=5 // pred_check_branch
        %2386 = sbr.rel (%p2384) target = $region88
      $region87: #{siglip_forward.2} parent=5 // pred_region
        %s2387 = ssub.s32 %s24, 2
        // Predicated region
        $region89: #{siglip_forward.2} parent=87 // pred_check
          %p2388 = pneg %p373
        $region90: #{siglip_forward.2} parent=87 // pred_check_branch
          %2390 = sbr.rel (%p2388) target = $region92
        $region91: #{siglip_forward.2} parent=87 // pred_region
          %s2391 = sand.u32 %s358, 1
          %s2392 = scalar_lea.sflag [#allocation4], %s2391
          %s2393 = sand.u32 %s358, 1
          %s2394 = scalar_lea.vmem [#allocation3], %s2393
          %2395 = dma.done %s2392, 16
        $region92: #{siglip_forward.2} parent=87 // pred_fallthru
          _
      $region88: #{siglip_forward.2} parent=5 // pred_fallthru
        _
    $region6: #{siglip_forward.2} parent=1 // loop_footer
      %s28 = sadd.s32 1, %s24
    $region7: #{siglip_forward.2} parent=1 // loop_footer_branch
      %23 = sbr.rel target = $region3
    $region8: #{siglip_forward.2} parent=1 // loop_exit
      _
    %2396 = vsyncpa [#allocation4], 1
    %s2397 = scalar_lea.sflag [#allocation4], 1
    %2398 = vsyncpa %s2397, 1

</llo_original>
